<compile_context>
chip_gen: v7x
topology: tpu7x:2x2x1
jax: 0.10.0
libtpu: 0.0.40
codegen_flags: <defaults>
</compile_context>

<pallas_src>
import functools

import jax
import jax.numpy as jnp
from jax.experimental import pallas as pl
from jax.experimental.pallas import tpu as pltpu

LAT_GEO = 32     # identity geometry latent dim
LAT_EXP = 16     # expression latent dim
LAT_APP = 32     # appearance latent dim
HIDDEN = 128     # MLP hidden width (lane aligned)
NUM_EXPR = 8     # number of frames in the expression embedding table
FEAT = 8         # coordinate slab rows: 0..2 hi(x), 3 = 1.0, 4..6 lo(x), 7 = 0


# ----------------------------------------------------------------------------
# Deterministic parameter construction (synthetic weights, no checkpoint load)
# ----------------------------------------------------------------------------
def init_params(key):
    def lin(k, fan_in, fan_out):
        k1, k2 = jax.random.split(k)
        scale = 1.0 / jnp.sqrt(jnp.float32(fan_in))
        w = jax.random.uniform(k1, (fan_in, fan_out), jnp.float32, -scale, scale)
        b = jax.random.uniform(k2, (1, fan_out), jnp.float32, -scale, scale)
        return w, b

    keys = jax.random.split(key, 16)
    p = {}
    # ex_model: expression deformation field  (pos, exp, geo) -> offsets(3)
    p['Wd1_pos'], p['bd1'] = lin(keys[0], 3, HIDDEN)
    p['Wd1_exp'], _ = lin(keys[1], LAT_EXP, HIDDEN)
    p['Wd1_geo'], _ = lin(keys[2], LAT_GEO, HIDDEN)
    p['Wd2'], p['bd2'] = lin(keys[3], HIDDEN, HIDDEN)
    p['Wd3'], p['bd3'] = lin(keys[4], HIDDEN, 3)
    # id_model geometry: (pos_canonical, geo) -> sdf(1)
    p['Wi1_pos'], p['bi1'] = lin(keys[5], 3, HIDDEN)
    p['Wi1_geo'], _ = lin(keys[6], LAT_GEO, HIDDEN)
    p['Wi2'], p['bi2'] = lin(keys[7], HIDDEN, HIDDEN)
    p['Wi3'], p['bi3'] = lin(keys[8], HIDDEN, 1)
    # id_model appearance: (pos_canonical, app) -> color(3)
    p['Wc1_pos'], p['bc1'] = lin(keys[9], 3, HIDDEN)
    p['Wc1_app'], _ = lin(keys[10], LAT_APP, HIDDEN)
    p['Wc2'], p['bc2'] = lin(keys[11], HIDDEN, HIDDEN)
    p['Wc3'], p['bc3'] = lin(keys[12], HIDDEN, 3)
    # latent_codes_expr: nn.Embedding(NUM_EXPR, LAT_EXP)
    p['exp_table'] = 0.01 * jax.random.normal(keys[13], (NUM_EXPR, LAT_EXP), jnp.float32)
    # latent_code_id: {'geo': ..., 'app': ...}
    p['z_geo'] = 0.01 * jax.random.normal(keys[14], (1, LAT_GEO), jnp.float32)
    p['z_app'] = 0.01 * jax.random.normal(keys[15], (1, LAT_APP), jnp.float32)
    return p


# ----------------------------------------------------------------------------
# Chip detection + tiling plan
# ----------------------------------------------------------------------------
def _round_up(x, m):
    return ((x + m - 1) // m) * m


def _tpu_generation():
    """Return (wide_mxu, num_tensorcores, physical_vmem_bytes) for device 0."""
    kind = ""
    try:
        kind = jax.devices()[0].device_kind.lower()
    except Exception:
        pass
    narrow = any(tag in kind for tag in ("v2", "v3", "v4", "v5"))   # 128x128 MXU gens
    wide = not narrow                                               # v6e / v7x: 256-wide MXU
    num_tc = 2 if "v7" in kind else 1
    phys_vmem = (64 if "v7" in kind else 128) * 1024 * 1024
    try:
        info = pltpu.get_tpu_info()
        phys_vmem = int(getattr(info, "vmem_capacity_bytes", phys_vmem))
    except Exception:
        pass
    return wide, num_tc, phys_vmem


def _plan_tiling(n, include_color, tile_n_max, num_tc, phys_vmem):
    """Pick (tile, grid_steps, vmem_limit_bytes) from a VMEM budget."""
    n128 = _round_up(max(int(n), 1), 128)
    gc_rows = 2 * HIDDEN if include_color else HIDDEN
    # Conservative per-column VMEM bytes: double-buffered (8, TN) f32 in/out
    # tiles + live f32/bf16 activations (deform + geo/color) + temporaries.
    per_col = 2 * 2 * FEAT * 4 + 6 * HIDDEN + 12 * gc_rows
    budget = max(8 << 20, phys_vmem // 2 - (4 << 20))
    cap = max(128, min(int(tile_n_max), (budget // per_col) // 128 * 128))
    steps = pl.cdiv(n128, cap)
    if num_tc >= 2:                      # give both TensorCores work when possible
        steps = max(steps, min(num_tc, n128 // 128))
    tile = _round_up(pl.cdiv(n128, steps), 128)
    # Rough weight bytes (double-buffered) + headroom for Mosaic scratch.
    weight_bytes = 2 * (3 * HIDDEN * FEAT * 2 + HIDDEN * HIDDEN * 2
                        + (2 * HIDDEN) ** 2 * 2 + 4 * FEAT * HIDDEN * 2
                        + 2 * HIDDEN * 8 * 4)
    est = per_col * tile + weight_bytes + (4 << 20)
    vmem_limit = int(min(max(32 << 20, 2 * est), int(0.75 * phys_vmem)))
    return tile, steps, vmem_limit


# ----------------------------------------------------------------------------
# Per-call constant prep: fold latents + biases into packed, lane-dense weights
# ----------------------------------------------------------------------------
def _pack_params(p, z_exp, include_color, fuse_geo_color):
    """Pack all grid-invariant constants.

    First-layer weight blocks are (HIDDEN, 8): cols 0..2 act on hi(x), col 3 on
    the constant-1 row (folded effective bias), cols 4..6 act on lo(x) (plus the
    warp offsets for the canonical-space layers).  The warp bias bd3 only ever
    feeds the downstream first layers, so it is folded into their biases.
    """
    f32, bf16 = jnp.float32, jnp.bfloat16

    bd1_eff = p['bd1'] + z_exp @ p['Wd1_exp'] + p['z_geo'] @ p['Wd1_geo']   # (1,128)
    bi1_eff = p['bi1'] + p['z_geo'] @ p['Wi1_geo'] + p['bd3'] @ p['Wi1_pos']
    bc1_eff = p['bc1'] + p['z_app'] @ p['Wc1_app'] + p['bd3'] @ p['Wc1_pos']

    def first_block(w_pos, b_eff):
        blk = jnp.zeros((HIDDEN, FEAT), f32)
        blk = blk.at[:, 0:3].set(w_pos.T)      # hi coordinate rows
        blk = blk.at[:, 3].set(b_eff[0])       # folded bias (homogeneous row)
        blk = blk.at[:, 4:7].set(w_pos.T)      # lo coordinate rows
        return blk

    blocks = [first_block(p['Wd1_pos'], bd1_eff), first_block(p['Wi1_pos'], bi1_eff)]
    if include_color:
        blocks.append(first_block(p['Wc1_pos'], bc1_eff))
    w1 = jnp.concatenate(blocks, axis=0).astype(bf16)        # (k*128, 8)

    wh_d = p['Wd2'].T.astype(bf16)                           # (128, 128)

    head_geo = jnp.zeros((FEAT, HIDDEN), f32).at[0, :].set(p['Wi3'][:, 0])
    if include_color:
        head_col = jnp.zeros((FEAT, HIDDEN), f32).at[1:4, :].set(p['Wc3'].T)
        if fuse_geo_color:
            # 256-wide MXU path: block-diagonal hidden, K-concatenated head.
            wh_gc = jnp.zeros((2 * HIDDEN, 2 * HIDDEN), f32)
            wh_gc = wh_gc.at[:HIDDEN, :HIDDEN].set(p['Wi2'].T)
            wh_gc = wh_gc.at[HIDDEN:, HIDDEN:].set(p['Wc2'].T)
            wh_gc = wh_gc.astype(bf16)                                       # (256, 256)
            w_head = jnp.concatenate([head_geo, head_col], axis=1).astype(bf16)  # (8, 256)
        else:
            # 128-wide MXU path (v5e): keep the branches separate.
            wh_gc = jnp.stack([p['Wi2'].T, p['Wc2'].T], axis=0).astype(bf16)  # (2,128,128)
            w_head = jnp.stack([head_geo, head_col], axis=0).astype(bf16)     # (2,8,128)
    else:
        wh_gc = p['Wi2'].T.astype(bf16)                                       # (128,128)
        w_head = head_geo.astype(bf16)                                        # (8,128)

    # Warp head: offsets are written into rows 4..6 (the "lo" coordinate rows),
    # so the canonical coordinate slab is simply xin + offs (no re-split).
    w_off = jnp.zeros((FEAT, HIDDEN), f32).at[4:7, :].set(p['Wd3'].T).astype(bf16)

    # Remaining (hidden-layer and head) biases as one small f32 slab.
    bias = jnp.zeros((2 * HIDDEN, 8), f32)
    bias = bias.at[0:HIDDEN, 0].set(p['bd2'][0])          # deform layer 2
    bias = bias.at[0:HIDDEN, 1].set(p['bi2'][0])          # geometry layer 2
    bias = bias.at[0, 2].set(p['bi3'][0, 0])              # head bias: sdf (row 0)
    if include_color:
        bias = bias.at[HIDDEN:, 1].set(p['bc2'][0])       # color layer 2
        bias = bias.at[1:4, 2].set(p['bc3'][0])           # head bias: color (rows 1..3)
    return w1, wh_d, wh_gc, w_off, w_head, bias


# ----------------------------------------------------------------------------
# Pallas kernel: warp -> canonical SDF -> (optional) color, per tile of points
# Transposed layout: features on sublanes, points on lanes (lane-dense I/O).
# ----------------------------------------------------------------------------
def _mononphm_kernel(pos_ref, w1_ref, wh_d_ref, wh_gc_ref, w_off_ref, w_head_ref,
                     b_ref, out_ref, *, include_color, fuse_geo_color):
    f32, bf16 = jnp.float32, jnp.bfloat16
    relu = lambda v: jnp.maximum(v, 0.0)
    mm = lambda a, bb: jnp.dot(a, bb, preferred_element_type=f32)

    xin = pos_ref[...]                       # (8, TN) f32: hi(x), 1, lo(x), 0 rows
    xin_b = xin.astype(bf16)
    b_head = b_ref[0:FEAT, 2:3]              # (8, 1)

    # --- ex_model: expression-conditioned deformation (bias folded into w1) ---
    h1 = relu(mm(w1_ref[0:HIDDEN, :], xin_b))                                # (128, TN)
    h2 = relu(mm(wh_d_ref[...], h1.astype(bf16)) + b_ref[0:HIDDEN, 0:1])     # (128, TN)
    offs = mm(w_off_ref[...], h2.astype(bf16))                               # rows 4..6
    xc = (xin + offs).astype(bf16)           # canonical coords in hi/lo form, row 3 = 1

    if include_color:
        # geometry || color first layers share one M-concatenated matmul
        gc1 = relu(mm(w1_ref[HIDDEN:3 * HIDDEN, :], xc))                     # (256, TN)
        if fuse_geo_color:
            # 256-wide MXU: block-diagonal hidden + K-concatenated head
            gc2 = relu(mm(wh_gc_ref[...], gc1.astype(bf16)) + b_ref[:, 1:2])
            head = mm(w_head_ref[...], gc2.astype(bf16)) + b_head
        else:
            g2 = relu(mm(wh_gc_ref[0], gc1[0:HIDDEN].astype(bf16))
                      + b_ref[0:HIDDEN, 1:2])
            c2 = relu(mm(wh_gc_ref[1], gc1[HIDDEN:2 * HIDDEN].astype(bf16))
                      + b_ref[HIDDEN:2 * HIDDEN, 1:2])
            head = (mm(w_head_ref[0], g2.astype(bf16))
                    + mm(w_head_ref[1], c2.astype(bf16)) + b_head)
    else:
        g1 = relu(mm(w1_ref[HIDDEN:2 * HIDDEN, :], xc))                      # (128, TN)
        g2 = relu(mm(wh_gc_ref[...], g1.astype(bf16)) + b_ref[0:HIDDEN, 1:2])
        head = mm(w_head_ref[...], g2.astype(bf16)) + b_head

    out_ref[...] = head                      # lane-dense (8, TN) store; row 0 = sdf


# ----------------------------------------------------------------------------
# Wrapper: mirrors MonoNPHM.forward(positions, expression, include_color)
# ----------------------------------------------------------------------------
def mononphm_forward(params, positions, expression, include_color=False,
                     tile_n_max=4096, fuse_geo_color=None):
    # TODO(synk): return_grad=True (autograd of sdf w.r.t. positions) is not
    # implemented in the Pallas path; only the default return_grad=False path.
    if positions.ndim == 3:          # forward unsqueezes/squeezes the batch dim
        positions = positions[0]
    positions = positions.astype(jnp.float32)
    n = positions.shape[0]

    wide, num_tc, phys_vmem = _tpu_generation()
    if fuse_geo_color is None:
        fuse_geo_color = wide
    fuse_geo_color = bool(fuse_geo_color and include_color)

    tile, steps, vmem_limit = _plan_tiling(n, include_color, tile_n_max,
                                           num_tc, phys_vmem)
    n_pad = tile * steps

    # latent_codes_expr(expression) lookup (glue), then fold all grid-invariant
    # latent matmuls (and bd3) into the packed first-layer weights/biases.
    z_exp = params['exp_table'][expression][None, :]
    w1, wh_d, wh_gc, w_off, w_head, bias = _pack_params(
        params, z_exp, include_color, fuse_geo_color)

    # Positions -> lane-dense transposed slab (8, n_pad):
    # rows 0..2 = hi(x) (bf16-representable), row 3 = 1.0, rows 4..6 = lo(x).
    hi = positions.astype(jnp.bfloat16).astype(jnp.float32)
    lo = positions - hi
    pos_t = jnp.zeros((FEAT, n_pad), jnp.float32)
    pos_t = pos_t.at[0:3, :n].set(hi.T)
    pos_t = pos_t.at[3, :].set(1.0)
    pos_t = pos_t.at[4:7, :n].set(lo.T)

    out_dim = 4 if include_color else 1
    kernel = functools.partial(_mononphm_kernel, include_color=include_color,
                               fuse_geo_color=fuse_geo_color)

    # Advisory cost estimate (2 flops per MAC).
    macs_per_point = 2 * (FEAT * HIDDEN + HIDDEN * HIDDEN + FEAT * HIDDEN)
    if include_color:
        macs_per_point += FEAT * HIDDEN + HIDDEN * HIDDEN + FEAT * HIDDEN
    weights = (w1, wh_d, wh_gc, w_off, w_head, bias)
    bytes_accessed = int(4 * FEAT * n_pad * 2
                         + sum(int(w.size) * w.dtype.itemsize for w in weights))
    cost = pl.CostEstimate(flops=int(2 * macs_per_point * n_pad),
                           transcendentals=0, bytes_accessed=bytes_accessed)

    def _const_spec(a):
        return pl.BlockSpec(a.shape, lambda i, _n=a.ndim: (0,) * _n)

    in_specs = [pl.BlockSpec((FEAT, tile), lambda i: (0, i))]
    in_specs += [_const_spec(w) for w in weights]

    out_t = pl.pallas_call(
        kernel,
        out_shape=jax.ShapeDtypeStruct((FEAT, n_pad), jnp.float32),
        grid=(steps,),
        in_specs=in_specs,
        out_specs=pl.BlockSpec((FEAT, tile), lambda i: (0, i)),
        compiler_params=pltpu.CompilerParams(
            dimension_semantics=("parallel",),
            vmem_limit_bytes=vmem_limit),
        cost_estimate=cost,
    )(pos_t, *weights)

    # row 0 = sdf, rows 1..3 = color; drop padding and transpose back
    return out_t[:out_dim, :n].T


# ----------------------------------------------------------------------------
# References for correctness checks
# ----------------------------------------------------------------------------
def mononphm_forward_ref(p, positions, expression, include_color=False):
    """Pure-f32 reference with the original (unfolded) math."""
    if positions.ndim == 3:
        positions = positions[0]
    pos = positions.astype(jnp.float32)
    z_exp = p['exp_table'][expression][None, :]
    z_geo, z_app = p['z_geo'], p['z_app']
    relu = lambda x: jnp.maximum(x, 0.0)
    h = relu(pos @ p['Wd1_pos'] + z_exp @ p['Wd1_exp'] + z_geo @ p['Wd1_geo'] + p['bd1'])
    h = relu(h @ p['Wd2'] + p['bd2'])
    pos_can = pos + (h @ p['Wd3'] + p['bd3'])
    g = relu(pos_can @ p['Wi1_pos'] + z_geo @ p['Wi1_geo'] + p['bi1'])
    g = relu(g @ p['Wi2'] + p['bi2'])
    sdf = g @ p['Wi3'] + p['bi3']
    if not include_color:
        return sdf
    c = relu(pos_can @ p['Wc1_pos'] + z_app @ p['Wc1_app'] + p['bc1'])
    c = relu(c @ p['Wc2'] + p['bc2'])
    color = c @ p['Wc3'] + p['bc3']
    return jnp.concatenate([sdf, color], axis=-1)


def mononphm_forward_ref_matched(p, positions, expression, include_color=False):
    """Precision-matched reference: hi/lo coordinates, bf16 matmul inputs with
    f32 accumulation, folded (bf16-rounded) first-layer biases."""
    if positions.ndim == 3:
        positions = positions[0]
    f32, bf16 = jnp.float32, jnp.bfloat16
    relu = lambda v: jnp.maximum(v, 0.0)
    mmb = lambda a, b: jnp.dot(a.astype(bf16), b.astype(bf16),
                               preferred_element_type=f32)
    rb = lambda v: v.astype(bf16).astype(f32)

    pos = positions.astype(f32)
    hi = pos.astype(bf16).astype(f32)
    lo = pos - hi
    z_exp = p['exp_table'][expression][None, :]
    bd1_eff = p['bd1'] + z_exp @ p['Wd1_exp'] + p['z_geo'] @ p['Wd1_geo']
    bi1_eff = p['bi1'] + p['z_geo'] @ p['Wi1_geo'] + p['bd3'] @ p['Wi1_pos']
    bc1_eff = p['bc1'] + p['z_app'] @ p['Wc1_app'] + p['bd3'] @ p['Wc1_pos']

    h = relu(mmb(hi, p['Wd1_pos']) + mmb(lo, p['Wd1_pos']) + rb(bd1_eff))
    h = relu(mmb(h, p['Wd2']) + p['bd2'])
    offs = mmb(h, p['Wd3'])                  # bd3 folded downstream
    xc_lo = lo + offs
    g = relu(mmb(hi, p['Wi1_pos']) + mmb(xc_lo, p['Wi1_pos']) + rb(bi1_eff))
    g = relu(mmb(g, p['Wi2']) + p['bi2'])
    sdf = mmb(g, p['Wi3']) + p['bi3']
    if not include_color:
        return sdf
    c = relu(mmb(hi, p['Wc1_pos']) + mmb(xc_lo, p['Wc1_pos']) + rb(bc1_eff))
    c = relu(mmb(c, p['Wc2']) + p['bc2'])
    color = mmb(c, p['Wc3']) + p['bc3']
    return jnp.concatenate([sdf, color], axis=-1)


if __name__ == "__main__":
    key = jax.random.PRNGKey(0)
    k_params, k_pos, k_pos2 = jax.random.split(key, 3)
    params = init_params(k_params)

    N = 1000                      # deliberately not a multiple of 128
    positions = jax.random.normal(k_pos, (N, 3), jnp.float32)   # query points
    expression = 2                                               # frame index

    # Default forward: sdf only, shape (N, 1)
    sdf = mononphm_forward(params, positions, expression, include_color=False)
    sdf = jax.block_until_ready(sdf)
    assert sdf.shape == (N, 1) and sdf.dtype == jnp.float32

    # include_color=True: exercise BOTH the fused (256-wide) and the unfused
    # (128-wide) geometry/color packings regardless of the local chip.
    out_fused = mononphm_forward(params, positions, expression,
                                 include_color=True, fuse_geo_color=True)
    out_split = mononphm_forward(params, positions, expression,
                                 include_color=True, fuse_geo_color=False)
    out_fused = jax.block_until_ready(out_fused)
    out_split = jax.block_until_ready(out_split)
    assert out_fused.shape == (N, 4) and out_fused.dtype == jnp.float32
    assert out_split.shape == (N, 4)

    # Tight check vs the precision-matched reference
    refm1 = mononphm_forward_ref_matched(params, positions, expression, False)
    refm2 = mononphm_forward_ref_matched(params, positions, expression, True)
    assert jnp.allclose(sdf, refm1, atol=1e-2, rtol=1e-2)
    assert jnp.allclose(out_fused, refm2, atol=1e-2, rtol=1e-2)
    assert jnp.allclose(out_split, refm2, atol=1e-2, rtol=1e-2)

    # Loose check vs the original full-f32 semantics
    ref1 = mononphm_forward_ref(params, positions, expression, False)
    ref2 = mononphm_forward_ref(params, positions, expression, True)
    assert jnp.allclose(sdf, ref1, atol=5e-2, rtol=5e-2)
    assert jnp.allclose(out_fused, ref2, atol=5e-2, rtol=5e-2)
    assert jnp.allclose(out_split, ref2, atol=5e-2, rtol=5e-2)

    # Larger query set exercising a multi-step grid with padding.
    N2 = 4500
    positions2 = jax.random.normal(k_pos2, (N2, 3), jnp.float32)
    out2 = mononphm_forward(params, positions2, expression, include_color=True)
    out2 = jax.block_until_ready(out2)
    assert out2.shape == (N2, 4)
    ref_big = mononphm_forward_ref(params, positions2, expression, True)
    assert jnp.allclose(out2, ref_big, atol=5e-2, rtol=5e-2)

    print("KERNEL_OK")
</pallas_src>

<mosaic_0001>
module attributes {stable_mosaic.version = 11 : i64} {
  func.func @_mononphm_kernel(%arg0: i32, %arg1: memref<8x1024xf32, #tpu.memory_space<vmem>>, %arg2: memref<256x8xbf16, #tpu.memory_space<vmem>>, %arg3: memref<128x128xbf16, #tpu.memory_space<vmem>>, %arg4: memref<128x128xbf16, #tpu.memory_space<vmem>>, %arg5: memref<8x128xbf16, #tpu.memory_space<vmem>>, %arg6: memref<8x128xbf16, #tpu.memory_space<vmem>>, %arg7: memref<256x8xf32, #tpu.memory_space<vmem>>, %arg8: memref<8x1024xf32, #tpu.memory_space<vmem>>) attributes {dimension_semantics = [#tpu.dimension_semantics<parallel>], iteration_bounds = array<i64: 1>, scalar_prefetch = 0 : i64, scratch_operands = 0 : i64, tpu.core_type = #tpu.core_type<tc>, window_params = [{transform_indices = @transform_0, window_bounds = array<i64: 8, 1024>}, {pipeline_mode = #tpu.pipeline_mode<synchronous>, transform_indices = @transform_1, window_bounds = array<i64: 256, 8>}, {pipeline_mode = #tpu.pipeline_mode<synchronous>, transform_indices = @transform_2, window_bounds = array<i64: 128, 128>}, {pipeline_mode = #tpu.pipeline_mode<synchronous>, transform_indices = @transform_3, window_bounds = array<i64: 128, 128>}, {pipeline_mode = #tpu.pipeline_mode<synchronous>, transform_indices = @transform_4, window_bounds = array<i64: 8, 128>}, {pipeline_mode = #tpu.pipeline_mode<synchronous>, transform_indices = @transform_5, window_bounds = array<i64: 8, 128>}, {pipeline_mode = #tpu.pipeline_mode<synchronous>, transform_indices = @transform_6, window_bounds = array<i64: 256, 8>}, {transform_indices = @transform_7, window_bounds = array<i64: 8, 1024>}]} {
    %c0 = arith.constant 0 : index
    %c0_0 = arith.constant 0 : index
    %0 = vector.load %arg1[%c0, %c0_0] : memref<8x1024xf32, #tpu.memory_space<vmem>>, vector<8x1024xf32>
    %1 = arith.truncf %0 : vector<8x1024xf32> to vector<8x1024xbf16>
    %c0_1 = arith.constant 0 : index
    %c2 = arith.constant 2 : index
    %2 = vector.load %arg7[%c0_1, %c2] : memref<256x8xf32, #tpu.memory_space<vmem>>, vector<8x1xf32>
    %c0_2 = arith.constant 0 : index
    %c0_3 = arith.constant 0 : index
    %3 = vector.load %arg2[%c0_2, %c0_3] : memref<256x8xbf16, #tpu.memory_space<vmem>>, vector<128x8xbf16>
    %cst = arith.constant dense<0.000000e+00> : vector<128x1024xf32>
    %4 = tpu.matmul %3, %1, %cst {dimension_numbers = #tpu.dot_dimension_numbers<[1], [0], [0], [1], [0, 0, 1, 1], [], []>} : vector<128x8xbf16>, vector<8x1024xbf16>, vector<128x1024xf32> -> vector<128x1024xf32>
    %cst_4 = arith.constant 0.000000e+00 : f32
    %5 = vector.broadcast %cst_4 : f32 to vector<128x1024xf32>
    %6 = arith.maximumf %4, %5 : vector<128x1024xf32>
    %c0_5 = arith.constant 0 : index
    %c0_6 = arith.constant 0 : index
    %7 = vector.load %arg3[%c0_5, %c0_6] : memref<128x128xbf16, #tpu.memory_space<vmem>>, vector<128x128xbf16>
    %8 = arith.truncf %6 : vector<128x1024xf32> to vector<128x1024xbf16>
    %cst_7 = arith.constant dense<0.000000e+00> : vector<128x1024xf32>
    %9 = tpu.matmul %7, %8, %cst_7 {dimension_numbers = #tpu.dot_dimension_numbers<[1], [0], [0], [1], [0, 0, 1, 1], [], []>} : vector<128x128xbf16>, vector<128x1024xbf16>, vector<128x1024xf32> -> vector<128x1024xf32>
    %c0_8 = arith.constant 0 : index
    %c0_9 = arith.constant 0 : index
    %10 = vector.load %arg7[%c0_8, %c0_9] : memref<256x8xf32, #tpu.memory_space<vmem>>, vector<128x1xf32>
    %11 = vector.broadcast %10 : vector<128x1xf32> to vector<128x1024xf32>
    %12 = arith.addf %9, %11 : vector<128x1024xf32>
    %cst_10 = arith.constant 0.000000e+00 : f32
    %13 = vector.broadcast %cst_10 : f32 to vector<128x1024xf32>
    %14 = arith.maximumf %12, %13 : vector<128x1024xf32>
    %c0_11 = arith.constant 0 : index
    %c0_12 = arith.constant 0 : index
    %15 = vector.load %arg5[%c0_11, %c0_12] : memref<8x128xbf16, #tpu.memory_space<vmem>>, vector<8x128xbf16>
    %16 = arith.truncf %14 : vector<128x1024xf32> to vector<128x1024xbf16>
    %cst_13 = arith.constant dense<0.000000e+00> : vector<8x1024xf32>
    %17 = tpu.matmul %15, %16, %cst_13 {dimension_numbers = #tpu.dot_dimension_numbers<[1], [0], [0], [1], [0, 0, 1, 1], [], []>} : vector<8x128xbf16>, vector<128x1024xbf16>, vector<8x1024xf32> -> vector<8x1024xf32>
    %18 = arith.addf %0, %17 : vector<8x1024xf32>
    %19 = arith.truncf %18 : vector<8x1024xf32> to vector<8x1024xbf16>
    %c128 = arith.constant 128 : index
    %c0_14 = arith.constant 0 : index
    %20 = vector.load %arg2[%c128, %c0_14] : memref<256x8xbf16, #tpu.memory_space<vmem>>, vector<128x8xbf16>
    %cst_15 = arith.constant dense<0.000000e+00> : vector<128x1024xf32>
    %21 = tpu.matmul %20, %19, %cst_15 {dimension_numbers = #tpu.dot_dimension_numbers<[1], [0], [0], [1], [0, 0, 1, 1], [], []>} : vector<128x8xbf16>, vector<8x1024xbf16>, vector<128x1024xf32> -> vector<128x1024xf32>
    %cst_16 = arith.constant 0.000000e+00 : f32
    %22 = vector.broadcast %cst_16 : f32 to vector<128x1024xf32>
    %23 = arith.maximumf %21, %22 : vector<128x1024xf32>
    %c0_17 = arith.constant 0 : index
    %c0_18 = arith.constant 0 : index
    %24 = vector.load %arg4[%c0_17, %c0_18] : memref<128x128xbf16, #tpu.memory_space<vmem>>, vector<128x128xbf16>
    %25 = arith.truncf %23 : vector<128x1024xf32> to vector<128x1024xbf16>
    %cst_19 = arith.constant dense<0.000000e+00> : vector<128x1024xf32>
    %26 = tpu.matmul %24, %25, %cst_19 {dimension_numbers = #tpu.dot_dimension_numbers<[1], [0], [0], [1], [0, 0, 1, 1], [], []>} : vector<128x128xbf16>, vector<128x1024xbf16>, vector<128x1024xf32> -> vector<128x1024xf32>
    %c0_20 = arith.constant 0 : index
    %c1 = arith.constant 1 : index
    %27 = vector.load %arg7[%c0_20, %c1] : memref<256x8xf32, #tpu.memory_space<vmem>>, vector<128x1xf32>
    %28 = vector.broadcast %27 : vector<128x1xf32> to vector<128x1024xf32>
    %29 = arith.addf %26, %28 : vector<128x1024xf32>
    %cst_21 = arith.constant 0.000000e+00 : f32
    %30 = vector.broadcast %cst_21 : f32 to vector<128x1024xf32>
    %31 = arith.maximumf %29, %30 : vector<128x1024xf32>
    %c0_22 = arith.constant 0 : index
    %c0_23 = arith.constant 0 : index
    %32 = vector.load %arg6[%c0_22, %c0_23] : memref<8x128xbf16, #tpu.memory_space<vmem>>, vector<8x128xbf16>
    %33 = arith.truncf %31 : vector<128x1024xf32> to vector<128x1024xbf16>
    %cst_24 = arith.constant dense<0.000000e+00> : vector<8x1024xf32>
    %34 = tpu.matmul %32, %33, %cst_24 {dimension_numbers = #tpu.dot_dimension_numbers<[1], [0], [0], [1], [0, 0, 1, 1], [], []>} : vector<8x128xbf16>, vector<128x1024xbf16>, vector<8x1024xf32> -> vector<8x1024xf32>
    %35 = vector.broadcast %2 : vector<8x1xf32> to vector<8x1024xf32>
    %36 = arith.addf %34, %35 : vector<8x1024xf32>
    %c0_25 = arith.constant 0 : index
    %c0_26 = arith.constant 0 : index
    %37 = vector.load %arg8[%c0_25, %c0_26] : memref<8x1024xf32, #tpu.memory_space<vmem>>, vector<8x1024xf32>
    tpu.vector_store %arg8[%c0_25, %c0_26], %36 {strides = array<i32>} : memref<8x1024xf32, #tpu.memory_space<vmem>>, vector<8x1024xf32>,
    return
  }
  func.func @transform_0(%arg0: i32) -> (i32, i32) {
    %c0_i32 = arith.constant 0 : i32
    %c0_i32_0 = arith.constant 0 : i32
    return %c0_i32, %arg0 : i32, i32
  }
  func.func @transform_1(%arg0: i32) -> (i32, i32) {
    %c0_i32 = arith.constant 0 : i32
    %c0_i32_0 = arith.constant 0 : i32
    %c0_i32_1 = arith.constant 0 : i32
    return %c0_i32, %c0_i32_0 : i32, i32
  }
  func.func @transform_2(%arg0: i32) -> (i32, i32) {
    %c0_i32 = arith.constant 0 : i32
    %c0_i32_0 = arith.constant 0 : i32
    %c0_i32_1 = arith.constant 0 : i32
    return %c0_i32, %c0_i32_0 : i32, i32
  }
  func.func @transform_3(%arg0: i32) -> (i32, i32) {
    %c0_i32 = arith.constant 0 : i32
    %c0_i32_0 = arith.constant 0 : i32
    %c0_i32_1 = arith.constant 0 : i32
    return %c0_i32, %c0_i32_0 : i32, i32
  }
  func.func @transform_4(%arg0: i32) -> (i32, i32) {
    %c0_i32 = arith.constant 0 : i32
    %c0_i32_0 = arith.constant 0 : i32
    %c0_i32_1 = arith.constant 0 : i32
    return %c0_i32, %c0_i32_0 : i32, i32
  }
  func.func @transform_5(%arg0: i32) -> (i32, i32) {
    %c0_i32 = arith.constant 0 : i32
    %c0_i32_0 = arith.constant 0 : i32
    %c0_i32_1 = arith.constant 0 : i32
    return %c0_i32, %c0_i32_0 : i32, i32
  }
  func.func @transform_6(%arg0: i32) -> (i32, i32) {
    %c0_i32 = arith.constant 0 : i32
    %c0_i32_0 = arith.constant 0 : i32
    %c0_i32_1 = arith.constant 0 : i32
    return %c0_i32, %c0_i32_0 : i32, i32
  }
  func.func @transform_7(%arg0: i32) -> (i32, i32) {
    %c0_i32 = arith.constant 0 : i32
    %c0_i32_0 = arith.constant 0 : i32
    return %c0_i32, %arg0 : i32, i32
  }
}

</mosaic_0001>

<llo_original>
// kernel: tpu_custom_call.1
$region0: #{tpu_custom_call.1}
  #allocation0 [shape = 'u32[]', space=smem, size = 0x4, offset = 0x4, fixed_abs, tag = 'smem constant byte address 0x4 - core index']
  #allocation1 [shape = 'u32[144,128]{1,0:T(1,128)}', space=vmem, size = 0x12000, scoped, tag = 'internal scratch']
  %s0 = inlined_call_operand.vmem [shape: f32[8,1024], index: 0, kind: input, shape index: {}]
  %s1 = inlined_call_operand.vmem [shape: bf16[256,8], index: 1, kind: input, shape index: {}]
  %s2 = inlined_call_operand.vmem [shape: bf16[128,128], index: 2, kind: input, shape index: {}]
  %s3 = inlined_call_operand.vmem [shape: bf16[128,128], index: 3, kind: input, shape index: {}]
  %s4 = inlined_call_operand.vmem [shape: bf16[8,128], index: 4, kind: input, shape index: {}]
  %s5 = inlined_call_operand.vmem [shape: bf16[8,128], index: 5, kind: input, shape index: {}]
  %s6 = inlined_call_operand.vmem [shape: f32[256,8], index: 6, kind: input, shape index: {}]
  %s7 = inlined_call_operand.hbm [shape: f32[8,1024], index: 7, kind: output, shape index: {}]
  %s8 = sld [smem:[#allocation0]]
  $region38: #{tpu_custom_call.1} parent=0
    _
  %s10 = ssub.s32 1, %s8
  %s11 = scalar_select 0, %s10, %s8
  $region1: #{tpu_custom_call.1} parent=0
    #allocation2 [shape = 'u8[32768]{0}', space=vmem, size = 0x8000, scoped, tag = 'output window, operand 0, single buffered']
    #allocation3 [shape = 's32[1]{0}', space=sflag, size = 0x4, scoped, tag = 'scoped memory for tpu_custom_call.1']
    %12 = vsyncpa [#allocation3], 0
    // Predicated region
    $region2: #{tpu_custom_call.1} parent=1 // pred_check
      _
    $region3: #{tpu_custom_call.1} parent=1 // pred_check_branch
      %14 = sbr.rel (0) target = $region5
    $region4: #{tpu_custom_call.1} parent=1 // pred_region
      _
    $region5: #{tpu_custom_call.1} parent=1 // pred_fallthru
      _
    // Predicated region
    $region6: #{tpu_custom_call.1} parent=1 // pred_check
      _
    $region7: #{tpu_custom_call.1} parent=1 // pred_check_branch
      %16 = sbr.rel (0) target = $region9
    $region8: #{tpu_custom_call.1} parent=1 // pred_region
      _
    $region9: #{tpu_custom_call.1} parent=1 // pred_fallthru
      _
    // Predicated region
    $region10: #{tpu_custom_call.1} parent=1 // pred_check
      _
    $region11: #{tpu_custom_call.1} parent=1 // pred_check_branch
      %18 = sbr.rel (0) target = $region13
    $region12: #{tpu_custom_call.1} parent=1 // pred_region
      _
    $region13: #{tpu_custom_call.1} parent=1 // pred_fallthru
      _
    // Predicated region
    $region14: #{tpu_custom_call.1} parent=1 // pred_check
      _
    $region15: #{tpu_custom_call.1} parent=1 // pred_check_branch
      %20 = sbr.rel (0) target = $region17
    $region16: #{tpu_custom_call.1} parent=1 // pred_region
      _
    $region17: #{tpu_custom_call.1} parent=1 // pred_fallthru
      _
    // Predicated region
    $region18: #{tpu_custom_call.1} parent=1 // pred_check
      _
    $region19: #{tpu_custom_call.1} parent=1 // pred_check_branch
      %22 = sbr.rel (0) target = $region21
    $region20: #{tpu_custom_call.1} parent=1 // pred_region
      _
    $region21: #{tpu_custom_call.1} parent=1 // pred_fallthru
      _
    // Predicated region
    $region22: #{tpu_custom_call.1} parent=1 // pred_check
      _
    $region23: #{tpu_custom_call.1} parent=1 // pred_check_branch
      %24 = sbr.rel (0) target = $region25
    $region24: #{tpu_custom_call.1} parent=1 // pred_region
      _
    $region25: #{tpu_custom_call.1} parent=1 // pred_fallthru
      _
    // Predicated region
    $region26: #{tpu_custom_call.1} parent=1 // pred_check
      _
    $region27: #{tpu_custom_call.1} parent=1 // pred_check_branch
      %26 = sbr.rel (0) target = $region29
    $region28: #{tpu_custom_call.1} parent=1 // pred_region
      _
    $region29: #{tpu_custom_call.1} parent=1 // pred_fallthru
      _
    %v28 = vld [vmem:[%s0] sm:$0xff]
    %v29 = vld [vmem:[%s0 + $0x8] sm:$0xff]
    %v30 = vld [vmem:[%s0 + $0x10] sm:$0xff]
    %v31 = vld [vmem:[%s0 + $0x18] sm:$0xff]
    %v32 = vld [vmem:[%s0 + $0x20] sm:$0xff]
    %v33 = vld [vmem:[%s0 + $0x28] sm:$0xff]
    %v34 = vld [vmem:[%s0 + $0x30] sm:$0xff]
    %v35 = vld [vmem:[%s0 + $0x38] sm:$0xff]
    %v36 = vpack.c.bf16 %v28, %v28
    %v37 = vpack.c.bf16 %v29, %v29
    %v38 = vpack.c.bf16 %v30, %v30
    %v39 = vpack.c.bf16 %v31, %v31
    %v40 = vpack.c.bf16 %v32, %v32
    %v41 = vpack.c.bf16 %v33, %v33
    %v42 = vpack.c.bf16 %v34, %v34
    %v43 = vpack.c.bf16 %v35, %v35
    %v44 = vld [vmem:[%s6] sm:$0xff]
    %v45 = vld [vmem:[%s1] sm:$0xf]
    %v46 = vld [vmem:[%s1 + $0x4] sm:$0xf]
    %v47 = vld [vmem:[%s1 + $0x8] sm:$0xf]
    %v48 = vld [vmem:[%s1 + $0xc] sm:$0xf]
    %v49 = vld [vmem:[%s1 + $0x10] sm:$0xf]
    %v50 = vld [vmem:[%s1 + $0x14] sm:$0xf]
    %v51 = vld [vmem:[%s1 + $0x18] sm:$0xf]
    %v52 = vld [vmem:[%s1 + $0x1c] sm:$0xf]
    %v53 = vld [vmem:[%s1 + $0x20] sm:$0xf]
    %v54 = vld [vmem:[%s1 + $0x24] sm:$0xf]
    %v55 = vld [vmem:[%s1 + $0x28] sm:$0xf]
    %v56 = vld [vmem:[%s1 + $0x2c] sm:$0xf]
    %v57 = vld [vmem:[%s1 + $0x30] sm:$0xf]
    %v58 = vld [vmem:[%s1 + $0x34] sm:$0xf]
    %v59 = vld [vmem:[%s1 + $0x38] sm:$0xf]
    %v60 = vld [vmem:[%s1 + $0x3c] sm:$0xf]
    %v77 = vunpack.c.l.b16 %v45
    %v78 = vunpack.c.l.b16 %v46
    %v79 = vunpack.c.l.b16 %v47
    %v80 = vunpack.c.l.b16 %v48
    %v81 = vunpack.c.l.b16 %v49
    %v82 = vunpack.c.l.b16 %v50
    %v83 = vunpack.c.l.b16 %v51
    %v84 = vunpack.c.l.b16 %v52
    %v85 = vunpack.c.l.b16 %v53
    %v86 = vunpack.c.l.b16 %v54
    %v87 = vunpack.c.l.b16 %v55
    %v88 = vunpack.c.l.b16 %v56
    %v89 = vunpack.c.l.b16 %v57
    %v90 = vunpack.c.l.b16 %v58
    %v91 = vunpack.c.l.b16 %v59
    %v92 = vunpack.c.l.b16 %v60
    %v93 = vpack.c.b16 %v78, %v77
    %v94 = vpack.c.b16 %v80, %v79
    %v95 = vpack.c.b16 %v82, %v81
    %v96 = vpack.c.b16 %v84, %v83
    %v97 = vpack.c.b16 %v86, %v85
    %v98 = vpack.c.b16 %v88, %v87
    %v99 = vpack.c.b16 %v90, %v89
    %v100 = vpack.c.b16 %v92, %v91
    %vm101 = vcmask 64512
    %v103 = vsel %vm101, %v93, 0
    %v106 = vsel %vm101, %v94, 0
    %v109 = vsel %vm101, %v95, 0
    %v112 = vsel %vm101, %v96, 0
    %v115 = vsel %vm101, %v97, 0
    %v118 = vsel %vm101, %v98, 0
    %v121 = vsel %vm101, %v99, 0
    %v124 = vsel %vm101, %v100, 0
    %vm126 = vcmask 1043456
    %v128 = vsel %vm126, %v36, 0
    %v131 = vsel %vm126, %v37, 0
    %v134 = vsel %vm126, %v38, 0
    %v137 = vsel %vm126, %v39, 0
    %v140 = vsel %vm126, %v40, 0
    %v143 = vsel %vm126, %v41, 0
    %v146 = vsel %vm126, %v42, 0
    %v149 = vsel %vm126, %v43, 0
    %151 = vmatprep.subr.bf16.mxu0 %v131
    %152 = vmatpush1.bf16.msra.mxu0 %v128
    %153 = vmatprep.subr.bf16.mxu0 0
    %154 = vmatpush1.bf16.msra.mxu0 0
    %155 = vmatprep.subr.bf16.mxu0 0
    %156 = vmatpush1.bf16.msra.mxu0 0
    %157 = vmatprep.subr.bf16.mxu0 0
    %158 = vmatpush1.bf16.msra.mxu0 0
    %159 = vmatprep.subr.bf16.mxu0 0
    %160 = vmatpush1.bf16.msra.mxu0 0
    %161 = vmatprep.subr.bf16.mxu0 0
    %162 = vmatpush1.bf16.msra.mxu0 0
    %163 = vmatprep.subr.bf16.mxu0 0
    %164 = vmatpush1.bf16.msra.mxu0 0
    %165 = vmatprep.subr.bf16.mxu0 0
    %166 = vmatpush1.bf16.msra.mxu0 0
    %167 = vmatprep.subr.bf16.mxu0 0
    %168 = vmatpush1.bf16.msra.mxu0 0
    %169 = vmatprep.subr.bf16.mxu0 0
    %170 = vmatpush1.bf16.msra.mxu0 0
    %171 = vmatprep.subr.bf16.mxu0 0
    %172 = vmatpush1.bf16.msra.mxu0 0
    %173 = vmatprep.subr.bf16.mxu0 0
    %174 = vmatpush1.bf16.msra.mxu0 0
    %175 = vmatprep.subr.bf16.mxu0 0
    %176 = vmatpush1.bf16.msra.mxu0 0
    %177 = vmatprep.subr.bf16.mxu0 0
    %178 = vmatpush1.bf16.msra.mxu0 0
    %179 = vmatprep.subr.bf16.mxu0 0
    %180 = vmatpush1.bf16.msra.mxu0 0
    %181 = vmatprep.subr.bf16.mxu0 0
    %182 = vmatpush1.bf16.msra.mxu0 0
    %183 = vmatprep.mubr.bf16.mxu0 0
    %184 = vmatmul.mubr.bf16.gmra.mrb[0].mxu0 %v103
    %v185 = vpop.f32.mrb[0].mxu0
    %v186 = vadd.f32 0.0, %v185
    %v187 = vpop.f32.mrb[0].mxu0
    %v188 = vadd.f32 0.0, %v187
    %v189 = vpop.f32.mrb[0].mxu0
    %v190 = vadd.f32 0.0, %v189
    %v191 = vpop.f32.mrb[0].mxu0
    %v192 = vadd.f32 0.0, %v191
    %193 = vmatprep.mubr.bf16.mxu0 0
    %194 = vmatmul.mubr.bf16.gmra.mrb[0].mxu0 %v106
    %v195 = vpop.f32.mrb[0].mxu0
    %v196 = vadd.f32 0.0, %v195
    %v197 = vpop.f32.mrb[0].mxu0
    %v198 = vadd.f32 0.0, %v197
    %v199 = vpop.f32.mrb[0].mxu0
    %v200 = vadd.f32 0.0, %v199
    %v201 = vpop.f32.mrb[0].mxu0
    %v202 = vadd.f32 0.0, %v201
    %203 = vmatprep.mubr.bf16.mxu0 0
    %204 = vmatmul.mubr.bf16.gmra.mrb[0].mxu0 %v109
    %v205 = vpop.f32.mrb[0].mxu0
    %v206 = vadd.f32 0.0, %v205
    %v207 = vpop.f32.mrb[0].mxu0
    %v208 = vadd.f32 0.0, %v207
    %v209 = vpop.f32.mrb[0].mxu0
    %v210 = vadd.f32 0.0, %v209
    %v211 = vpop.f32.mrb[0].mxu0
    %v212 = vadd.f32 0.0, %v211
    %213 = vmatprep.mubr.bf16.mxu0 0
    %214 = vmatmul.mubr.bf16.gmra.mrb[0].mxu0 %v112
    %v215 = vpop.f32.mrb[0].mxu0
    %v216 = vadd.f32 0.0, %v215
    %v217 = vpop.f32.mrb[0].mxu0
    %v218 = vadd.f32 0.0, %v217
    %v219 = vpop.f32.mrb[0].mxu0
    %v220 = vadd.f32 0.0, %v219
    %v221 = vpop.f32.mrb[0].mxu0
    %v222 = vadd.f32 0.0, %v221
    %223 = vmatprep.mubr.bf16.mxu0 0
    %224 = vmatmul.mubr.bf16.gmra.mrb[0].mxu0 %v115
    %v225 = vpop.f32.mrb[0].mxu0
    %v226 = vadd.f32 0.0, %v225
    %v227 = vpop.f32.mrb[0].mxu0
    %v228 = vadd.f32 0.0, %v227
    %v229 = vpop.f32.mrb[0].mxu0
    %v230 = vadd.f32 0.0, %v229
    %v231 = vpop.f32.mrb[0].mxu0
    %v232 = vadd.f32 0.0, %v231
    %233 = vmatprep.mubr.bf16.mxu0 0
    %234 = vmatmul.mubr.bf16.gmra.mrb[0].mxu0 %v118
    %v235 = vpop.f32.mrb[0].mxu0
    %v236 = vadd.f32 0.0, %v235
    %v237 = vpop.f32.mrb[0].mxu0
    %v238 = vadd.f32 0.0, %v237
    %v239 = vpop.f32.mrb[0].mxu0
    %v240 = vadd.f32 0.0, %v239
    %v241 = vpop.f32.mrb[0].mxu0
    %v242 = vadd.f32 0.0, %v241
    %243 = vmatprep.mubr.bf16.mxu0 0
    %244 = vmatmul.mubr.bf16.gmra.mrb[0].mxu0 %v121
    %v245 = vpop.f32.mrb[0].mxu0
    %v246 = vadd.f32 0.0, %v245
    %v247 = vpop.f32.mrb[0].mxu0
    %v248 = vadd.f32 0.0, %v247
    %v249 = vpop.f32.mrb[0].mxu0
    %v250 = vadd.f32 0.0, %v249
    %v251 = vpop.f32.mrb[0].mxu0
    %v252 = vadd.f32 0.0, %v251
    %253 = vmatprep.mubr.bf16.mxu0 0
    %254 = vmatmul.mubr.bf16.gmra.mrb[0].mxu0 %v124
    %v255 = vpop.f32.mrb[0].mxu0
    %v256 = vadd.f32 0.0, %v255
    %v257 = vpop.f32.mrb[0].mxu0
    %v258 = vadd.f32 0.0, %v257
    %v259 = vpop.f32.mrb[0].mxu0
    %v260 = vadd.f32 0.0, %v259
    %v261 = vpop.f32.mrb[0].mxu0
    %v262 = vadd.f32 0.0, %v261
    %263 = vdwg.mxu0
    %264 = vmatprep.subr.bf16.mxu0 %v137
    %265 = vmatpush1.bf16.msra.mxu0 %v134
    %266 = vmatprep.subr.bf16.mxu0 0
    %267 = vmatpush1.bf16.msra.mxu0 0
    %268 = vmatprep.subr.bf16.mxu0 0
    %269 = vmatpush1.bf16.msra.mxu0 0
    %270 = vmatprep.subr.bf16.mxu0 0
    %271 = vmatpush1.bf16.msra.mxu0 0
    %272 = vmatprep.subr.bf16.mxu0 0
    %273 = vmatpush1.bf16.msra.mxu0 0
    %274 = vmatprep.subr.bf16.mxu0 0
    %275 = vmatpush1.bf16.msra.mxu0 0
    %276 = vmatprep.subr.bf16.mxu0 0
    %277 = vmatpush1.bf16.msra.mxu0 0
    %278 = vmatprep.subr.bf16.mxu0 0
    %279 = vmatpush1.bf16.msra.mxu0 0
    %280 = vmatprep.subr.bf16.mxu0 0
    %281 = vmatpush1.bf16.msra.mxu0 0
    %282 = vmatprep.subr.bf16.mxu0 0
    %283 = vmatpush1.bf16.msra.mxu0 0
    %284 = vmatprep.subr.bf16.mxu0 0
    %285 = vmatpush1.bf16.msra.mxu0 0
    %286 = vmatprep.subr.bf16.mxu0 0
    %287 = vmatpush1.bf16.msra.mxu0 0
    %288 = vmatprep.subr.bf16.mxu0 0
    %289 = vmatpush1.bf16.msra.mxu0 0
    %290 = vmatprep.subr.bf16.mxu0 0
    %291 = vmatpush1.bf16.msra.mxu0 0
    %292 = vmatprep.subr.bf16.mxu0 0
    %293 = vmatpush1.bf16.msra.mxu0 0
    %294 = vmatprep.subr.bf16.mxu0 0
    %295 = vmatpush1.bf16.msra.mxu0 0
    %296 = vmatprep.mubr.bf16.mxu0 0
    %297 = vmatmul.mubr.bf16.gmra.mrb[0].mxu0 %v103
    %v298 = vpop.f32.mrb[0].mxu0
    %v299 = vadd.f32 0.0, %v298
    %v300 = vpop.f32.mrb[0].mxu0
    %v301 = vadd.f32 0.0, %v300
    %v302 = vpop.f32.mrb[0].mxu0
    %v303 = vadd.f32 0.0, %v302
    %v304 = vpop.f32.mrb[0].mxu0
    %v305 = vadd.f32 0.0, %v304
    %306 = vmatprep.mubr.bf16.mxu0 0
    %307 = vmatmul.mubr.bf16.gmra.mrb[0].mxu0 %v106
    %v308 = vpop.f32.mrb[0].mxu0
    %v309 = vadd.f32 0.0, %v308
    %v310 = vpop.f32.mrb[0].mxu0
    %v311 = vadd.f32 0.0, %v310
    %v312 = vpop.f32.mrb[0].mxu0
    %v313 = vadd.f32 0.0, %v312
    %v314 = vpop.f32.mrb[0].mxu0
    %v315 = vadd.f32 0.0, %v314
    %316 = vmatprep.mubr.bf16.mxu0 0
    %317 = vmatmul.mubr.bf16.gmra.mrb[0].mxu0 %v109
    %v318 = vpop.f32.mrb[0].mxu0
    %v319 = vadd.f32 0.0, %v318
    %v320 = vpop.f32.mrb[0].mxu0
    %v321 = vadd.f32 0.0, %v320
    %v322 = vpop.f32.mrb[0].mxu0
    %v323 = vadd.f32 0.0, %v322
    %v324 = vpop.f32.mrb[0].mxu0
    %v325 = vadd.f32 0.0, %v324
    %326 = vmatprep.mubr.bf16.mxu0 0
    %327 = vmatmul.mubr.bf16.gmra.mrb[0].mxu0 %v112
    %v328 = vpop.f32.mrb[0].mxu0
    %v329 = vadd.f32 0.0, %v328
    %v330 = vpop.f32.mrb[0].mxu0
    %v331 = vadd.f32 0.0, %v330
    %v332 = vpop.f32.mrb[0].mxu0
    %v333 = vadd.f32 0.0, %v332
    %v334 = vpop.f32.mrb[0].mxu0
    %v335 = vadd.f32 0.0, %v334
    %336 = vmatprep.mubr.bf16.mxu0 0
    %337 = vmatmul.mubr.bf16.gmra.mrb[0].mxu0 %v115
    %v338 = vpop.f32.mrb[0].mxu0
    %v339 = vadd.f32 0.0, %v338
    %v340 = vpop.f32.mrb[0].mxu0
    %v341 = vadd.f32 0.0, %v340
    %v342 = vpop.f32.mrb[0].mxu0
    %v343 = vadd.f32 0.0, %v342
    %v344 = vpop.f32.mrb[0].mxu0
    %v345 = vadd.f32 0.0, %v344
    %346 = vmatprep.mubr.bf16.mxu0 0
    %347 = vmatmul.mubr.bf16.gmra.mrb[0].mxu0 %v118
    %v348 = vpop.f32.mrb[0].mxu0
    %v349 = vadd.f32 0.0, %v348
    %v350 = vpop.f32.mrb[0].mxu0
    %v351 = vadd.f32 0.0, %v350
    %v352 = vpop.f32.mrb[0].mxu0
    %v353 = vadd.f32 0.0, %v352
    %v354 = vpop.f32.mrb[0].mxu0
    %v355 = vadd.f32 0.0, %v354
    %356 = vmatprep.mubr.bf16.mxu0 0
    %357 = vmatmul.mubr.bf16.gmra.mrb[0].mxu0 %v121
    %v358 = vpop.f32.mrb[0].mxu0
    %v359 = vadd.f32 0.0, %v358
    %v360 = vpop.f32.mrb[0].mxu0
    %v361 = vadd.f32 0.0, %v360
    %v362 = vpop.f32.mrb[0].mxu0
    %v363 = vadd.f32 0.0, %v362
    %v364 = vpop.f32.mrb[0].mxu0
    %v365 = vadd.f32 0.0, %v364
    %366 = vmatprep.mubr.bf16.mxu0 0
    %367 = vmatmul.mubr.bf16.gmra.mrb[0].mxu0 %v124
    %v368 = vpop.f32.mrb[0].mxu0
    %v369 = vadd.f32 0.0, %v368
    %v370 = vpop.f32.mrb[0].mxu0
    %v371 = vadd.f32 0.0, %v370
    %v372 = vpop.f32.mrb[0].mxu0
    %v373 = vadd.f32 0.0, %v372
    %v374 = vpop.f32.mrb[0].mxu0
    %v375 = vadd.f32 0.0, %v374
    %376 = vdwg.mxu0
    %377 = vmatprep.subr.bf16.mxu0 %v143
    %378 = vmatpush1.bf16.msra.mxu0 %v140
    %379 = vmatprep.subr.bf16.mxu0 0
    %380 = vmatpush1.bf16.msra.mxu0 0
    %381 = vmatprep.subr.bf16.mxu0 0
    %382 = vmatpush1.bf16.msra.mxu0 0
    %383 = vmatprep.subr.bf16.mxu0 0
    %384 = vmatpush1.bf16.msra.mxu0 0
    %385 = vmatprep.subr.bf16.mxu0 0
    %386 = vmatpush1.bf16.msra.mxu0 0
    %387 = vmatprep.subr.bf16.mxu0 0
    %388 = vmatpush1.bf16.msra.mxu0 0
    %389 = vmatprep.subr.bf16.mxu0 0
    %390 = vmatpush1.bf16.msra.mxu0 0
    %391 = vmatprep.subr.bf16.mxu0 0
    %392 = vmatpush1.bf16.msra.mxu0 0
    %393 = vmatprep.subr.bf16.mxu0 0
    %394 = vmatpush1.bf16.msra.mxu0 0
    %395 = vmatprep.subr.bf16.mxu0 0
    %396 = vmatpush1.bf16.msra.mxu0 0
    %397 = vmatprep.subr.bf16.mxu0 0
    %398 = vmatpush1.bf16.msra.mxu0 0
    %399 = vmatprep.subr.bf16.mxu0 0
    %400 = vmatpush1.bf16.msra.mxu0 0
    %401 = vmatprep.subr.bf16.mxu0 0
    %402 = vmatpush1.bf16.msra.mxu0 0
    %403 = vmatprep.subr.bf16.mxu0 0
    %404 = vmatpush1.bf16.msra.mxu0 0
    %405 = vmatprep.subr.bf16.mxu0 0
    %406 = vmatpush1.bf16.msra.mxu0 0
    %407 = vmatprep.subr.bf16.mxu0 0
    %408 = vmatpush1.bf16.msra.mxu0 0
    %409 = vmatprep.mubr.bf16.mxu0 0
    %410 = vmatmul.mubr.bf16.gmra.mrb[0].mxu0 %v103
    %v411 = vpop.f32.mrb[0].mxu0
    %v412 = vadd.f32 0.0, %v411
    %v413 = vpop.f32.mrb[0].mxu0
    %v414 = vadd.f32 0.0, %v413
    %v415 = vpop.f32.mrb[0].mxu0
    %v416 = vadd.f32 0.0, %v415
    %v417 = vpop.f32.mrb[0].mxu0
    %v418 = vadd.f32 0.0, %v417
    %419 = vmatprep.mubr.bf16.mxu0 0
    %420 = vmatmul.mubr.bf16.gmra.mrb[0].mxu0 %v106
    %v421 = vpop.f32.mrb[0].mxu0
    %v422 = vadd.f32 0.0, %v421
    %v423 = vpop.f32.mrb[0].mxu0
    %v424 = vadd.f32 0.0, %v423
    %v425 = vpop.f32.mrb[0].mxu0
    %v426 = vadd.f32 0.0, %v425
    %v427 = vpop.f32.mrb[0].mxu0
    %v428 = vadd.f32 0.0, %v427
    %429 = vmatprep.mubr.bf16.mxu0 0
    %430 = vmatmul.mubr.bf16.gmra.mrb[0].mxu0 %v109
    %v431 = vpop.f32.mrb[0].mxu0
    %v432 = vadd.f32 0.0, %v431
    %v433 = vpop.f32.mrb[0].mxu0
    %v434 = vadd.f32 0.0, %v433
    %v435 = vpop.f32.mrb[0].mxu0
    %v436 = vadd.f32 0.0, %v435
    %v437 = vpop.f32.mrb[0].mxu0
    %v438 = vadd.f32 0.0, %v437
    %439 = vmatprep.mubr.bf16.mxu0 0
    %440 = vmatmul.mubr.bf16.gmra.mrb[0].mxu0 %v112
    %v441 = vpop.f32.mrb[0].mxu0
    %v442 = vadd.f32 0.0, %v441
    %v443 = vpop.f32.mrb[0].mxu0
    %v444 = vadd.f32 0.0, %v443
    %v445 = vpop.f32.mrb[0].mxu0
    %v446 = vadd.f32 0.0, %v445
    %v447 = vpop.f32.mrb[0].mxu0
    %v448 = vadd.f32 0.0, %v447
    %449 = vmatprep.mubr.bf16.mxu0 0
    %450 = vmatmul.mubr.bf16.gmra.mrb[0].mxu0 %v115
    %v451 = vpop.f32.mrb[0].mxu0
    %v452 = vadd.f32 0.0, %v451
    %v453 = vpop.f32.mrb[0].mxu0
    %v454 = vadd.f32 0.0, %v453
    %v455 = vpop.f32.mrb[0].mxu0
    %v456 = vadd.f32 0.0, %v455
    %v457 = vpop.f32.mrb[0].mxu0
    %v458 = vadd.f32 0.0, %v457
    %459 = vmatprep.mubr.bf16.mxu0 0
    %460 = vmatmul.mubr.bf16.gmra.mrb[0].mxu0 %v118
    %v461 = vpop.f32.mrb[0].mxu0
    %v462 = vadd.f32 0.0, %v461
    %v463 = vpop.f32.mrb[0].mxu0
    %v464 = vadd.f32 0.0, %v463
    %v465 = vpop.f32.mrb[0].mxu0
    %v466 = vadd.f32 0.0, %v465
    %v467 = vpop.f32.mrb[0].mxu0
    %v468 = vadd.f32 0.0, %v467
    %469 = vmatprep.mubr.bf16.mxu0 0
    %470 = vmatmul.mubr.bf16.gmra.mrb[0].mxu0 %v121
    %v471 = vpop.f32.mrb[0].mxu0
    %v472 = vadd.f32 0.0, %v471
    %v473 = vpop.f32.mrb[0].mxu0
    %v474 = vadd.f32 0.0, %v473
    %v475 = vpop.f32.mrb[0].mxu0
    %v476 = vadd.f32 0.0, %v475
    %v477 = vpop.f32.mrb[0].mxu0
    %v478 = vadd.f32 0.0, %v477
    %479 = vmatprep.mubr.bf16.mxu0 0
    %480 = vmatmul.mubr.bf16.gmra.mrb[0].mxu0 %v124
    %v481 = vpop.f32.mrb[0].mxu0
    %v482 = vadd.f32 0.0, %v481
    %v483 = vpop.f32.mrb[0].mxu0
    %v484 = vadd.f32 0.0, %v483
    %v485 = vpop.f32.mrb[0].mxu0
    %v486 = vadd.f32 0.0, %v485
    %v487 = vpop.f32.mrb[0].mxu0
    %v488 = vadd.f32 0.0, %v487
    %489 = vdwg.mxu0
    %490 = vmatprep.subr.bf16.mxu0 %v149
    %491 = vmatpush1.bf16.msra.mxu0 %v146
    %492 = vmatprep.subr.bf16.mxu0 0
    %493 = vmatpush1.bf16.msra.mxu0 0
    %494 = vmatprep.subr.bf16.mxu0 0
    %495 = vmatpush1.bf16.msra.mxu0 0
    %496 = vmatprep.subr.bf16.mxu0 0
    %497 = vmatpush1.bf16.msra.mxu0 0
    %498 = vmatprep.subr.bf16.mxu0 0
    %499 = vmatpush1.bf16.msra.mxu0 0
    %500 = vmatprep.subr.bf16.mxu0 0
    %501 = vmatpush1.bf16.msra.mxu0 0
    %502 = vmatprep.subr.bf16.mxu0 0
    %503 = vmatpush1.bf16.msra.mxu0 0
    %504 = vmatprep.subr.bf16.mxu0 0
    %505 = vmatpush1.bf16.msra.mxu0 0
    %506 = vmatprep.subr.bf16.mxu0 0
    %507 = vmatpush1.bf16.msra.mxu0 0
    %508 = vmatprep.subr.bf16.mxu0 0
    %509 = vmatpush1.bf16.msra.mxu0 0
    %510 = vmatprep.subr.bf16.mxu0 0
    %511 = vmatpush1.bf16.msra.mxu0 0
    %512 = vmatprep.subr.bf16.mxu0 0
    %513 = vmatpush1.bf16.msra.mxu0 0
    %514 = vmatprep.subr.bf16.mxu0 0
    %515 = vmatpush1.bf16.msra.mxu0 0
    %516 = vmatprep.subr.bf16.mxu0 0
    %517 = vmatpush1.bf16.msra.mxu0 0
    %518 = vmatprep.subr.bf16.mxu0 0
    %519 = vmatpush1.bf16.msra.mxu0 0
    %520 = vmatprep.subr.bf16.mxu0 0
    %521 = vmatpush1.bf16.msra.mxu0 0
    %522 = vmatprep.mubr.bf16.mxu0 0
    %523 = vmatmul.mubr.bf16.gmra.mrb[0].mxu0 %v103
    %v524 = vpop.f32.mrb[0].mxu0
    %v525 = vadd.f32 0.0, %v524
    %v526 = vpop.f32.mrb[0].mxu0
    %v527 = vadd.f32 0.0, %v526
    %v528 = vpop.f32.mrb[0].mxu0
    %v529 = vadd.f32 0.0, %v528
    %v530 = vpop.f32.mrb[0].mxu0
    %v531 = vadd.f32 0.0, %v530
    %532 = vmatprep.mubr.bf16.mxu0 0
    %533 = vmatmul.mubr.bf16.gmra.mrb[0].mxu0 %v106
    %v534 = vpop.f32.mrb[0].mxu0
    %v535 = vadd.f32 0.0, %v534
    %v536 = vpop.f32.mrb[0].mxu0
    %v537 = vadd.f32 0.0, %v536
    %v538 = vpop.f32.mrb[0].mxu0
    %v539 = vadd.f32 0.0, %v538
    %v540 = vpop.f32.mrb[0].mxu0
    %v541 = vadd.f32 0.0, %v540
    %542 = vmatprep.mubr.bf16.mxu0 0
    %543 = vmatmul.mubr.bf16.gmra.mrb[0].mxu0 %v109
    %v544 = vpop.f32.mrb[0].mxu0
    %v545 = vadd.f32 0.0, %v544
    %v546 = vpop.f32.mrb[0].mxu0
    %v547 = vadd.f32 0.0, %v546
    %v548 = vpop.f32.mrb[0].mxu0
    %v549 = vadd.f32 0.0, %v548
    %v550 = vpop.f32.mrb[0].mxu0
    %v551 = vadd.f32 0.0, %v550
    %552 = vmatprep.mubr.bf16.mxu0 0
    %553 = vmatmul.mubr.bf16.gmra.mrb[0].mxu0 %v112
    %v554 = vpop.f32.mrb[0].mxu0
    %v555 = vadd.f32 0.0, %v554
    %v556 = vpop.f32.mrb[0].mxu0
    %v557 = vadd.f32 0.0, %v556
    %v558 = vpop.f32.mrb[0].mxu0
    %v559 = vadd.f32 0.0, %v558
    %v560 = vpop.f32.mrb[0].mxu0
    %v561 = vadd.f32 0.0, %v560
    %562 = vmatprep.mubr.bf16.mxu0 0
    %563 = vmatmul.mubr.bf16.gmra.mrb[0].mxu0 %v115
    %v564 = vpop.f32.mrb[0].mxu0
    %v565 = vadd.f32 0.0, %v564
    %v566 = vpop.f32.mrb[0].mxu0
    %v567 = vadd.f32 0.0, %v566
    %v568 = vpop.f32.mrb[0].mxu0
    %v569 = vadd.f32 0.0, %v568
    %v570 = vpop.f32.mrb[0].mxu0
    %v571 = vadd.f32 0.0, %v570
    %572 = vmatprep.mubr.bf16.mxu0 0
    %573 = vmatmul.mubr.bf16.gmra.mrb[0].mxu0 %v118
    %v574 = vpop.f32.mrb[0].mxu0
    %v575 = vadd.f32 0.0, %v574
    %v576 = vpop.f32.mrb[0].mxu0
    %v577 = vadd.f32 0.0, %v576
    %v578 = vpop.f32.mrb[0].mxu0
    %v579 = vadd.f32 0.0, %v578
    %v580 = vpop.f32.mrb[0].mxu0
    %v581 = vadd.f32 0.0, %v580
    %582 = vmatprep.mubr.bf16.mxu0 0
    %583 = vmatmul.mubr.bf16.gmra.mrb[0].mxu0 %v121
    %v584 = vpop.f32.mrb[0].mxu0
    %v585 = vadd.f32 0.0, %v584
    %v586 = vpop.f32.mrb[0].mxu0
    %v587 = vadd.f32 0.0, %v586
    %v588 = vpop.f32.mrb[0].mxu0
    %v589 = vadd.f32 0.0, %v588
    %v590 = vpop.f32.mrb[0].mxu0
    %v591 = vadd.f32 0.0, %v590
    %592 = vmatprep.mubr.bf16.mxu0 0
    %593 = vmatmul.mubr.bf16.gmra.mrb[0].mxu0 %v124
    %v594 = vpop.f32.mrb[0].mxu0
    %v595 = vadd.f32 0.0, %v594
    %v596 = vpop.f32.mrb[0].mxu0
    %v597 = vadd.f32 0.0, %v596
    %v598 = vpop.f32.mrb[0].mxu0
    %v599 = vadd.f32 0.0, %v598
    %v600 = vpop.f32.mrb[0].mxu0
    %v601 = vadd.f32 0.0, %v600
    %602 = vdwg.mxu0
    %v603 = vmax.f32 %v186, 0.0
    %v604 = vmax.f32 %v188, 0.0
    %v605 = vmax.f32 %v299, 0.0
    %v606 = vmax.f32 %v301, 0.0
    %v607 = vmax.f32 %v412, 0.0
    %v608 = vmax.f32 %v414, 0.0
    %v609 = vmax.f32 %v525, 0.0
    %v610 = vmax.f32 %v527, 0.0
    %v611 = vmax.f32 %v190, 0.0
    %v612 = vmax.f32 %v192, 0.0
    %v613 = vmax.f32 %v303, 0.0
    %v614 = vmax.f32 %v305, 0.0
    %v615 = vmax.f32 %v416, 0.0
    %v616 = vmax.f32 %v418, 0.0
    %v617 = vmax.f32 %v529, 0.0
    %v618 = vmax.f32 %v531, 0.0
    %v619 = vmax.f32 %v196, 0.0
    %v620 = vmax.f32 %v198, 0.0
    %v621 = vmax.f32 %v309, 0.0
    %v622 = vmax.f32 %v311, 0.0
    %v623 = vmax.f32 %v422, 0.0
    %v624 = vmax.f32 %v424, 0.0
    %v625 = vmax.f32 %v535, 0.0
    %v626 = vmax.f32 %v537, 0.0
    %v627 = vmax.f32 %v200, 0.0
    %v628 = vmax.f32 %v202, 0.0
    %v629 = vmax.f32 %v313, 0.0
    %v630 = vmax.f32 %v315, 0.0
    %v631 = vmax.f32 %v426, 0.0
    %v632 = vmax.f32 %v428, 0.0
    %v633 = vmax.f32 %v539, 0.0
    %v634 = vmax.f32 %v541, 0.0
    %v635 = vmax.f32 %v206, 0.0
    %v636 = vmax.f32 %v208, 0.0
    %v637 = vmax.f32 %v319, 0.0
    %v638 = vmax.f32 %v321, 0.0
    %v639 = vmax.f32 %v432, 0.0
    %v640 = vmax.f32 %v434, 0.0
    %v641 = vmax.f32 %v545, 0.0
    %v642 = vmax.f32 %v547, 0.0
    %v643 = vmax.f32 %v210, 0.0
    %v644 = vmax.f32 %v212, 0.0
    %v645 = vmax.f32 %v323, 0.0
    %v646 = vmax.f32 %v325, 0.0
    %v647 = vmax.f32 %v436, 0.0
    %v648 = vmax.f32 %v438, 0.0
    %v649 = vmax.f32 %v549, 0.0
    %v650 = vmax.f32 %v551, 0.0
    %v651 = vmax.f32 %v216, 0.0
    %v652 = vmax.f32 %v218, 0.0
    %v653 = vmax.f32 %v329, 0.0
    %v654 = vmax.f32 %v331, 0.0
    %v655 = vmax.f32 %v442, 0.0
    %v656 = vmax.f32 %v444, 0.0
    %v657 = vmax.f32 %v555, 0.0
    %v658 = vmax.f32 %v557, 0.0
    %v659 = vmax.f32 %v220, 0.0
    %v660 = vmax.f32 %v222, 0.0
    %v661 = vmax.f32 %v333, 0.0
    %v662 = vmax.f32 %v335, 0.0
    %v663 = vmax.f32 %v446, 0.0
    %v664 = vmax.f32 %v448, 0.0
    %v665 = vmax.f32 %v559, 0.0
    %v666 = vmax.f32 %v561, 0.0
    %v667 = vmax.f32 %v226, 0.0
    %v668 = vmax.f32 %v228, 0.0
    %v669 = vmax.f32 %v339, 0.0
    %v670 = vmax.f32 %v341, 0.0
    %v671 = vmax.f32 %v452, 0.0
    %v672 = vmax.f32 %v454, 0.0
    %v673 = vmax.f32 %v565, 0.0
    %v674 = vmax.f32 %v567, 0.0
    %v675 = vmax.f32 %v230, 0.0
    %v676 = vmax.f32 %v232, 0.0
    %v677 = vmax.f32 %v343, 0.0
    %v678 = vmax.f32 %v345, 0.0
    %v679 = vmax.f32 %v456, 0.0
    %v680 = vmax.f32 %v458, 0.0
    %v681 = vmax.f32 %v569, 0.0
    %v682 = vmax.f32 %v571, 0.0
    %v683 = vmax.f32 %v236, 0.0
    %v684 = vmax.f32 %v238, 0.0
    %v685 = vmax.f32 %v349, 0.0
    %v686 = vmax.f32 %v351, 0.0
    %v687 = vmax.f32 %v462, 0.0
    %v688 = vmax.f32 %v464, 0.0
    %v689 = vmax.f32 %v575, 0.0
    %v690 = vmax.f32 %v577, 0.0
    %v691 = vmax.f32 %v240, 0.0
    %v692 = vmax.f32 %v242, 0.0
    %v693 = vmax.f32 %v353, 0.0
    %v694 = vmax.f32 %v355, 0.0
    %v695 = vmax.f32 %v466, 0.0
    %v696 = vmax.f32 %v468, 0.0
    %v697 = vmax.f32 %v579, 0.0
    %v698 = vmax.f32 %v581, 0.0
    %v699 = vmax.f32 %v246, 0.0
    %v700 = vmax.f32 %v248, 0.0
    %v701 = vmax.f32 %v359, 0.0
    %v702 = vmax.f32 %v361, 0.0
    %v703 = vmax.f32 %v472, 0.0
    %v704 = vmax.f32 %v474, 0.0
    %v705 = vmax.f32 %v585, 0.0
    %v706 = vmax.f32 %v587, 0.0
    %v707 = vmax.f32 %v250, 0.0
    %v708 = vmax.f32 %v252, 0.0
    %v709 = vmax.f32 %v363, 0.0
    %v710 = vmax.f32 %v365, 0.0
    %v711 = vmax.f32 %v476, 0.0
    %v712 = vmax.f32 %v478, 0.0
    %v713 = vmax.f32 %v589, 0.0
    %v714 = vmax.f32 %v591, 0.0
    %v715 = vmax.f32 %v256, 0.0
    %v716 = vmax.f32 %v258, 0.0
    %v717 = vmax.f32 %v369, 0.0
    %v718 = vmax.f32 %v371, 0.0
    %v719 = vmax.f32 %v482, 0.0
    %v720 = vmax.f32 %v484, 0.0
    %v721 = vmax.f32 %v595, 0.0
    %v722 = vmax.f32 %v597, 0.0
    %v723 = vmax.f32 %v260, 0.0
    %v724 = vmax.f32 %v262, 0.0
    %v725 = vmax.f32 %v373, 0.0
    %v726 = vmax.f32 %v375, 0.0
    %v727 = vmax.f32 %v486, 0.0
    %v728 = vmax.f32 %v488, 0.0
    %v729 = vmax.f32 %v599, 0.0
    %v730 = vmax.f32 %v601, 0.0
    %v731 = vld [vmem:[%s2] sm:$0xf]
    %v732 = vld [vmem:[%s2 + $0x4] sm:$0xf]
    %v733 = vld [vmem:[%s2 + $0x8] sm:$0xf]
    %v734 = vld [vmem:[%s2 + $0xc] sm:$0xf]
    %v735 = vld [vmem:[%s2 + $0x10] sm:$0xf]
    %v736 = vld [vmem:[%s2 + $0x14] sm:$0xf]
    %v737 = vld [vmem:[%s2 + $0x18] sm:$0xf]
    %v738 = vld [vmem:[%s2 + $0x1c] sm:$0xf]
    %v739 = vld [vmem:[%s2 + $0x20] sm:$0xf]
    %v740 = vld [vmem:[%s2 + $0x24] sm:$0xf]
    %v741 = vld [vmem:[%s2 + $0x28] sm:$0xf]
    %v742 = vld [vmem:[%s2 + $0x2c] sm:$0xf]
    %v743 = vld [vmem:[%s2 + $0x30] sm:$0xf]
    %v744 = vld [vmem:[%s2 + $0x34] sm:$0xf]
    %v745 = vld [vmem:[%s2 + $0x38] sm:$0xf]
    %v746 = vld [vmem:[%s2 + $0x3c] sm:$0xf]
    %v747 = vpack.c.bf16 %v611, %v603
    %v748 = vpack.c.bf16 %v612, %v604
    %v749 = vpack.c.bf16 %v613, %v605
    %v750 = vpack.c.bf16 %v614, %v606
    %v751 = vpack.c.bf16 %v615, %v607
    %v752 = vpack.c.bf16 %v616, %v608
    %v753 = vpack.c.bf16 %v617, %v609
    %v754 = vpack.c.bf16 %v618, %v610
    %v755 = vpack.c.bf16 %v627, %v619
    %v756 = vpack.c.bf16 %v628, %v620
    %v757 = vpack.c.bf16 %v629, %v621
    %v758 = vpack.c.bf16 %v630, %v622
    %v759 = vpack.c.bf16 %v631, %v623
    %v760 = vpack.c.bf16 %v632, %v624
    %v761 = vpack.c.bf16 %v633, %v625
    %v762 = vpack.c.bf16 %v634, %v626
    %v763 = vpack.c.bf16 %v643, %v635
    %v764 = vpack.c.bf16 %v644, %v636
    %v765 = vpack.c.bf16 %v645, %v637
    %v766 = vpack.c.bf16 %v646, %v638
    %v767 = vpack.c.bf16 %v647, %v639
    %v768 = vpack.c.bf16 %v648, %v640
    %v769 = vpack.c.bf16 %v649, %v641
    %v770 = vpack.c.bf16 %v650, %v642
    %v771 = vpack.c.bf16 %v659, %v651
    %v772 = vpack.c.bf16 %v660, %v652
    %v773 = vpack.c.bf16 %v661, %v653
    %v774 = vpack.c.bf16 %v662, %v654
    %v775 = vpack.c.bf16 %v663, %v655
    %v776 = vpack.c.bf16 %v664, %v656
    %v777 = vpack.c.bf16 %v665, %v657
    %v778 = vpack.c.bf16 %v666, %v658
    %v779 = vpack.c.bf16 %v675, %v667
    %v780 = vpack.c.bf16 %v676, %v668
    %v781 = vpack.c.bf16 %v677, %v669
    %v782 = vpack.c.bf16 %v678, %v670
    %v783 = vpack.c.bf16 %v679, %v671
    %v784 = vpack.c.bf16 %v680, %v672
    %v785 = vpack.c.bf16 %v681, %v673
    %v786 = vpack.c.bf16 %v682, %v674
    %v787 = vpack.c.bf16 %v691, %v683
    %v788 = vpack.c.bf16 %v692, %v684
    %v789 = vpack.c.bf16 %v693, %v685
    %v790 = vpack.c.bf16 %v694, %v686
    %v791 = vpack.c.bf16 %v695, %v687
    %v792 = vpack.c.bf16 %v696, %v688
    %v793 = vpack.c.bf16 %v697, %v689
    %v794 = vpack.c.bf16 %v698, %v690
    %v795 = vpack.c.bf16 %v707, %v699
    %v796 = vpack.c.bf16 %v708, %v700
    %v797 = vpack.c.bf16 %v709, %v701
    %v798 = vpack.c.bf16 %v710, %v702
    %v799 = vpack.c.bf16 %v711, %v703
    %v800 = vpack.c.bf16 %v712, %v704
    %v801 = vpack.c.bf16 %v713, %v705
    %v802 = vpack.c.bf16 %v714, %v706
    %v803 = vpack.c.bf16 %v723, %v715
    %v804 = vpack.c.bf16 %v724, %v716
    %v805 = vpack.c.bf16 %v725, %v717
    %v806 = vpack.c.bf16 %v726, %v718
    %v807 = vpack.c.bf16 %v727, %v719
    %v808 = vpack.c.bf16 %v728, %v720
    %v809 = vpack.c.bf16 %v729, %v721
    %v810 = vpack.c.bf16 %v730, %v722
    %v811 = vld [vmem:[%s6] sm:$0xff]
    %v812 = vld [vmem:[%s6 + $0x8] sm:$0xff]
    %v813 = vld [vmem:[%s6 + $0x10] sm:$0xff]
    %v814 = vld [vmem:[%s6 + $0x18] sm:$0xff]
    %v815 = vld [vmem:[%s6 + $0x20] sm:$0xff]
    %v816 = vld [vmem:[%s6 + $0x28] sm:$0xff]
    %v817 = vld [vmem:[%s6 + $0x30] sm:$0xff]
    %v818 = vld [vmem:[%s6 + $0x38] sm:$0xff]
    %v819 = vld [vmem:[%s6 + $0x40] sm:$0xff]
    %v820 = vld [vmem:[%s6 + $0x48] sm:$0xff]
    %v821 = vld [vmem:[%s6 + $0x50] sm:$0xff]
    %v822 = vld [vmem:[%s6 + $0x58] sm:$0xff]
    %v823 = vld [vmem:[%s6 + $0x60] sm:$0xff]
    %v824 = vld [vmem:[%s6 + $0x68] sm:$0xff]
    %v825 = vld [vmem:[%s6 + $0x70] sm:$0xff]
    %v826 = vld [vmem:[%s6 + $0x78] sm:$0xff]
    %828 = vset.pattern.permute.xlu0 0
    %829 = vperm.xlu0 %828, %v811
    %v830 = vpop.permute.xlu0 %829
    %833 = vset.pattern.permute.xlu0 0
    %834 = vperm.xlu0 %833, %v812
    %v835 = vpop.permute.xlu0 %834
    %838 = vset.pattern.permute.xlu0 0
    %839 = vperm.xlu0 %838, %v813
    %v840 = vpop.permute.xlu0 %839
    %843 = vset.pattern.permute.xlu0 0
    %844 = vperm.xlu0 %843, %v814
    %v845 = vpop.permute.xlu0 %844
    %848 = vset.pattern.permute.xlu0 0
    %849 = vperm.xlu0 %848, %v815
    %v850 = vpop.permute.xlu0 %849
    %853 = vset.pattern.permute.xlu0 0
    %854 = vperm.xlu0 %853, %v816
    %v855 = vpop.permute.xlu0 %854
    %858 = vset.pattern.permute.xlu0 0
    %859 = vperm.xlu0 %858, %v817
    %v860 = vpop.permute.xlu0 %859
    %863 = vset.pattern.permute.xlu0 0
    %864 = vperm.xlu0 %863, %v818
    %v865 = vpop.permute.xlu0 %864
    %868 = vset.pattern.permute.xlu0 0
    %869 = vperm.xlu0 %868, %v819
    %v870 = vpop.permute.xlu0 %869
    %873 = vset.pattern.permute.xlu0 0
    %874 = vperm.xlu0 %873, %v820
    %v875 = vpop.permute.xlu0 %874
    %878 = vset.pattern.permute.xlu0 0
    %879 = vperm.xlu0 %878, %v821
    %v880 = vpop.permute.xlu0 %879
    %883 = vset.pattern.permute.xlu0 0
    %884 = vperm.xlu0 %883, %v822
    %v885 = vpop.permute.xlu0 %884
    %888 = vset.pattern.permute.xlu0 0
    %889 = vperm.xlu0 %888, %v823
    %v890 = vpop.permute.xlu0 %889
    %893 = vset.pattern.permute.xlu0 0
    %894 = vperm.xlu0 %893, %v824
    %v895 = vpop.permute.xlu0 %894
    %898 = vset.pattern.permute.xlu0 0
    %899 = vperm.xlu0 %898, %v825
    %v900 = vpop.permute.xlu0 %899
    %903 = vset.pattern.permute.xlu0 0
    %904 = vperm.xlu0 %903, %v826
    %v905 = vpop.permute.xlu0 %904
    %v923 = vunpack.c.l.b16 %v731
    %v924 = vunpack.c.l.b16 %v732
    %v925 = vunpack.c.l.b16 %v733
    %v926 = vunpack.c.l.b16 %v734
    %v927 = vunpack.c.l.b16 %v735
    %v928 = vunpack.c.l.b16 %v736
    %v929 = vunpack.c.l.b16 %v737
    %v930 = vunpack.c.l.b16 %v738
    %v931 = vunpack.c.l.b16 %v739
    %v932 = vunpack.c.l.b16 %v740
    %v933 = vunpack.c.l.b16 %v741
    %v934 = vunpack.c.l.b16 %v742
    %v935 = vunpack.c.l.b16 %v743
    %v936 = vunpack.c.l.b16 %v744
    %v937 = vunpack.c.l.b16 %v745
    %v938 = vunpack.c.l.b16 %v746
    %v939 = vpack.c.b16 %v924, %v923
    %v940 = vpack.c.b16 %v926, %v925
    %v941 = vpack.c.b16 %v928, %v927
    %v942 = vpack.c.b16 %v930, %v929
    %v943 = vpack.c.b16 %v932, %v931
    %v944 = vpack.c.b16 %v934, %v933
    %v945 = vpack.c.b16 %v936, %v935
    %v946 = vpack.c.b16 %v938, %v937
    %955 = vmatprep.subr.bf16.mxu0 %v748
    %956 = vmatpush1.bf16.msra.mxu0 %v747
    %957 = vmatprep.subr.bf16.mxu0 %v756
    %958 = vmatpush1.bf16.msra.mxu0 %v755
    %959 = vmatprep.subr.bf16.mxu0 %v764
    %960 = vmatpush1.bf16.msra.mxu0 %v763
    %961 = vmatprep.subr.bf16.mxu0 %v772
    %962 = vmatpush1.bf16.msra.mxu0 %v771
    %963 = vmatprep.subr.bf16.mxu0 %v780
    %964 = vmatpush1.bf16.msra.mxu0 %v779
    %965 = vmatprep.subr.bf16.mxu0 %v788
    %966 = vmatpush1.bf16.msra.mxu0 %v787
    %967 = vmatprep.subr.bf16.mxu0 %v796
    %968 = vmatpush1.bf16.msra.mxu0 %v795
    %969 = vmatprep.subr.bf16.mxu0 %v804
    %970 = vmatpush1.bf16.msra.mxu0 %v803
    %971 = vmatprep.subr.bf16.mxu0 0
    %972 = vmatpush1.bf16.msra.mxu0 0
    %973 = vmatprep.subr.bf16.mxu0 0
    %974 = vmatpush1.bf16.msra.mxu0 0
    %975 = vmatprep.subr.bf16.mxu0 0
    %976 = vmatpush1.bf16.msra.mxu0 0
    %977 = vmatprep.subr.bf16.mxu0 0
    %978 = vmatpush1.bf16.msra.mxu0 0
    %979 = vmatprep.subr.bf16.mxu0 0
    %980 = vmatpush1.bf16.msra.mxu0 0
    %981 = vmatprep.subr.bf16.mxu0 0
    %982 = vmatpush1.bf16.msra.mxu0 0
    %983 = vmatprep.subr.bf16.mxu0 0
    %984 = vmatpush1.bf16.msra.mxu0 0
    %985 = vmatprep.subr.bf16.mxu0 0
    %986 = vmatpush1.bf16.msra.mxu0 0
    %987 = vmatprep.mubr.bf16.mxu0 0
    %988 = vmatmul.mubr.bf16.gmra.mrb[0].mxu0 %v939
    %v989 = vpop.f32.mrb[0].mxu0
    %v990 = vadd.f32 %v830, %v989
    %v991 = vpop.f32.mrb[0].mxu0
    %v992 = vadd.f32 %v830, %v991
    %v993 = vpop.f32.mrb[0].mxu0
    %v994 = vadd.f32 %v835, %v993
    %v995 = vpop.f32.mrb[0].mxu0
    %v996 = vadd.f32 %v835, %v995
    %997 = vmatprep.mubr.bf16.mxu0 0
    %998 = vmatmul.mubr.bf16.gmra.mrb[0].mxu0 %v940
    %v999 = vpop.f32.mrb[0].mxu0
    %v1000 = vadd.f32 %v840, %v999
    %v1001 = vpop.f32.mrb[0].mxu0
    %v1002 = vadd.f32 %v840, %v1001
    %v1003 = vpop.f32.mrb[0].mxu0
    %v1004 = vadd.f32 %v845, %v1003
    %v1005 = vpop.f32.mrb[0].mxu0
    %v1006 = vadd.f32 %v845, %v1005
    %1007 = vmatprep.mubr.bf16.mxu0 0
    %1008 = vmatmul.mubr.bf16.gmra.mrb[0].mxu0 %v941
    %v1009 = vpop.f32.mrb[0].mxu0
    %v1010 = vadd.f32 %v850, %v1009
    %v1011 = vpop.f32.mrb[0].mxu0
    %v1012 = vadd.f32 %v850, %v1011
    %v1013 = vpop.f32.mrb[0].mxu0
    %v1014 = vadd.f32 %v855, %v1013
    %v1015 = vpop.f32.mrb[0].mxu0
    %v1016 = vadd.f32 %v855, %v1015
    %1017 = vmatprep.mubr.bf16.mxu0 0
    %1018 = vmatmul.mubr.bf16.gmra.mrb[0].mxu0 %v942
    %v1019 = vpop.f32.mrb[0].mxu0
    %v1020 = vadd.f32 %v860, %v1019
    %v1021 = vpop.f32.mrb[0].mxu0
    %v1022 = vadd.f32 %v860, %v1021
    %v1023 = vpop.f32.mrb[0].mxu0
    %v1024 = vadd.f32 %v865, %v1023
    %v1025 = vpop.f32.mrb[0].mxu0
    %v1026 = vadd.f32 %v865, %v1025
    %1027 = vmatprep.mubr.bf16.mxu0 0
    %1028 = vmatmul.mubr.bf16.gmra.mrb[0].mxu0 %v943
    %v1029 = vpop.f32.mrb[0].mxu0
    %v1030 = vadd.f32 %v870, %v1029
    %v1031 = vpop.f32.mrb[0].mxu0
    %v1032 = vadd.f32 %v870, %v1031
    %v1033 = vpop.f32.mrb[0].mxu0
    %v1034 = vadd.f32 %v875, %v1033
    %v1035 = vpop.f32.mrb[0].mxu0
    %v1036 = vadd.f32 %v875, %v1035
    %1037 = vmatprep.mubr.bf16.mxu0 0
    %1038 = vmatmul.mubr.bf16.gmra.mrb[0].mxu0 %v944
    %v1039 = vpop.f32.mrb[0].mxu0
    %v1040 = vadd.f32 %v880, %v1039
    %v1041 = vpop.f32.mrb[0].mxu0
    %v1042 = vadd.f32 %v880, %v1041
    %v1043 = vpop.f32.mrb[0].mxu0
    %v1044 = vadd.f32 %v885, %v1043
    %v1045 = vpop.f32.mrb[0].mxu0
    %v1046 = vadd.f32 %v885, %v1045
    %1047 = vmatprep.mubr.bf16.mxu0 0
    %1048 = vmatmul.mubr.bf16.gmra.mrb[0].mxu0 %v945
    %v1049 = vpop.f32.mrb[0].mxu0
    %v1050 = vadd.f32 %v890, %v1049
    %v1051 = vpop.f32.mrb[0].mxu0
    %v1052 = vadd.f32 %v890, %v1051
    %v1053 = vpop.f32.mrb[0].mxu0
    %v1054 = vadd.f32 %v895, %v1053
    %v1055 = vpop.f32.mrb[0].mxu0
    %v1056 = vadd.f32 %v895, %v1055
    %1057 = vmatprep.mubr.bf16.mxu0 0
    %1058 = vmatmul.mubr.bf16.gmra.mrb[0].mxu0 %v946
    %v1059 = vpop.f32.mrb[0].mxu0
    %v1060 = vadd.f32 %v900, %v1059
    %v1061 = vpop.f32.mrb[0].mxu0
    %v1062 = vadd.f32 %v900, %v1061
    %v1063 = vpop.f32.mrb[0].mxu0
    %v1064 = vadd.f32 %v905, %v1063
    %v1065 = vpop.f32.mrb[0].mxu0
    %v1066 = vadd.f32 %v905, %v1065
    %1067 = vdwg.mxu0
    %1068 = vmatprep.subr.bf16.mxu0 %v750
    %1069 = vmatpush1.bf16.msra.mxu0 %v749
    %1070 = vmatprep.subr.bf16.mxu0 %v758
    %1071 = vmatpush1.bf16.msra.mxu0 %v757
    %1072 = vmatprep.subr.bf16.mxu0 %v766
    %1073 = vmatpush1.bf16.msra.mxu0 %v765
    %1074 = vmatprep.subr.bf16.mxu0 %v774
    %1075 = vmatpush1.bf16.msra.mxu0 %v773
    %1076 = vmatprep.subr.bf16.mxu0 %v782
    %1077 = vmatpush1.bf16.msra.mxu0 %v781
    %1078 = vmatprep.subr.bf16.mxu0 %v790
    %1079 = vmatpush1.bf16.msra.mxu0 %v789
    %1080 = vmatprep.subr.bf16.mxu0 %v798
    %1081 = vmatpush1.bf16.msra.mxu0 %v797
    %1082 = vmatprep.subr.bf16.mxu0 %v806
    %1083 = vmatpush1.bf16.msra.mxu0 %v805
    %1084 = vmatprep.subr.bf16.mxu0 0
    %1085 = vmatpush1.bf16.msra.mxu0 0
    %1086 = vmatprep.subr.bf16.mxu0 0
    %1087 = vmatpush1.bf16.msra.mxu0 0
    %1088 = vmatprep.subr.bf16.mxu0 0
    %1089 = vmatpush1.bf16.msra.mxu0 0
    %1090 = vmatprep.subr.bf16.mxu0 0
    %1091 = vmatpush1.bf16.msra.mxu0 0
    %1092 = vmatprep.subr.bf16.mxu0 0
    %1093 = vmatpush1.bf16.msra.mxu0 0
    %1094 = vmatprep.subr.bf16.mxu0 0
    %1095 = vmatpush1.bf16.msra.mxu0 0
    %1096 = vmatprep.subr.bf16.mxu0 0
    %1097 = vmatpush1.bf16.msra.mxu0 0
    %1098 = vmatprep.subr.bf16.mxu0 0
    %1099 = vmatpush1.bf16.msra.mxu0 0
    %1100 = vmatprep.mubr.bf16.mxu0 0
    %1101 = vmatmul.mubr.bf16.gmra.mrb[0].mxu0 %v939
    %v1102 = vpop.f32.mrb[0].mxu0
    %v1103 = vadd.f32 %v830, %v1102
    %v1104 = vpop.f32.mrb[0].mxu0
    %v1105 = vadd.f32 %v830, %v1104
    %v1106 = vpop.f32.mrb[0].mxu0
    %v1107 = vadd.f32 %v835, %v1106
    %v1108 = vpop.f32.mrb[0].mxu0
    %v1109 = vadd.f32 %v835, %v1108
    %1110 = vmatprep.mubr.bf16.mxu0 0
    %1111 = vmatmul.mubr.bf16.gmra.mrb[0].mxu0 %v940
    %v1112 = vpop.f32.mrb[0].mxu0
    %v1113 = vadd.f32 %v840, %v1112
    %v1114 = vpop.f32.mrb[0].mxu0
    %v1115 = vadd.f32 %v840, %v1114
    %v1116 = vpop.f32.mrb[0].mxu0
    %v1117 = vadd.f32 %v845, %v1116
    %v1118 = vpop.f32.mrb[0].mxu0
    %v1119 = vadd.f32 %v845, %v1118
    %1120 = vmatprep.mubr.bf16.mxu0 0
    %1121 = vmatmul.mubr.bf16.gmra.mrb[0].mxu0 %v941
    %v1122 = vpop.f32.mrb[0].mxu0
    %v1123 = vadd.f32 %v850, %v1122
    %v1124 = vpop.f32.mrb[0].mxu0
    %v1125 = vadd.f32 %v850, %v1124
    %v1126 = vpop.f32.mrb[0].mxu0
    %v1127 = vadd.f32 %v855, %v1126
    %v1128 = vpop.f32.mrb[0].mxu0
    %v1129 = vadd.f32 %v855, %v1128
    %1130 = vmatprep.mubr.bf16.mxu0 0
    %1131 = vmatmul.mubr.bf16.gmra.mrb[0].mxu0 %v942
    %v1132 = vpop.f32.mrb[0].mxu0
    %v1133 = vadd.f32 %v860, %v1132
    %v1134 = vpop.f32.mrb[0].mxu0
    %v1135 = vadd.f32 %v860, %v1134
    %v1136 = vpop.f32.mrb[0].mxu0
    %v1137 = vadd.f32 %v865, %v1136
    %v1138 = vpop.f32.mrb[0].mxu0
    %v1139 = vadd.f32 %v865, %v1138
    %1140 = vmatprep.mubr.bf16.mxu0 0
    %1141 = vmatmul.mubr.bf16.gmra.mrb[0].mxu0 %v943
    %v1142 = vpop.f32.mrb[0].mxu0
    %v1143 = vadd.f32 %v870, %v1142
    %v1144 = vpop.f32.mrb[0].mxu0
    %v1145 = vadd.f32 %v870, %v1144
    %v1146 = vpop.f32.mrb[0].mxu0
    %v1147 = vadd.f32 %v875, %v1146
    %v1148 = vpop.f32.mrb[0].mxu0
    %v1149 = vadd.f32 %v875, %v1148
    %1150 = vmatprep.mubr.bf16.mxu0 0
    %1151 = vmatmul.mubr.bf16.gmra.mrb[0].mxu0 %v944
    %v1152 = vpop.f32.mrb[0].mxu0
    %v1153 = vadd.f32 %v880, %v1152
    %v1154 = vpop.f32.mrb[0].mxu0
    %v1155 = vadd.f32 %v880, %v1154
    %v1156 = vpop.f32.mrb[0].mxu0
    %v1157 = vadd.f32 %v885, %v1156
    %v1158 = vpop.f32.mrb[0].mxu0
    %v1159 = vadd.f32 %v885, %v1158
    %1160 = vmatprep.mubr.bf16.mxu0 0
    %1161 = vmatmul.mubr.bf16.gmra.mrb[0].mxu0 %v945
    %v1162 = vpop.f32.mrb[0].mxu0
    %v1163 = vadd.f32 %v890, %v1162
    %v1164 = vpop.f32.mrb[0].mxu0
    %v1165 = vadd.f32 %v890, %v1164
    %v1166 = vpop.f32.mrb[0].mxu0
    %v1167 = vadd.f32 %v895, %v1166
    %v1168 = vpop.f32.mrb[0].mxu0
    %v1169 = vadd.f32 %v895, %v1168
    %1170 = vmatprep.mubr.bf16.mxu0 0
    %1171 = vmatmul.mubr.bf16.gmra.mrb[0].mxu0 %v946
    %v1172 = vpop.f32.mrb[0].mxu0
    %v1173 = vadd.f32 %v900, %v1172
    %v1174 = vpop.f32.mrb[0].mxu0
    %v1175 = vadd.f32 %v900, %v1174
    %v1176 = vpop.f32.mrb[0].mxu0
    %v1177 = vadd.f32 %v905, %v1176
    %v1178 = vpop.f32.mrb[0].mxu0
    %v1179 = vadd.f32 %v905, %v1178
    %1180 = vdwg.mxu0
    %1181 = vmatprep.subr.bf16.mxu0 %v752
    %1182 = vmatpush1.bf16.msra.mxu0 %v751
    %1183 = vmatprep.subr.bf16.mxu0 %v760
    %1184 = vmatpush1.bf16.msra.mxu0 %v759
    %1185 = vmatprep.subr.bf16.mxu0 %v768
    %1186 = vmatpush1.bf16.msra.mxu0 %v767
    %1187 = vmatprep.subr.bf16.mxu0 %v776
    %1188 = vmatpush1.bf16.msra.mxu0 %v775
    %1189 = vmatprep.subr.bf16.mxu0 %v784
    %1190 = vmatpush1.bf16.msra.mxu0 %v783
    %1191 = vmatprep.subr.bf16.mxu0 %v792
    %1192 = vmatpush1.bf16.msra.mxu0 %v791
    %1193 = vmatprep.subr.bf16.mxu0 %v800
    %1194 = vmatpush1.bf16.msra.mxu0 %v799
    %1195 = vmatprep.subr.bf16.mxu0 %v808
    %1196 = vmatpush1.bf16.msra.mxu0 %v807
    %1197 = vmatprep.subr.bf16.mxu0 0
    %1198 = vmatpush1.bf16.msra.mxu0 0
    %1199 = vmatprep.subr.bf16.mxu0 0
    %1200 = vmatpush1.bf16.msra.mxu0 0
    %1201 = vmatprep.subr.bf16.mxu0 0
    %1202 = vmatpush1.bf16.msra.mxu0 0
    %1203 = vmatprep.subr.bf16.mxu0 0
    %1204 = vmatpush1.bf16.msra.mxu0 0
    %1205 = vmatprep.subr.bf16.mxu0 0
    %1206 = vmatpush1.bf16.msra.mxu0 0
    %1207 = vmatprep.subr.bf16.mxu0 0
    %1208 = vmatpush1.bf16.msra.mxu0 0
    %1209 = vmatprep.subr.bf16.mxu0 0
    %1210 = vmatpush1.bf16.msra.mxu0 0
    %1211 = vmatprep.subr.bf16.mxu0 0
    %1212 = vmatpush1.bf16.msra.mxu0 0
    %1213 = vmatprep.mubr.bf16.mxu0 0
    %1214 = vmatmul.mubr.bf16.gmra.mrb[0].mxu0 %v939
    %v1215 = vpop.f32.mrb[0].mxu0
    %v1216 = vadd.f32 %v830, %v1215
    %v1217 = vpop.f32.mrb[0].mxu0
    %v1218 = vadd.f32 %v830, %v1217
    %v1219 = vpop.f32.mrb[0].mxu0
    %v1220 = vadd.f32 %v835, %v1219
    %v1221 = vpop.f32.mrb[0].mxu0
    %v1222 = vadd.f32 %v835, %v1221
    %1223 = vmatprep.mubr.bf16.mxu0 0
    %1224 = vmatmul.mubr.bf16.gmra.mrb[0].mxu0 %v940
    %v1225 = vpop.f32.mrb[0].mxu0
    %v1226 = vadd.f32 %v840, %v1225
    %v1227 = vpop.f32.mrb[0].mxu0
    %v1228 = vadd.f32 %v840, %v1227
    %v1229 = vpop.f32.mrb[0].mxu0
    %v1230 = vadd.f32 %v845, %v1229
    %v1231 = vpop.f32.mrb[0].mxu0
    %v1232 = vadd.f32 %v845, %v1231
    %1233 = vmatprep.mubr.bf16.mxu0 0
    %1234 = vmatmul.mubr.bf16.gmra.mrb[0].mxu0 %v941
    %v1235 = vpop.f32.mrb[0].mxu0
    %v1236 = vadd.f32 %v850, %v1235
    %v1237 = vpop.f32.mrb[0].mxu0
    %v1238 = vadd.f32 %v850, %v1237
    %v1239 = vpop.f32.mrb[0].mxu0
    %v1240 = vadd.f32 %v855, %v1239
    %v1241 = vpop.f32.mrb[0].mxu0
    %v1242 = vadd.f32 %v855, %v1241
    %1243 = vmatprep.mubr.bf16.mxu0 0
    %1244 = vmatmul.mubr.bf16.gmra.mrb[0].mxu0 %v942
    %v1245 = vpop.f32.mrb[0].mxu0
    %v1246 = vadd.f32 %v860, %v1245
    %v1247 = vpop.f32.mrb[0].mxu0
    %v1248 = vadd.f32 %v860, %v1247
    %v1249 = vpop.f32.mrb[0].mxu0
    %v1250 = vadd.f32 %v865, %v1249
    %v1251 = vpop.f32.mrb[0].mxu0
    %v1252 = vadd.f32 %v865, %v1251
    %1253 = vmatprep.mubr.bf16.mxu0 0
    %1254 = vmatmul.mubr.bf16.gmra.mrb[0].mxu0 %v943
    %v1255 = vpop.f32.mrb[0].mxu0
    %v1256 = vadd.f32 %v870, %v1255
    %v1257 = vpop.f32.mrb[0].mxu0
    %v1258 = vadd.f32 %v870, %v1257
    %v1259 = vpop.f32.mrb[0].mxu0
    %v1260 = vadd.f32 %v875, %v1259
    %v1261 = vpop.f32.mrb[0].mxu0
    %v1262 = vadd.f32 %v875, %v1261
    %1263 = vmatprep.mubr.bf16.mxu0 0
    %1264 = vmatmul.mubr.bf16.gmra.mrb[0].mxu0 %v944
    %v1265 = vpop.f32.mrb[0].mxu0
    %v1266 = vadd.f32 %v880, %v1265
    %v1267 = vpop.f32.mrb[0].mxu0
    %v1268 = vadd.f32 %v880, %v1267
    %v1269 = vpop.f32.mrb[0].mxu0
    %v1270 = vadd.f32 %v885, %v1269
    %v1271 = vpop.f32.mrb[0].mxu0
    %v1272 = vadd.f32 %v885, %v1271
    %1273 = vmatprep.mubr.bf16.mxu0 0
    %1274 = vmatmul.mubr.bf16.gmra.mrb[0].mxu0 %v945
    %v1275 = vpop.f32.mrb[0].mxu0
    %v1276 = vadd.f32 %v890, %v1275
    %v1277 = vpop.f32.mrb[0].mxu0
    %v1278 = vadd.f32 %v890, %v1277
    %v1279 = vpop.f32.mrb[0].mxu0
    %v1280 = vadd.f32 %v895, %v1279
    %v1281 = vpop.f32.mrb[0].mxu0
    %v1282 = vadd.f32 %v895, %v1281
    %1283 = vmatprep.mubr.bf16.mxu0 0
    %1284 = vmatmul.mubr.bf16.gmra.mrb[0].mxu0 %v946
    %v1285 = vpop.f32.mrb[0].mxu0
    %v1286 = vadd.f32 %v900, %v1285
    %v1287 = vpop.f32.mrb[0].mxu0
    %v1288 = vadd.f32 %v900, %v1287
    %v1289 = vpop.f32.mrb[0].mxu0
    %v1290 = vadd.f32 %v905, %v1289
    %v1291 = vpop.f32.mrb[0].mxu0
    %v1292 = vadd.f32 %v905, %v1291
    %1293 = vdwg.mxu0
    %1294 = vmatprep.subr.bf16.mxu0 %v754
    %1295 = vmatpush1.bf16.msra.mxu0 %v753
    %1296 = vmatprep.subr.bf16.mxu0 %v762
    %1297 = vmatpush1.bf16.msra.mxu0 %v761
    %1298 = vmatprep.subr.bf16.mxu0 %v770
    %1299 = vmatpush1.bf16.msra.mxu0 %v769
    %1300 = vmatprep.subr.bf16.mxu0 %v778
    %1301 = vmatpush1.bf16.msra.mxu0 %v777
    %1302 = vmatprep.subr.bf16.mxu0 %v786
    %1303 = vmatpush1.bf16.msra.mxu0 %v785
    %1304 = vmatprep.subr.bf16.mxu0 %v794
    %1305 = vmatpush1.bf16.msra.mxu0 %v793
    %1306 = vmatprep.subr.bf16.mxu0 %v802
    %1307 = vmatpush1.bf16.msra.mxu0 %v801
    %1308 = vmatprep.subr.bf16.mxu0 %v810
    %1309 = vmatpush1.bf16.msra.mxu0 %v809
    %1310 = vmatprep.subr.bf16.mxu0 0
    %1311 = vmatpush1.bf16.msra.mxu0 0
    %1312 = vmatprep.subr.bf16.mxu0 0
    %1313 = vmatpush1.bf16.msra.mxu0 0
    %1314 = vmatprep.subr.bf16.mxu0 0
    %1315 = vmatpush1.bf16.msra.mxu0 0
    %1316 = vmatprep.subr.bf16.mxu0 0
    %1317 = vmatpush1.bf16.msra.mxu0 0
    %1318 = vmatprep.subr.bf16.mxu0 0
    %1319 = vmatpush1.bf16.msra.mxu0 0
    %1320 = vmatprep.subr.bf16.mxu0 0
    %1321 = vmatpush1.bf16.msra.mxu0 0
    %1322 = vmatprep.subr.bf16.mxu0 0
    %1323 = vmatpush1.bf16.msra.mxu0 0
    %1324 = vmatprep.subr.bf16.mxu0 0
    %1325 = vmatpush1.bf16.msra.mxu0 0
    %1326 = vmatprep.mubr.bf16.mxu0 0
    %1327 = vmatmul.mubr.bf16.gmra.mrb[0].mxu0 %v939
    %v1328 = vpop.f32.mrb[0].mxu0
    %v1329 = vadd.f32 %v830, %v1328
    %v1330 = vpop.f32.mrb[0].mxu0
    %v1331 = vadd.f32 %v830, %v1330
    %v1332 = vpop.f32.mrb[0].mxu0
    %v1333 = vadd.f32 %v835, %v1332
    %v1334 = vpop.f32.mrb[0].mxu0
    %v1335 = vadd.f32 %v835, %v1334
    %1336 = vmatprep.mubr.bf16.mxu0 0
    %1337 = vmatmul.mubr.bf16.gmra.mrb[0].mxu0 %v940
    %v1338 = vpop.f32.mrb[0].mxu0
    %v1339 = vadd.f32 %v840, %v1338
    %v1340 = vpop.f32.mrb[0].mxu0
    %v1341 = vadd.f32 %v840, %v1340
    %v1342 = vpop.f32.mrb[0].mxu0
    %v1343 = vadd.f32 %v845, %v1342
    %v1344 = vpop.f32.mrb[0].mxu0
    %v1345 = vadd.f32 %v845, %v1344
    %1346 = vmatprep.mubr.bf16.mxu0 0
    %1347 = vmatmul.mubr.bf16.gmra.mrb[0].mxu0 %v941
    %v1348 = vpop.f32.mrb[0].mxu0
    %v1349 = vadd.f32 %v850, %v1348
    %v1350 = vpop.f32.mrb[0].mxu0
    %v1351 = vadd.f32 %v850, %v1350
    %v1352 = vpop.f32.mrb[0].mxu0
    %v1353 = vadd.f32 %v855, %v1352
    %v1354 = vpop.f32.mrb[0].mxu0
    %v1355 = vadd.f32 %v855, %v1354
    %1356 = vmatprep.mubr.bf16.mxu0 0
    %1357 = vmatmul.mubr.bf16.gmra.mrb[0].mxu0 %v942
    %v1358 = vpop.f32.mrb[0].mxu0
    %v1359 = vadd.f32 %v860, %v1358
    %v1360 = vpop.f32.mrb[0].mxu0
    %v1361 = vadd.f32 %v860, %v1360
    %v1362 = vpop.f32.mrb[0].mxu0
    %v1363 = vadd.f32 %v865, %v1362
    %v1364 = vpop.f32.mrb[0].mxu0
    %v1365 = vadd.f32 %v865, %v1364
    %1366 = vmatprep.mubr.bf16.mxu0 0
    %1367 = vmatmul.mubr.bf16.gmra.mrb[0].mxu0 %v943
    %v1368 = vpop.f32.mrb[0].mxu0
    %v1369 = vadd.f32 %v870, %v1368
    %v1370 = vpop.f32.mrb[0].mxu0
    %v1371 = vadd.f32 %v870, %v1370
    %v1372 = vpop.f32.mrb[0].mxu0
    %v1373 = vadd.f32 %v875, %v1372
    %v1374 = vpop.f32.mrb[0].mxu0
    %v1375 = vadd.f32 %v875, %v1374
    %1376 = vmatprep.mubr.bf16.mxu0 0
    %1377 = vmatmul.mubr.bf16.gmra.mrb[0].mxu0 %v944
    %v1378 = vpop.f32.mrb[0].mxu0
    %v1379 = vadd.f32 %v880, %v1378
    %v1380 = vpop.f32.mrb[0].mxu0
    %v1381 = vadd.f32 %v880, %v1380
    %v1382 = vpop.f32.mrb[0].mxu0
    %v1383 = vadd.f32 %v885, %v1382
    %v1384 = vpop.f32.mrb[0].mxu0
    %v1385 = vadd.f32 %v885, %v1384
    %1386 = vmatprep.mubr.bf16.mxu0 0
    %1387 = vmatmul.mubr.bf16.gmra.mrb[0].mxu0 %v945
    %v1388 = vpop.f32.mrb[0].mxu0
    %v1389 = vadd.f32 %v890, %v1388
    %v1390 = vpop.f32.mrb[0].mxu0
    %v1391 = vadd.f32 %v890, %v1390
    %v1392 = vpop.f32.mrb[0].mxu0
    %v1393 = vadd.f32 %v895, %v1392
    %v1394 = vpop.f32.mrb[0].mxu0
    %v1395 = vadd.f32 %v895, %v1394
    %1396 = vmatprep.mubr.bf16.mxu0 0
    %1397 = vmatmul.mubr.bf16.gmra.mrb[0].mxu0 %v946
    %v1398 = vpop.f32.mrb[0].mxu0
    %v1399 = vadd.f32 %v900, %v1398
    %v1400 = vpop.f32.mrb[0].mxu0
    %v1401 = vadd.f32 %v900, %v1400
    %v1402 = vpop.f32.mrb[0].mxu0
    %v1403 = vadd.f32 %v905, %v1402
    %v1404 = vpop.f32.mrb[0].mxu0
    %v1405 = vadd.f32 %v905, %v1404
    %1406 = vdwg.mxu0
    %v1407 = vmax.f32 %v990, 0.0
    %v1408 = vmax.f32 %v992, 0.0
    %v1409 = vmax.f32 %v1103, 0.0
    %v1410 = vmax.f32 %v1105, 0.0
    %v1411 = vmax.f32 %v1216, 0.0
    %v1412 = vmax.f32 %v1218, 0.0
    %v1413 = vmax.f32 %v1329, 0.0
    %v1414 = vmax.f32 %v1331, 0.0
    %v1415 = vmax.f32 %v994, 0.0
    %v1416 = vmax.f32 %v996, 0.0
    %v1417 = vmax.f32 %v1107, 0.0
    %v1418 = vmax.f32 %v1109, 0.0
    %v1419 = vmax.f32 %v1220, 0.0
    %v1420 = vmax.f32 %v1222, 0.0
    %v1421 = vmax.f32 %v1333, 0.0
    %v1422 = vmax.f32 %v1335, 0.0
    %v1423 = vmax.f32 %v1000, 0.0
    %v1424 = vmax.f32 %v1002, 0.0
    %v1425 = vmax.f32 %v1113, 0.0
    %v1426 = vmax.f32 %v1115, 0.0
    %v1427 = vmax.f32 %v1226, 0.0
    %v1428 = vmax.f32 %v1228, 0.0
    %v1429 = vmax.f32 %v1339, 0.0
    %v1430 = vmax.f32 %v1341, 0.0
    %v1431 = vmax.f32 %v1004, 0.0
    %v1432 = vmax.f32 %v1006, 0.0
    %v1433 = vmax.f32 %v1117, 0.0
    %v1434 = vmax.f32 %v1119, 0.0
    %v1435 = vmax.f32 %v1230, 0.0
    %v1436 = vmax.f32 %v1232, 0.0
    %v1437 = vmax.f32 %v1343, 0.0
    %v1438 = vmax.f32 %v1345, 0.0
    %v1439 = vmax.f32 %v1010, 0.0
    %v1440 = vmax.f32 %v1012, 0.0
    %v1441 = vmax.f32 %v1123, 0.0
    %v1442 = vmax.f32 %v1125, 0.0
    %v1443 = vmax.f32 %v1236, 0.0
    %v1444 = vmax.f32 %v1238, 0.0
    %v1445 = vmax.f32 %v1349, 0.0
    %v1446 = vmax.f32 %v1351, 0.0
    %v1447 = vmax.f32 %v1014, 0.0
    %v1448 = vmax.f32 %v1016, 0.0
    %v1449 = vmax.f32 %v1127, 0.0
    %v1450 = vmax.f32 %v1129, 0.0
    %v1451 = vmax.f32 %v1240, 0.0
    %v1452 = vmax.f32 %v1242, 0.0
    %v1453 = vmax.f32 %v1353, 0.0
    %v1454 = vmax.f32 %v1355, 0.0
    %v1455 = vmax.f32 %v1020, 0.0
    %v1456 = vmax.f32 %v1022, 0.0
    %v1457 = vmax.f32 %v1133, 0.0
    %v1458 = vmax.f32 %v1135, 0.0
    %v1459 = vmax.f32 %v1246, 0.0
    %v1460 = vmax.f32 %v1248, 0.0
    %v1461 = vmax.f32 %v1359, 0.0
    %v1462 = vmax.f32 %v1361, 0.0
    %v1463 = vmax.f32 %v1024, 0.0
    %v1464 = vmax.f32 %v1026, 0.0
    %v1465 = vmax.f32 %v1137, 0.0
    %v1466 = vmax.f32 %v1139, 0.0
    %v1467 = vmax.f32 %v1250, 0.0
    %v1468 = vmax.f32 %v1252, 0.0
    %v1469 = vmax.f32 %v1363, 0.0
    %v1470 = vmax.f32 %v1365, 0.0
    %v1471 = vmax.f32 %v1030, 0.0
    %v1472 = vmax.f32 %v1032, 0.0
    %v1473 = vmax.f32 %v1143, 0.0
    %v1474 = vmax.f32 %v1145, 0.0
    %v1475 = vmax.f32 %v1256, 0.0
    %v1476 = vmax.f32 %v1258, 0.0
    %v1477 = vmax.f32 %v1369, 0.0
    %v1478 = vmax.f32 %v1371, 0.0
    %v1479 = vmax.f32 %v1034, 0.0
    %v1480 = vmax.f32 %v1036, 0.0
    %v1481 = vmax.f32 %v1147, 0.0
    %v1482 = vmax.f32 %v1149, 0.0
    %v1483 = vmax.f32 %v1260, 0.0
    %v1484 = vmax.f32 %v1262, 0.0
    %v1485 = vmax.f32 %v1373, 0.0
    %v1486 = vmax.f32 %v1375, 0.0
    %v1487 = vmax.f32 %v1040, 0.0
    %v1488 = vmax.f32 %v1042, 0.0
    %v1489 = vmax.f32 %v1153, 0.0
    %v1490 = vmax.f32 %v1155, 0.0
    %v1491 = vmax.f32 %v1266, 0.0
    %v1492 = vmax.f32 %v1268, 0.0
    %v1493 = vmax.f32 %v1379, 0.0
    %v1494 = vmax.f32 %v1381, 0.0
    %v1495 = vmax.f32 %v1044, 0.0
    %v1496 = vmax.f32 %v1046, 0.0
    %v1497 = vmax.f32 %v1157, 0.0
    %v1498 = vmax.f32 %v1159, 0.0
    %v1499 = vmax.f32 %v1270, 0.0
    %v1500 = vmax.f32 %v1272, 0.0
    %v1501 = vmax.f32 %v1383, 0.0
    %v1502 = vmax.f32 %v1385, 0.0
    %v1503 = vmax.f32 %v1050, 0.0
    %v1504 = vmax.f32 %v1052, 0.0
    %v1505 = vmax.f32 %v1163, 0.0
    %v1506 = vmax.f32 %v1165, 0.0
    %v1507 = vmax.f32 %v1276, 0.0
    %v1508 = vmax.f32 %v1278, 0.0
    %v1509 = vmax.f32 %v1389, 0.0
    %v1510 = vmax.f32 %v1391, 0.0
    %v1511 = vmax.f32 %v1054, 0.0
    %v1512 = vmax.f32 %v1056, 0.0
    %v1513 = vmax.f32 %v1167, 0.0
    %v1514 = vmax.f32 %v1169, 0.0
    %v1515 = vmax.f32 %v1280, 0.0
    %v1516 = vmax.f32 %v1282, 0.0
    %v1517 = vmax.f32 %v1393, 0.0
    %v1518 = vmax.f32 %v1395, 0.0
    %v1519 = vmax.f32 %v1060, 0.0
    %v1520 = vmax.f32 %v1062, 0.0
    %v1521 = vmax.f32 %v1173, 0.0
    %v1522 = vmax.f32 %v1175, 0.0
    %v1523 = vmax.f32 %v1286, 0.0
    %v1524 = vmax.f32 %v1288, 0.0
    %v1525 = vmax.f32 %v1399, 0.0
    %v1526 = vmax.f32 %v1401, 0.0
    %v1527 = vmax.f32 %v1064, 0.0
    %v1528 = vmax.f32 %v1066, 0.0
    %v1529 = vmax.f32 %v1177, 0.0
    %v1530 = vmax.f32 %v1179, 0.0
    %v1531 = vmax.f32 %v1290, 0.0
    %v1532 = vmax.f32 %v1292, 0.0
    %v1533 = vmax.f32 %v1403, 0.0
    %v1534 = vmax.f32 %v1405, 0.0
    %v1535 = vld [vmem:[%s4] sm:$0xf]
    %v1536 = vpack.c.bf16 %v1415, %v1407
    %v1537 = vpack.c.bf16 %v1416, %v1408
    %v1538 = vpack.c.bf16 %v1417, %v1409
    %v1539 = vpack.c.bf16 %v1418, %v1410
    %v1540 = vpack.c.bf16 %v1419, %v1411
    %v1541 = vpack.c.bf16 %v1420, %v1412
    %v1542 = vpack.c.bf16 %v1421, %v1413
    %v1543 = vpack.c.bf16 %v1422, %v1414
    %v1544 = vpack.c.bf16 %v1431, %v1423
    %v1545 = vpack.c.bf16 %v1432, %v1424
    %v1546 = vpack.c.bf16 %v1433, %v1425
    %v1547 = vpack.c.bf16 %v1434, %v1426
    %v1548 = vpack.c.bf16 %v1435, %v1427
    %v1549 = vpack.c.bf16 %v1436, %v1428
    %v1550 = vpack.c.bf16 %v1437, %v1429
    %v1551 = vpack.c.bf16 %v1438, %v1430
    %v1552 = vpack.c.bf16 %v1447, %v1439
    %v1553 = vpack.c.bf16 %v1448, %v1440
    %v1554 = vpack.c.bf16 %v1449, %v1441
    %v1555 = vpack.c.bf16 %v1450, %v1442
    %v1556 = vpack.c.bf16 %v1451, %v1443
    %v1557 = vpack.c.bf16 %v1452, %v1444
    %v1558 = vpack.c.bf16 %v1453, %v1445
    %v1559 = vpack.c.bf16 %v1454, %v1446
    %v1560 = vpack.c.bf16 %v1463, %v1455
    %v1561 = vpack.c.bf16 %v1464, %v1456
    %v1562 = vpack.c.bf16 %v1465, %v1457
    %v1563 = vpack.c.bf16 %v1466, %v1458
    %v1564 = vpack.c.bf16 %v1467, %v1459
    %v1565 = vpack.c.bf16 %v1468, %v1460
    %v1566 = vpack.c.bf16 %v1469, %v1461
    %v1567 = vpack.c.bf16 %v1470, %v1462
    %v1568 = vpack.c.bf16 %v1479, %v1471
    %v1569 = vpack.c.bf16 %v1480, %v1472
    %v1570 = vpack.c.bf16 %v1481, %v1473
    %v1571 = vpack.c.bf16 %v1482, %v1474
    %v1572 = vpack.c.bf16 %v1483, %v1475
    %v1573 = vpack.c.bf16 %v1484, %v1476
    %v1574 = vpack.c.bf16 %v1485, %v1477
    %v1575 = vpack.c.bf16 %v1486, %v1478
    %v1576 = vpack.c.bf16 %v1495, %v1487
    %v1577 = vpack.c.bf16 %v1496, %v1488
    %v1578 = vpack.c.bf16 %v1497, %v1489
    %v1579 = vpack.c.bf16 %v1498, %v1490
    %v1580 = vpack.c.bf16 %v1499, %v1491
    %v1581 = vpack.c.bf16 %v1500, %v1492
    %v1582 = vpack.c.bf16 %v1501, %v1493
    %v1583 = vpack.c.bf16 %v1502, %v1494
    %v1584 = vpack.c.bf16 %v1511, %v1503
    %v1585 = vpack.c.bf16 %v1512, %v1504
    %v1586 = vpack.c.bf16 %v1513, %v1505
    %v1587 = vpack.c.bf16 %v1514, %v1506
    %v1588 = vpack.c.bf16 %v1515, %v1507
    %v1589 = vpack.c.bf16 %v1516, %v1508
    %v1590 = vpack.c.bf16 %v1517, %v1509
    %v1591 = vpack.c.bf16 %v1518, %v1510
    %v1592 = vpack.c.bf16 %v1527, %v1519
    %v1593 = vpack.c.bf16 %v1528, %v1520
    %v1594 = vpack.c.bf16 %v1529, %v1521
    %v1595 = vpack.c.bf16 %v1530, %v1522
    %v1596 = vpack.c.bf16 %v1531, %v1523
    %v1597 = vpack.c.bf16 %v1532, %v1524
    %v1598 = vpack.c.bf16 %v1533, %v1525
    %v1599 = vpack.c.bf16 %v1534, %v1526
    %1600 = vmatprep.subr.bf16.mxu0 %v1537
    %1601 = vmatpush1.bf16.msra.mxu0 %v1536
    %1602 = vmatprep.subr.bf16.mxu0 %v1545
    %1603 = vmatpush1.bf16.msra.mxu0 %v1544
    %1604 = vmatprep.subr.bf16.mxu0 %v1553
    %1605 = vmatpush1.bf16.msra.mxu0 %v1552
    %1606 = vmatprep.subr.bf16.mxu0 %v1561
    %1607 = vmatpush1.bf16.msra.mxu0 %v1560
    %1608 = vmatprep.subr.bf16.mxu0 %v1569
    %1609 = vmatpush1.bf16.msra.mxu0 %v1568
    %1610 = vmatprep.subr.bf16.mxu0 %v1577
    %1611 = vmatpush1.bf16.msra.mxu0 %v1576
    %1612 = vmatprep.subr.bf16.mxu0 %v1585
    %1613 = vmatpush1.bf16.msra.mxu0 %v1584
    %1614 = vmatprep.subr.bf16.mxu0 %v1593
    %1615 = vmatpush1.bf16.msra.mxu0 %v1592
    %1616 = vmatprep.subr.bf16.mxu0 0
    %1617 = vmatpush1.bf16.msra.mxu0 0
    %1618 = vmatprep.subr.bf16.mxu0 0
    %1619 = vmatpush1.bf16.msra.mxu0 0
    %1620 = vmatprep.subr.bf16.mxu0 0
    %1621 = vmatpush1.bf16.msra.mxu0 0
    %1622 = vmatprep.subr.bf16.mxu0 0
    %1623 = vmatpush1.bf16.msra.mxu0 0
    %1624 = vmatprep.subr.bf16.mxu0 0
    %1625 = vmatpush1.bf16.msra.mxu0 0
    %1626 = vmatprep.subr.bf16.mxu0 0
    %1627 = vmatpush1.bf16.msra.mxu0 0
    %1628 = vmatprep.subr.bf16.mxu0 0
    %1629 = vmatpush1.bf16.msra.mxu0 0
    %1630 = vmatprep.subr.bf16.mxu0 0
    %1631 = vmatpush1.bf16.msra.mxu0 0
    %1632 = vmatprep.mubr.bf16.mxu0 0
    %1633 = vmatmul.mubr.bf16.gmra.mrb[0].mxu0 %v1535
    %v1634 = vpop.f32.mrb[0].mxu0
    %v1635 = vadd.f32 0.0, %v1634
    %v1636 = vpop.f32.mrb[0].mxu0
    %v1637 = vadd.f32 0.0, %v1636
    %v1638 = vpop.f32.mrb[0].mxu0
    %v1639 = vpop.f32.mrb[0].mxu0
    %1640 = vdwg.mxu0
    %1641 = vmatprep.subr.bf16.mxu0 %v1539
    %1642 = vmatpush1.bf16.msra.mxu0 %v1538
    %1643 = vmatprep.subr.bf16.mxu0 %v1547
    %1644 = vmatpush1.bf16.msra.mxu0 %v1546
    %1645 = vmatprep.subr.bf16.mxu0 %v1555
    %1646 = vmatpush1.bf16.msra.mxu0 %v1554
    %1647 = vmatprep.subr.bf16.mxu0 %v1563
    %1648 = vmatpush1.bf16.msra.mxu0 %v1562
    %1649 = vmatprep.subr.bf16.mxu0 %v1571
    %1650 = vmatpush1.bf16.msra.mxu0 %v1570
    %1651 = vmatprep.subr.bf16.mxu0 %v1579
    %1652 = vmatpush1.bf16.msra.mxu0 %v1578
    %1653 = vmatprep.subr.bf16.mxu0 %v1587
    %1654 = vmatpush1.bf16.msra.mxu0 %v1586
    %1655 = vmatprep.subr.bf16.mxu0 %v1595
    %1656 = vmatpush1.bf16.msra.mxu0 %v1594
    %1657 = vmatprep.subr.bf16.mxu0 0
    %1658 = vmatpush1.bf16.msra.mxu0 0
    %1659 = vmatprep.subr.bf16.mxu0 0
    %1660 = vmatpush1.bf16.msra.mxu0 0
    %1661 = vmatprep.subr.bf16.mxu0 0
    %1662 = vmatpush1.bf16.msra.mxu0 0
    %1663 = vmatprep.subr.bf16.mxu0 0
    %1664 = vmatpush1.bf16.msra.mxu0 0
    %1665 = vmatprep.subr.bf16.mxu0 0
    %1666 = vmatpush1.bf16.msra.mxu0 0
    %1667 = vmatprep.subr.bf16.mxu0 0
    %1668 = vmatpush1.bf16.msra.mxu0 0
    %1669 = vmatprep.subr.bf16.mxu0 0
    %1670 = vmatpush1.bf16.msra.mxu0 0
    %1671 = vmatprep.subr.bf16.mxu0 0
    %1672 = vmatpush1.bf16.msra.mxu0 0
    %1673 = vmatprep.mubr.bf16.mxu0 0
    %1674 = vmatmul.mubr.bf16.gmra.mrb[0].mxu0 %v1535
    %v1675 = vpop.f32.mrb[0].mxu0
    %v1676 = vadd.f32 0.0, %v1675
    %v1677 = vpop.f32.mrb[0].mxu0
    %v1678 = vadd.f32 0.0, %v1677
    %v1679 = vpop.f32.mrb[0].mxu0
    %v1680 = vpop.f32.mrb[0].mxu0
    %1681 = vdwg.mxu0
    %1682 = vmatprep.subr.bf16.mxu0 %v1541
    %1683 = vmatpush1.bf16.msra.mxu0 %v1540
    %1684 = vmatprep.subr.bf16.mxu0 %v1549
    %1685 = vmatpush1.bf16.msra.mxu0 %v1548
    %1686 = vmatprep.subr.bf16.mxu0 %v1557
    %1687 = vmatpush1.bf16.msra.mxu0 %v1556
    %1688 = vmatprep.subr.bf16.mxu0 %v1565
    %1689 = vmatpush1.bf16.msra.mxu0 %v1564
    %1690 = vmatprep.subr.bf16.mxu0 %v1573
    %1691 = vmatpush1.bf16.msra.mxu0 %v1572
    %1692 = vmatprep.subr.bf16.mxu0 %v1581
    %1693 = vmatpush1.bf16.msra.mxu0 %v1580
    %1694 = vmatprep.subr.bf16.mxu0 %v1589
    %1695 = vmatpush1.bf16.msra.mxu0 %v1588
    %1696 = vmatprep.subr.bf16.mxu0 %v1597
    %1697 = vmatpush1.bf16.msra.mxu0 %v1596
    %1698 = vmatprep.subr.bf16.mxu0 0
    %1699 = vmatpush1.bf16.msra.mxu0 0
    %1700 = vmatprep.subr.bf16.mxu0 0
    %1701 = vmatpush1.bf16.msra.mxu0 0
    %1702 = vmatprep.subr.bf16.mxu0 0
    %1703 = vmatpush1.bf16.msra.mxu0 0
    %1704 = vmatprep.subr.bf16.mxu0 0
    %1705 = vmatpush1.bf16.msra.mxu0 0
    %1706 = vmatprep.subr.bf16.mxu0 0
    %1707 = vmatpush1.bf16.msra.mxu0 0
    %1708 = vmatprep.subr.bf16.mxu0 0
    %1709 = vmatpush1.bf16.msra.mxu0 0
    %1710 = vmatprep.subr.bf16.mxu0 0
    %1711 = vmatpush1.bf16.msra.mxu0 0
    %1712 = vmatprep.subr.bf16.mxu0 0
    %1713 = vmatpush1.bf16.msra.mxu0 0
    %1714 = vmatprep.mubr.bf16.mxu0 0
    %1715 = vmatmul.mubr.bf16.gmra.mrb[0].mxu0 %v1535
    %v1716 = vpop.f32.mrb[0].mxu0
    %v1717 = vadd.f32 0.0, %v1716
    %v1718 = vpop.f32.mrb[0].mxu0
    %v1719 = vadd.f32 0.0, %v1718
    %v1720 = vpop.f32.mrb[0].mxu0
    %v1721 = vpop.f32.mrb[0].mxu0
    %1722 = vdwg.mxu0
    %1723 = vmatprep.subr.bf16.mxu0 %v1543
    %1724 = vmatpush1.bf16.msra.mxu0 %v1542
    %1725 = vmatprep.subr.bf16.mxu0 %v1551
    %1726 = vmatpush1.bf16.msra.mxu0 %v1550
    %1727 = vmatprep.subr.bf16.mxu0 %v1559
    %1728 = vmatpush1.bf16.msra.mxu0 %v1558
    %1729 = vmatprep.subr.bf16.mxu0 %v1567
    %1730 = vmatpush1.bf16.msra.mxu0 %v1566
    %1731 = vmatprep.subr.bf16.mxu0 %v1575
    %1732 = vmatpush1.bf16.msra.mxu0 %v1574
    %1733 = vmatprep.subr.bf16.mxu0 %v1583
    %1734 = vmatpush1.bf16.msra.mxu0 %v1582
    %1735 = vmatprep.subr.bf16.mxu0 %v1591
    %1736 = vmatpush1.bf16.msra.mxu0 %v1590
    %1737 = vmatprep.subr.bf16.mxu0 %v1599
    %1738 = vmatpush1.bf16.msra.mxu0 %v1598
    %1739 = vmatprep.subr.bf16.mxu0 0
    %1740 = vmatpush1.bf16.msra.mxu0 0
    %1741 = vmatprep.subr.bf16.mxu0 0
    %1742 = vmatpush1.bf16.msra.mxu0 0
    %1743 = vmatprep.subr.bf16.mxu0 0
    %1744 = vmatpush1.bf16.msra.mxu0 0
    %1745 = vmatprep.subr.bf16.mxu0 0
    %1746 = vmatpush1.bf16.msra.mxu0 0
    %1747 = vmatprep.subr.bf16.mxu0 0
    %1748 = vmatpush1.bf16.msra.mxu0 0
    %1749 = vmatprep.subr.bf16.mxu0 0
    %1750 = vmatpush1.bf16.msra.mxu0 0
    %1751 = vmatprep.subr.bf16.mxu0 0
    %1752 = vmatpush1.bf16.msra.mxu0 0
    %1753 = vmatprep.subr.bf16.mxu0 0
    %1754 = vmatpush1.bf16.msra.mxu0 0
    %1755 = vmatprep.mubr.bf16.mxu0 0
    %1756 = vmatmul.mubr.bf16.gmra.mrb[0].mxu0 %v1535
    %v1757 = vpop.f32.mrb[0].mxu0
    %v1758 = vadd.f32 0.0, %v1757
    %v1759 = vpop.f32.mrb[0].mxu0
    %v1760 = vadd.f32 0.0, %v1759
    %v1761 = vpop.f32.mrb[0].mxu0
    %v1762 = vpop.f32.mrb[0].mxu0
    %1763 = vdwg.mxu0
    %v1764 = vadd.f32 %v28, %v1635
    %v1765 = vadd.f32 %v29, %v1637
    %v1766 = vadd.f32 %v30, %v1676
    %v1767 = vadd.f32 %v31, %v1678
    %v1768 = vadd.f32 %v32, %v1717
    %v1769 = vadd.f32 %v33, %v1719
    %v1770 = vadd.f32 %v34, %v1758
    %v1771 = vadd.f32 %v35, %v1760
    %v1772 = vpack.c.bf16 %v1764, %v1764
    %v1773 = vpack.c.bf16 %v1765, %v1765
    %v1774 = vpack.c.bf16 %v1766, %v1766
    %v1775 = vpack.c.bf16 %v1767, %v1767
    %v1776 = vpack.c.bf16 %v1768, %v1768
    %v1777 = vpack.c.bf16 %v1769, %v1769
    %v1778 = vpack.c.bf16 %v1770, %v1770
    %v1779 = vpack.c.bf16 %v1771, %v1771
    %v1780 = vld [vmem:[%s1 + $0x40] sm:$0xf]
    %v1781 = vld [vmem:[%s1 + $0x44] sm:$0xf]
    %v1782 = vld [vmem:[%s1 + $0x48] sm:$0xf]
    %v1783 = vld [vmem:[%s1 + $0x4c] sm:$0xf]
    %v1784 = vld [vmem:[%s1 + $0x50] sm:$0xf]
    %v1785 = vld [vmem:[%s1 + $0x54] sm:$0xf]
    %v1786 = vld [vmem:[%s1 + $0x58] sm:$0xf]
    %v1787 = vld [vmem:[%s1 + $0x5c] sm:$0xf]
    %v1788 = vld [vmem:[%s1 + $0x60] sm:$0xf]
    %v1789 = vld [vmem:[%s1 + $0x64] sm:$0xf]
    %v1790 = vld [vmem:[%s1 + $0x68] sm:$0xf]
    %v1791 = vld [vmem:[%s1 + $0x6c] sm:$0xf]
    %v1792 = vld [vmem:[%s1 + $0x70] sm:$0xf]
    %v1793 = vld [vmem:[%s1 + $0x74] sm:$0xf]
    %v1794 = vld [vmem:[%s1 + $0x78] sm:$0xf]
    %v1795 = vld [vmem:[%s1 + $0x7c] sm:$0xf]
    %v1812 = vunpack.c.l.b16 %v1780
    %v1813 = vunpack.c.l.b16 %v1781
    %v1814 = vunpack.c.l.b16 %v1782
    %v1815 = vunpack.c.l.b16 %v1783
    %v1816 = vunpack.c.l.b16 %v1784
    %v1817 = vunpack.c.l.b16 %v1785
    %v1818 = vunpack.c.l.b16 %v1786
    %v1819 = vunpack.c.l.b16 %v1787
    %v1820 = vunpack.c.l.b16 %v1788
    %v1821 = vunpack.c.l.b16 %v1789
    %v1822 = vunpack.c.l.b16 %v1790
    %v1823 = vunpack.c.l.b16 %v1791
    %v1824 = vunpack.c.l.b16 %v1792
    %v1825 = vunpack.c.l.b16 %v1793
    %v1826 = vunpack.c.l.b16 %v1794
    %v1827 = vunpack.c.l.b16 %v1795
    %v1828 = vpack.c.b16 %v1813, %v1812
    %v1829 = vpack.c.b16 %v1815, %v1814
    %v1830 = vpack.c.b16 %v1817, %v1816
    %v1831 = vpack.c.b16 %v1819, %v1818
    %v1832 = vpack.c.b16 %v1821, %v1820
    %v1833 = vpack.c.b16 %v1823, %v1822
    %v1834 = vpack.c.b16 %v1825, %v1824
    %v1835 = vpack.c.b16 %v1827, %v1826
    %v1837 = vsel %vm101, %v1828, 0
    %v1840 = vsel %vm101, %v1829, 0
    %v1843 = vsel %vm101, %v1830, 0
    %v1846 = vsel %vm101, %v1831, 0
    %v1849 = vsel %vm101, %v1832, 0
    %v1852 = vsel %vm101, %v1833, 0
    %v1855 = vsel %vm101, %v1834, 0
    %v1858 = vsel %vm101, %v1835, 0
    %v1861 = vsel %vm126, %v1772, 0
    %v1864 = vsel %vm126, %v1773, 0
    %v1867 = vsel %vm126, %v1774, 0
    %v1870 = vsel %vm126, %v1775, 0
    %v1873 = vsel %vm126, %v1776, 0
    %v1876 = vsel %vm126, %v1777, 0
    %v1879 = vsel %vm126, %v1778, 0
    %v1882 = vsel %vm126, %v1779, 0
    %1884 = vmatprep.subr.bf16.mxu0 %v1864
    %1885 = vmatpush1.bf16.msra.mxu0 %v1861
    %1886 = vmatprep.subr.bf16.mxu0 0
    %1887 = vmatpush1.bf16.msra.mxu0 0
    %1888 = vmatprep.subr.bf16.mxu0 0
    %1889 = vmatpush1.bf16.msra.mxu0 0
    %1890 = vmatprep.subr.bf16.mxu0 0
    %1891 = vmatpush1.bf16.msra.mxu0 0
    %1892 = vmatprep.subr.bf16.mxu0 0
    %1893 = vmatpush1.bf16.msra.mxu0 0
    %1894 = vmatprep.subr.bf16.mxu0 0
    %1895 = vmatpush1.bf16.msra.mxu0 0
    %1896 = vmatprep.subr.bf16.mxu0 0
    %1897 = vmatpush1.bf16.msra.mxu0 0
    %1898 = vmatprep.subr.bf16.mxu0 0
    %1899 = vmatpush1.bf16.msra.mxu0 0
    %1900 = vmatprep.subr.bf16.mxu0 0
    %1901 = vmatpush1.bf16.msra.mxu0 0
    %1902 = vmatprep.subr.bf16.mxu0 0
    %1903 = vmatpush1.bf16.msra.mxu0 0
    %1904 = vmatprep.subr.bf16.mxu0 0
    %1905 = vmatpush1.bf16.msra.mxu0 0
    %1906 = vmatprep.subr.bf16.mxu0 0
    %1907 = vmatpush1.bf16.msra.mxu0 0
    %1908 = vmatprep.subr.bf16.mxu0 0
    %1909 = vmatpush1.bf16.msra.mxu0 0
    %1910 = vmatprep.subr.bf16.mxu0 0
    %1911 = vmatpush1.bf16.msra.mxu0 0
    %1912 = vmatprep.subr.bf16.mxu0 0
    %1913 = vmatpush1.bf16.msra.mxu0 0
    %1914 = vmatprep.subr.bf16.mxu0 0
    %1915 = vmatpush1.bf16.msra.mxu0 0
    %1916 = vmatprep.mubr.bf16.mxu0 0
    %1917 = vmatmul.mubr.bf16.gmra.mrb[0].mxu0 %v1837
    %v1918 = vpop.f32.mrb[0].mxu0
    %v1919 = vadd.f32 0.0, %v1918
    %v1920 = vpop.f32.mrb[0].mxu0
    %v1921 = vadd.f32 0.0, %v1920
    %v1922 = vpop.f32.mrb[0].mxu0
    %v1923 = vadd.f32 0.0, %v1922
    %v1924 = vpop.f32.mrb[0].mxu0
    %v1925 = vadd.f32 0.0, %v1924
    %1926 = vmatprep.mubr.bf16.mxu0 0
    %1927 = vmatmul.mubr.bf16.gmra.mrb[0].mxu0 %v1840
    %v1928 = vpop.f32.mrb[0].mxu0
    %v1929 = vadd.f32 0.0, %v1928
    %v1930 = vpop.f32.mrb[0].mxu0
    %v1931 = vadd.f32 0.0, %v1930
    %v1932 = vpop.f32.mrb[0].mxu0
    %v1933 = vadd.f32 0.0, %v1932
    %v1934 = vpop.f32.mrb[0].mxu0
    %v1935 = vadd.f32 0.0, %v1934
    %1936 = vmatprep.mubr.bf16.mxu0 0
    %1937 = vmatmul.mubr.bf16.gmra.mrb[0].mxu0 %v1843
    %v1938 = vpop.f32.mrb[0].mxu0
    %v1939 = vadd.f32 0.0, %v1938
    %v1940 = vpop.f32.mrb[0].mxu0
    %v1941 = vadd.f32 0.0, %v1940
    %v1942 = vpop.f32.mrb[0].mxu0
    %v1943 = vadd.f32 0.0, %v1942
    %v1944 = vpop.f32.mrb[0].mxu0
    %v1945 = vadd.f32 0.0, %v1944
    %1946 = vmatprep.mubr.bf16.mxu0 0
    %1947 = vmatmul.mubr.bf16.gmra.mrb[0].mxu0 %v1846
    %v1948 = vpop.f32.mrb[0].mxu0
    %v1949 = vadd.f32 0.0, %v1948
    %v1950 = vpop.f32.mrb[0].mxu0
    %v1951 = vadd.f32 0.0, %v1950
    %v1952 = vpop.f32.mrb[0].mxu0
    %v1953 = vadd.f32 0.0, %v1952
    %v1954 = vpop.f32.mrb[0].mxu0
    %v1955 = vadd.f32 0.0, %v1954
    %1956 = vmatprep.mubr.bf16.mxu0 0
    %1957 = vmatmul.mubr.bf16.gmra.mrb[0].mxu0 %v1849
    %v1958 = vpop.f32.mrb[0].mxu0
    %v1959 = vadd.f32 0.0, %v1958
    %v1960 = vpop.f32.mrb[0].mxu0
    %v1961 = vadd.f32 0.0, %v1960
    %v1962 = vpop.f32.mrb[0].mxu0
    %v1963 = vadd.f32 0.0, %v1962
    %v1964 = vpop.f32.mrb[0].mxu0
    %v1965 = vadd.f32 0.0, %v1964
    %1966 = vmatprep.mubr.bf16.mxu0 0
    %1967 = vmatmul.mubr.bf16.gmra.mrb[0].mxu0 %v1852
    %v1968 = vpop.f32.mrb[0].mxu0
    %v1969 = vadd.f32 0.0, %v1968
    %v1970 = vpop.f32.mrb[0].mxu0
    %v1971 = vadd.f32 0.0, %v1970
    %v1972 = vpop.f32.mrb[0].mxu0
    %v1973 = vadd.f32 0.0, %v1972
    %v1974 = vpop.f32.mrb[0].mxu0
    %v1975 = vadd.f32 0.0, %v1974
    %1976 = vmatprep.mubr.bf16.mxu0 0
    %1977 = vmatmul.mubr.bf16.gmra.mrb[0].mxu0 %v1855
    %v1978 = vpop.f32.mrb[0].mxu0
    %v1979 = vadd.f32 0.0, %v1978
    %v1980 = vpop.f32.mrb[0].mxu0
    %v1981 = vadd.f32 0.0, %v1980
    %v1982 = vpop.f32.mrb[0].mxu0
    %v1983 = vadd.f32 0.0, %v1982
    %v1984 = vpop.f32.mrb[0].mxu0
    %v1985 = vadd.f32 0.0, %v1984
    %1986 = vmatprep.mubr.bf16.mxu0 0
    %1987 = vmatmul.mubr.bf16.gmra.mrb[0].mxu0 %v1858
    %v1988 = vpop.f32.mrb[0].mxu0
    %v1989 = vadd.f32 0.0, %v1988
    %v1990 = vpop.f32.mrb[0].mxu0
    %v1991 = vadd.f32 0.0, %v1990
    %v1992 = vpop.f32.mrb[0].mxu0
    %v1993 = vadd.f32 0.0, %v1992
    %v1994 = vpop.f32.mrb[0].mxu0
    %v1995 = vadd.f32 0.0, %v1994
    %1996 = vdwg.mxu0
    %1997 = vmatprep.subr.bf16.mxu0 %v1870
    %1998 = vmatpush1.bf16.msra.mxu0 %v1867
    %1999 = vmatprep.subr.bf16.mxu0 0
    %2000 = vmatpush1.bf16.msra.mxu0 0
    %2001 = vmatprep.subr.bf16.mxu0 0
    %2002 = vmatpush1.bf16.msra.mxu0 0
    %2003 = vmatprep.subr.bf16.mxu0 0
    %2004 = vmatpush1.bf16.msra.mxu0 0
    %2005 = vmatprep.subr.bf16.mxu0 0
    %2006 = vmatpush1.bf16.msra.mxu0 0
    %2007 = vmatprep.subr.bf16.mxu0 0
    %2008 = vmatpush1.bf16.msra.mxu0 0
    %2009 = vmatprep.subr.bf16.mxu0 0
    %2010 = vmatpush1.bf16.msra.mxu0 0
    %2011 = vmatprep.subr.bf16.mxu0 0
    %2012 = vmatpush1.bf16.msra.mxu0 0
    %2013 = vmatprep.subr.bf16.mxu0 0
    %2014 = vmatpush1.bf16.msra.mxu0 0
    %2015 = vmatprep.subr.bf16.mxu0 0
    %2016 = vmatpush1.bf16.msra.mxu0 0
    %2017 = vmatprep.subr.bf16.mxu0 0
    %2018 = vmatpush1.bf16.msra.mxu0 0
    %2019 = vmatprep.subr.bf16.mxu0 0
    %2020 = vmatpush1.bf16.msra.mxu0 0
    %2021 = vmatprep.subr.bf16.mxu0 0
    %2022 = vmatpush1.bf16.msra.mxu0 0
    %2023 = vmatprep.subr.bf16.mxu0 0
    %2024 = vmatpush1.bf16.msra.mxu0 0
    %2025 = vmatprep.subr.bf16.mxu0 0
    %2026 = vmatpush1.bf16.msra.mxu0 0
    %2027 = vmatprep.subr.bf16.mxu0 0
    %2028 = vmatpush1.bf16.msra.mxu0 0
    %2029 = vmatprep.mubr.bf16.mxu0 0
    %2030 = vmatmul.mubr.bf16.gmra.mrb[0].mxu0 %v1837
    %v2031 = vpop.f32.mrb[0].mxu0
    %v2032 = vadd.f32 0.0, %v2031
    %v2033 = vpop.f32.mrb[0].mxu0
    %v2034 = vadd.f32 0.0, %v2033
    %v2035 = vpop.f32.mrb[0].mxu0
    %v2036 = vadd.f32 0.0, %v2035
    %v2037 = vpop.f32.mrb[0].mxu0
    %v2038 = vadd.f32 0.0, %v2037
    %2039 = vmatprep.mubr.bf16.mxu0 0
    %2040 = vmatmul.mubr.bf16.gmra.mrb[0].mxu0 %v1840
    %v2041 = vpop.f32.mrb[0].mxu0
    %v2042 = vadd.f32 0.0, %v2041
    %v2043 = vpop.f32.mrb[0].mxu0
    %v2044 = vadd.f32 0.0, %v2043
    %v2045 = vpop.f32.mrb[0].mxu0
    %v2046 = vadd.f32 0.0, %v2045
    %v2047 = vpop.f32.mrb[0].mxu0
    %v2048 = vadd.f32 0.0, %v2047
    %2049 = vmatprep.mubr.bf16.mxu0 0
    %2050 = vmatmul.mubr.bf16.gmra.mrb[0].mxu0 %v1843
    %v2051 = vpop.f32.mrb[0].mxu0
    %v2052 = vadd.f32 0.0, %v2051
    %v2053 = vpop.f32.mrb[0].mxu0
    %v2054 = vadd.f32 0.0, %v2053
    %v2055 = vpop.f32.mrb[0].mxu0
    %v2056 = vadd.f32 0.0, %v2055
    %v2057 = vpop.f32.mrb[0].mxu0
    %v2058 = vadd.f32 0.0, %v2057
    %2059 = vmatprep.mubr.bf16.mxu0 0
    %2060 = vmatmul.mubr.bf16.gmra.mrb[0].mxu0 %v1846
    %v2061 = vpop.f32.mrb[0].mxu0
    %v2062 = vadd.f32 0.0, %v2061
    %v2063 = vpop.f32.mrb[0].mxu0
    %v2064 = vadd.f32 0.0, %v2063
    %v2065 = vpop.f32.mrb[0].mxu0
    %v2066 = vadd.f32 0.0, %v2065
    %v2067 = vpop.f32.mrb[0].mxu0
    %v2068 = vadd.f32 0.0, %v2067
    %2069 = vmatprep.mubr.bf16.mxu0 0
    %2070 = vmatmul.mubr.bf16.gmra.mrb[0].mxu0 %v1849
    %v2071 = vpop.f32.mrb[0].mxu0
    %v2072 = vadd.f32 0.0, %v2071
    %v2073 = vpop.f32.mrb[0].mxu0
    %v2074 = vadd.f32 0.0, %v2073
    %v2075 = vpop.f32.mrb[0].mxu0
    %v2076 = vadd.f32 0.0, %v2075
    %v2077 = vpop.f32.mrb[0].mxu0
    %v2078 = vadd.f32 0.0, %v2077
    %2079 = vmatprep.mubr.bf16.mxu0 0
    %2080 = vmatmul.mubr.bf16.gmra.mrb[0].mxu0 %v1852
    %v2081 = vpop.f32.mrb[0].mxu0
    %v2082 = vadd.f32 0.0, %v2081
    %v2083 = vpop.f32.mrb[0].mxu0
    %v2084 = vadd.f32 0.0, %v2083
    %v2085 = vpop.f32.mrb[0].mxu0
    %v2086 = vadd.f32 0.0, %v2085
    %v2087 = vpop.f32.mrb[0].mxu0
    %v2088 = vadd.f32 0.0, %v2087
    %2089 = vmatprep.mubr.bf16.mxu0 0
    %2090 = vmatmul.mubr.bf16.gmra.mrb[0].mxu0 %v1855
    %v2091 = vpop.f32.mrb[0].mxu0
    %v2092 = vadd.f32 0.0, %v2091
    %v2093 = vpop.f32.mrb[0].mxu0
    %v2094 = vadd.f32 0.0, %v2093
    %v2095 = vpop.f32.mrb[0].mxu0
    %v2096 = vadd.f32 0.0, %v2095
    %v2097 = vpop.f32.mrb[0].mxu0
    %v2098 = vadd.f32 0.0, %v2097
    %2099 = vmatprep.mubr.bf16.mxu0 0
    %2100 = vmatmul.mubr.bf16.gmra.mrb[0].mxu0 %v1858
    %v2101 = vpop.f32.mrb[0].mxu0
    %v2102 = vadd.f32 0.0, %v2101
    %v2103 = vpop.f32.mrb[0].mxu0
    %v2104 = vadd.f32 0.0, %v2103
    %v2105 = vpop.f32.mrb[0].mxu0
    %v2106 = vadd.f32 0.0, %v2105
    %v2107 = vpop.f32.mrb[0].mxu0
    %v2108 = vadd.f32 0.0, %v2107
    %2109 = vdwg.mxu0
    %2110 = vmatprep.subr.bf16.mxu0 %v1876
    %2111 = vmatpush1.bf16.msra.mxu0 %v1873
    %2112 = vmatprep.subr.bf16.mxu0 0
    %2113 = vmatpush1.bf16.msra.mxu0 0
    %2114 = vmatprep.subr.bf16.mxu0 0
    %2115 = vmatpush1.bf16.msra.mxu0 0
    %2116 = vmatprep.subr.bf16.mxu0 0
    %2117 = vmatpush1.bf16.msra.mxu0 0
    %2118 = vmatprep.subr.bf16.mxu0 0
    %2119 = vmatpush1.bf16.msra.mxu0 0
    %2120 = vmatprep.subr.bf16.mxu0 0
    %2121 = vmatpush1.bf16.msra.mxu0 0
    %2122 = vmatprep.subr.bf16.mxu0 0
    %2123 = vmatpush1.bf16.msra.mxu0 0
    %2124 = vmatprep.subr.bf16.mxu0 0
    %2125 = vmatpush1.bf16.msra.mxu0 0
    %2126 = vmatprep.subr.bf16.mxu0 0
    %2127 = vmatpush1.bf16.msra.mxu0 0
    %2128 = vmatprep.subr.bf16.mxu0 0
    %2129 = vmatpush1.bf16.msra.mxu0 0
    %2130 = vmatprep.subr.bf16.mxu0 0
    %2131 = vmatpush1.bf16.msra.mxu0 0
    %2132 = vmatprep.subr.bf16.mxu0 0
    %2133 = vmatpush1.bf16.msra.mxu0 0
    %2134 = vmatprep.subr.bf16.mxu0 0
    %2135 = vmatpush1.bf16.msra.mxu0 0
    %2136 = vmatprep.subr.bf16.mxu0 0
    %2137 = vmatpush1.bf16.msra.mxu0 0
    %2138 = vmatprep.subr.bf16.mxu0 0
    %2139 = vmatpush1.bf16.msra.mxu0 0
    %2140 = vmatprep.subr.bf16.mxu0 0
    %2141 = vmatpush1.bf16.msra.mxu0 0
    %2142 = vmatprep.mubr.bf16.mxu0 0
    %2143 = vmatmul.mubr.bf16.gmra.mrb[0].mxu0 %v1837
    %v2144 = vpop.f32.mrb[0].mxu0
    %v2145 = vadd.f32 0.0, %v2144
    %v2146 = vpop.f32.mrb[0].mxu0
    %v2147 = vadd.f32 0.0, %v2146
    %v2148 = vpop.f32.mrb[0].mxu0
    %v2149 = vadd.f32 0.0, %v2148
    %v2150 = vpop.f32.mrb[0].mxu0
    %v2151 = vadd.f32 0.0, %v2150
    %2152 = vmatprep.mubr.bf16.mxu0 0
    %2153 = vmatmul.mubr.bf16.gmra.mrb[0].mxu0 %v1840
    %v2154 = vpop.f32.mrb[0].mxu0
    %v2155 = vadd.f32 0.0, %v2154
    %v2156 = vpop.f32.mrb[0].mxu0
    %v2157 = vadd.f32 0.0, %v2156
    %v2158 = vpop.f32.mrb[0].mxu0
    %v2159 = vadd.f32 0.0, %v2158
    %v2160 = vpop.f32.mrb[0].mxu0
    %v2161 = vadd.f32 0.0, %v2160
    %2162 = vmatprep.mubr.bf16.mxu0 0
    %2163 = vmatmul.mubr.bf16.gmra.mrb[0].mxu0 %v1843
    %v2164 = vpop.f32.mrb[0].mxu0
    %v2165 = vadd.f32 0.0, %v2164
    %v2166 = vpop.f32.mrb[0].mxu0
    %v2167 = vadd.f32 0.0, %v2166
    %v2168 = vpop.f32.mrb[0].mxu0
    %v2169 = vadd.f32 0.0, %v2168
    %v2170 = vpop.f32.mrb[0].mxu0
    %v2171 = vadd.f32 0.0, %v2170
    %2172 = vmatprep.mubr.bf16.mxu0 0
    %2173 = vmatmul.mubr.bf16.gmra.mrb[0].mxu0 %v1846
    %v2174 = vpop.f32.mrb[0].mxu0
    %v2175 = vadd.f32 0.0, %v2174
    %v2176 = vpop.f32.mrb[0].mxu0
    %v2177 = vadd.f32 0.0, %v2176
    %v2178 = vpop.f32.mrb[0].mxu0
    %v2179 = vadd.f32 0.0, %v2178
    %v2180 = vpop.f32.mrb[0].mxu0
    %v2181 = vadd.f32 0.0, %v2180
    %2182 = vmatprep.mubr.bf16.mxu0 0
    %2183 = vmatmul.mubr.bf16.gmra.mrb[0].mxu0 %v1849
    %v2184 = vpop.f32.mrb[0].mxu0
    %v2185 = vadd.f32 0.0, %v2184
    %v2186 = vpop.f32.mrb[0].mxu0
    %v2187 = vadd.f32 0.0, %v2186
    %v2188 = vpop.f32.mrb[0].mxu0
    %v2189 = vadd.f32 0.0, %v2188
    %v2190 = vpop.f32.mrb[0].mxu0
    %v2191 = vadd.f32 0.0, %v2190
    %2192 = vmatprep.mubr.bf16.mxu0 0
    %2193 = vmatmul.mubr.bf16.gmra.mrb[0].mxu0 %v1852
    %v2194 = vpop.f32.mrb[0].mxu0
    %v2195 = vadd.f32 0.0, %v2194
    %v2196 = vpop.f32.mrb[0].mxu0
    %v2197 = vadd.f32 0.0, %v2196
    %v2198 = vpop.f32.mrb[0].mxu0
    %v2199 = vadd.f32 0.0, %v2198
    %v2200 = vpop.f32.mrb[0].mxu0
    %v2201 = vadd.f32 0.0, %v2200
    %2202 = vmatprep.mubr.bf16.mxu0 0
    %2203 = vmatmul.mubr.bf16.gmra.mrb[0].mxu0 %v1855
    %v2204 = vpop.f32.mrb[0].mxu0
    %v2205 = vadd.f32 0.0, %v2204
    %v2206 = vpop.f32.mrb[0].mxu0
    %v2207 = vadd.f32 0.0, %v2206
    %v2208 = vpop.f32.mrb[0].mxu0
    %v2209 = vadd.f32 0.0, %v2208
    %v2210 = vpop.f32.mrb[0].mxu0
    %v2211 = vadd.f32 0.0, %v2210
    %2212 = vmatprep.mubr.bf16.mxu0 0
    %2213 = vmatmul.mubr.bf16.gmra.mrb[0].mxu0 %v1858
    %v2214 = vpop.f32.mrb[0].mxu0
    %v2215 = vadd.f32 0.0, %v2214
    %v2216 = vpop.f32.mrb[0].mxu0
    %v2217 = vadd.f32 0.0, %v2216
    %v2218 = vpop.f32.mrb[0].mxu0
    %v2219 = vadd.f32 0.0, %v2218
    %v2220 = vpop.f32.mrb[0].mxu0
    %v2221 = vadd.f32 0.0, %v2220
    %2222 = vdwg.mxu0
    %2223 = vmatprep.subr.bf16.mxu0 %v1882
    %2224 = vmatpush1.bf16.msra.mxu0 %v1879
    %2225 = vmatprep.subr.bf16.mxu0 0
    %2226 = vmatpush1.bf16.msra.mxu0 0
    %2227 = vmatprep.subr.bf16.mxu0 0
    %2228 = vmatpush1.bf16.msra.mxu0 0
    %2229 = vmatprep.subr.bf16.mxu0 0
    %2230 = vmatpush1.bf16.msra.mxu0 0
    %2231 = vmatprep.subr.bf16.mxu0 0
    %2232 = vmatpush1.bf16.msra.mxu0 0
    %2233 = vmatprep.subr.bf16.mxu0 0
    %2234 = vmatpush1.bf16.msra.mxu0 0
    %2235 = vmatprep.subr.bf16.mxu0 0
    %2236 = vmatpush1.bf16.msra.mxu0 0
    %2237 = vmatprep.subr.bf16.mxu0 0
    %2238 = vmatpush1.bf16.msra.mxu0 0
    %2239 = vmatprep.subr.bf16.mxu0 0
    %2240 = vmatpush1.bf16.msra.mxu0 0
    %2241 = vmatprep.subr.bf16.mxu0 0
    %2242 = vmatpush1.bf16.msra.mxu0 0
    %2243 = vmatprep.subr.bf16.mxu0 0
    %2244 = vmatpush1.bf16.msra.mxu0 0
    %2245 = vmatprep.subr.bf16.mxu0 0
    %2246 = vmatpush1.bf16.msra.mxu0 0
    %2247 = vmatprep.subr.bf16.mxu0 0
    %2248 = vmatpush1.bf16.msra.mxu0 0
    %2249 = vmatprep.subr.bf16.mxu0 0
    %2250 = vmatpush1.bf16.msra.mxu0 0
    %2251 = vmatprep.subr.bf16.mxu0 0
    %2252 = vmatpush1.bf16.msra.mxu0 0
    %2253 = vmatprep.subr.bf16.mxu0 0
    %2254 = vmatpush1.bf16.msra.mxu0 0
    %2255 = vmatprep.mubr.bf16.mxu0 0
    %2256 = vmatmul.mubr.bf16.gmra.mrb[0].mxu0 %v1837
    %v2257 = vpop.f32.mrb[0].mxu0
    %v2258 = vadd.f32 0.0, %v2257
    %v2259 = vpop.f32.mrb[0].mxu0
    %v2260 = vadd.f32 0.0, %v2259
    %v2261 = vpop.f32.mrb[0].mxu0
    %v2262 = vadd.f32 0.0, %v2261
    %v2263 = vpop.f32.mrb[0].mxu0
    %v2264 = vadd.f32 0.0, %v2263
    %2265 = vmatprep.mubr.bf16.mxu0 0
    %2266 = vmatmul.mubr.bf16.gmra.mrb[0].mxu0 %v1840
    %v2267 = vpop.f32.mrb[0].mxu0
    %v2268 = vadd.f32 0.0, %v2267
    %v2269 = vpop.f32.mrb[0].mxu0
    %v2270 = vadd.f32 0.0, %v2269
    %v2271 = vpop.f32.mrb[0].mxu0
    %v2272 = vadd.f32 0.0, %v2271
    %v2273 = vpop.f32.mrb[0].mxu0
    %v2274 = vadd.f32 0.0, %v2273
    %2275 = vmatprep.mubr.bf16.mxu0 0
    %2276 = vmatmul.mubr.bf16.gmra.mrb[0].mxu0 %v1843
    %v2277 = vpop.f32.mrb[0].mxu0
    %v2278 = vadd.f32 0.0, %v2277
    %v2279 = vpop.f32.mrb[0].mxu0
    %v2280 = vadd.f32 0.0, %v2279
    %v2281 = vpop.f32.mrb[0].mxu0
    %v2282 = vadd.f32 0.0, %v2281
    %v2283 = vpop.f32.mrb[0].mxu0
    %v2284 = vadd.f32 0.0, %v2283
    %2285 = vmatprep.mubr.bf16.mxu0 0
    %2286 = vmatmul.mubr.bf16.gmra.mrb[0].mxu0 %v1846
    %v2287 = vpop.f32.mrb[0].mxu0
    %v2288 = vadd.f32 0.0, %v2287
    %v2289 = vpop.f32.mrb[0].mxu0
    %v2290 = vadd.f32 0.0, %v2289
    %v2291 = vpop.f32.mrb[0].mxu0
    %v2292 = vadd.f32 0.0, %v2291
    %v2293 = vpop.f32.mrb[0].mxu0
    %v2294 = vadd.f32 0.0, %v2293
    %2295 = vmatprep.mubr.bf16.mxu0 0
    %2296 = vmatmul.mubr.bf16.gmra.mrb[0].mxu0 %v1849
    %v2297 = vpop.f32.mrb[0].mxu0
    %v2298 = vadd.f32 0.0, %v2297
    %v2299 = vpop.f32.mrb[0].mxu0
    %v2300 = vadd.f32 0.0, %v2299
    %v2301 = vpop.f32.mrb[0].mxu0
    %v2302 = vadd.f32 0.0, %v2301
    %v2303 = vpop.f32.mrb[0].mxu0
    %v2304 = vadd.f32 0.0, %v2303
    %2305 = vmatprep.mubr.bf16.mxu0 0
    %2306 = vmatmul.mubr.bf16.gmra.mrb[0].mxu0 %v1852
    %v2307 = vpop.f32.mrb[0].mxu0
    %v2308 = vadd.f32 0.0, %v2307
    %v2309 = vpop.f32.mrb[0].mxu0
    %v2310 = vadd.f32 0.0, %v2309
    %v2311 = vpop.f32.mrb[0].mxu0
    %v2312 = vadd.f32 0.0, %v2311
    %v2313 = vpop.f32.mrb[0].mxu0
    %v2314 = vadd.f32 0.0, %v2313
    %2315 = vmatprep.mubr.bf16.mxu0 0
    %2316 = vmatmul.mubr.bf16.gmra.mrb[0].mxu0 %v1855
    %v2317 = vpop.f32.mrb[0].mxu0
    %v2318 = vadd.f32 0.0, %v2317
    %v2319 = vpop.f32.mrb[0].mxu0
    %v2320 = vadd.f32 0.0, %v2319
    %v2321 = vpop.f32.mrb[0].mxu0
    %v2322 = vadd.f32 0.0, %v2321
    %v2323 = vpop.f32.mrb[0].mxu0
    %v2324 = vadd.f32 0.0, %v2323
    %2325 = vmatprep.mubr.bf16.mxu0 0
    %2326 = vmatmul.mubr.bf16.gmra.mrb[0].mxu0 %v1858
    %v2327 = vpop.f32.mrb[0].mxu0
    %v2328 = vadd.f32 0.0, %v2327
    %v2329 = vpop.f32.mrb[0].mxu0
    %v2330 = vadd.f32 0.0, %v2329
    %v2331 = vpop.f32.mrb[0].mxu0
    %v2332 = vadd.f32 0.0, %v2331
    %v2333 = vpop.f32.mrb[0].mxu0
    %v2334 = vadd.f32 0.0, %v2333
    %2335 = vdwg.mxu0
    %v2336 = vmax.f32 %v1919, 0.0
    %v2337 = vmax.f32 %v1921, 0.0
    %v2338 = vmax.f32 %v2032, 0.0
    %v2339 = vmax.f32 %v2034, 0.0
    %v2340 = vmax.f32 %v2145, 0.0
    %v2341 = vmax.f32 %v2147, 0.0
    %v2342 = vmax.f32 %v2258, 0.0
    %v2343 = vmax.f32 %v2260, 0.0
    %v2344 = vmax.f32 %v1923, 0.0
    %v2345 = vmax.f32 %v1925, 0.0
    %v2346 = vmax.f32 %v2036, 0.0
    %v2347 = vmax.f32 %v2038, 0.0
    %v2348 = vmax.f32 %v2149, 0.0
    %v2349 = vmax.f32 %v2151, 0.0
    %v2350 = vmax.f32 %v2262, 0.0
    %v2351 = vmax.f32 %v2264, 0.0
    %v2352 = vmax.f32 %v1929, 0.0
    %v2353 = vmax.f32 %v1931, 0.0
    %v2354 = vmax.f32 %v2042, 0.0
    %v2355 = vmax.f32 %v2044, 0.0
    %v2356 = vmax.f32 %v2155, 0.0
    %v2357 = vmax.f32 %v2157, 0.0
    %v2358 = vmax.f32 %v2268, 0.0
    %v2359 = vmax.f32 %v2270, 0.0
    %v2360 = vmax.f32 %v1933, 0.0
    %v2361 = vmax.f32 %v1935, 0.0
    %v2362 = vmax.f32 %v2046, 0.0
    %v2363 = vmax.f32 %v2048, 0.0
    %v2364 = vmax.f32 %v2159, 0.0
    %v2365 = vmax.f32 %v2161, 0.0
    %v2366 = vmax.f32 %v2272, 0.0
    %v2367 = vmax.f32 %v2274, 0.0
    %v2368 = vmax.f32 %v1939, 0.0
    %v2369 = vmax.f32 %v1941, 0.0
    %v2370 = vmax.f32 %v2052, 0.0
    %v2371 = vmax.f32 %v2054, 0.0
    %v2372 = vmax.f32 %v2165, 0.0
    %v2373 = vmax.f32 %v2167, 0.0
    %v2374 = vmax.f32 %v2278, 0.0
    %v2375 = vmax.f32 %v2280, 0.0
    %v2376 = vmax.f32 %v1943, 0.0
    %v2377 = vmax.f32 %v1945, 0.0
    %v2378 = vmax.f32 %v2056, 0.0
    %v2379 = vmax.f32 %v2058, 0.0
    %v2380 = vmax.f32 %v2169, 0.0
    %v2381 = vmax.f32 %v2171, 0.0
    %v2382 = vmax.f32 %v2282, 0.0
    %v2383 = vmax.f32 %v2284, 0.0
    %v2384 = vmax.f32 %v1949, 0.0
    %v2385 = vmax.f32 %v1951, 0.0
    %v2386 = vmax.f32 %v2062, 0.0
    %v2387 = vmax.f32 %v2064, 0.0
    %v2388 = vmax.f32 %v2175, 0.0
    %v2389 = vmax.f32 %v2177, 0.0
    %v2390 = vmax.f32 %v2288, 0.0
    %v2391 = vmax.f32 %v2290, 0.0
    %v2392 = vmax.f32 %v1953, 0.0
    %v2393 = vmax.f32 %v1955, 0.0
    %v2394 = vmax.f32 %v2066, 0.0
    %v2395 = vmax.f32 %v2068, 0.0
    %v2396 = vmax.f32 %v2179, 0.0
    %v2397 = vmax.f32 %v2181, 0.0
    %v2398 = vmax.f32 %v2292, 0.0
    %v2399 = vmax.f32 %v2294, 0.0
    %v2400 = vmax.f32 %v1959, 0.0
    %v2401 = vmax.f32 %v1961, 0.0
    %v2402 = vmax.f32 %v2072, 0.0
    %v2403 = vmax.f32 %v2074, 0.0
    %v2404 = vmax.f32 %v2185, 0.0
    %v2405 = vmax.f32 %v2187, 0.0
    %v2406 = vmax.f32 %v2298, 0.0
    %v2407 = vmax.f32 %v2300, 0.0
    %v2408 = vmax.f32 %v1963, 0.0
    %v2409 = vmax.f32 %v1965, 0.0
    %v2410 = vmax.f32 %v2076, 0.0
    %v2411 = vmax.f32 %v2078, 0.0
    %v2412 = vmax.f32 %v2189, 0.0
    %v2413 = vmax.f32 %v2191, 0.0
    %v2414 = vmax.f32 %v2302, 0.0
    %v2415 = vmax.f32 %v2304, 0.0
    %v2416 = vmax.f32 %v1969, 0.0
    %v2417 = vmax.f32 %v1971, 0.0
    %v2418 = vmax.f32 %v2082, 0.0
    %v2419 = vmax.f32 %v2084, 0.0
    %v2420 = vmax.f32 %v2195, 0.0
    %v2421 = vmax.f32 %v2197, 0.0
    %v2422 = vmax.f32 %v2308, 0.0
    %v2423 = vmax.f32 %v2310, 0.0
    %v2424 = vmax.f32 %v1973, 0.0
    %v2425 = vmax.f32 %v1975, 0.0
    %v2426 = vmax.f32 %v2086, 0.0
    %v2427 = vmax.f32 %v2088, 0.0
    %v2428 = vmax.f32 %v2199, 0.0
    %v2429 = vmax.f32 %v2201, 0.0
    %v2430 = vmax.f32 %v2312, 0.0
    %v2431 = vmax.f32 %v2314, 0.0
    %v2432 = vmax.f32 %v1979, 0.0
    %v2433 = vmax.f32 %v1981, 0.0
    %v2434 = vmax.f32 %v2092, 0.0
    %v2435 = vmax.f32 %v2094, 0.0
    %v2436 = vmax.f32 %v2205, 0.0
    %v2437 = vmax.f32 %v2207, 0.0
    %v2438 = vmax.f32 %v2318, 0.0
    %v2439 = vmax.f32 %v2320, 0.0
    %v2440 = vmax.f32 %v1983, 0.0
    %v2441 = vmax.f32 %v1985, 0.0
    %v2442 = vmax.f32 %v2096, 0.0
    %v2443 = vmax.f32 %v2098, 0.0
    %v2444 = vmax.f32 %v2209, 0.0
    %v2445 = vmax.f32 %v2211, 0.0
    %v2446 = vmax.f32 %v2322, 0.0
    %v2447 = vmax.f32 %v2324, 0.0
    %v2448 = vmax.f32 %v1989, 0.0
    %v2449 = vmax.f32 %v1991, 0.0
    %v2450 = vmax.f32 %v2102, 0.0
    %v2451 = vmax.f32 %v2104, 0.0
    %v2452 = vmax.f32 %v2215, 0.0
    %v2453 = vmax.f32 %v2217, 0.0
    %v2454 = vmax.f32 %v2328, 0.0
    %v2455 = vmax.f32 %v2330, 0.0
    %v2456 = vmax.f32 %v1993, 0.0
    %v2457 = vmax.f32 %v1995, 0.0
    %v2458 = vmax.f32 %v2106, 0.0
    %v2459 = vmax.f32 %v2108, 0.0
    %v2460 = vmax.f32 %v2219, 0.0
    %v2461 = vmax.f32 %v2221, 0.0
    %v2462 = vmax.f32 %v2332, 0.0
    %v2463 = vmax.f32 %v2334, 0.0
    %v2464 = vld [vmem:[%s3] sm:$0xf]
    %v2465 = vld [vmem:[%s3 + $0x4] sm:$0xf]
    %v2466 = vld [vmem:[%s3 + $0x8] sm:$0xf]
    %v2467 = vld [vmem:[%s3 + $0xc] sm:$0xf]
    %v2468 = vld [vmem:[%s3 + $0x10] sm:$0xf]
    %v2469 = vld [vmem:[%s3 + $0x14] sm:$0xf]
    %v2470 = vld [vmem:[%s3 + $0x18] sm:$0xf]
    %v2471 = vld [vmem:[%s3 + $0x1c] sm:$0xf]
    %v2472 = vld [vmem:[%s3 + $0x20] sm:$0xf]
    %v2473 = vld [vmem:[%s3 + $0x24] sm:$0xf]
    %v2474 = vld [vmem:[%s3 + $0x28] sm:$0xf]
    %v2475 = vld [vmem:[%s3 + $0x2c] sm:$0xf]
    %v2476 = vld [vmem:[%s3 + $0x30] sm:$0xf]
    %v2477 = vld [vmem:[%s3 + $0x34] sm:$0xf]
    %v2478 = vld [vmem:[%s3 + $0x38] sm:$0xf]
    %v2479 = vld [vmem:[%s3 + $0x3c] sm:$0xf]
    %v2480 = vpack.c.bf16 %v2344, %v2336
    %v2481 = vpack.c.bf16 %v2345, %v2337
    %v2482 = vpack.c.bf16 %v2346, %v2338
    %v2483 = vpack.c.bf16 %v2347, %v2339
    %v2484 = vpack.c.bf16 %v2348, %v2340
    %v2485 = vpack.c.bf16 %v2349, %v2341
    %v2486 = vpack.c.bf16 %v2350, %v2342
    %v2487 = vpack.c.bf16 %v2351, %v2343
    %v2488 = vpack.c.bf16 %v2360, %v2352
    %v2489 = vpack.c.bf16 %v2361, %v2353
    %v2490 = vpack.c.bf16 %v2362, %v2354
    %v2491 = vpack.c.bf16 %v2363, %v2355
    %v2492 = vpack.c.bf16 %v2364, %v2356
    %v2493 = vpack.c.bf16 %v2365, %v2357
    %v2494 = vpack.c.bf16 %v2366, %v2358
    %v2495 = vpack.c.bf16 %v2367, %v2359
    %v2496 = vpack.c.bf16 %v2376, %v2368
    %v2497 = vpack.c.bf16 %v2377, %v2369
    %v2498 = vpack.c.bf16 %v2378, %v2370
    %v2499 = vpack.c.bf16 %v2379, %v2371
    %v2500 = vpack.c.bf16 %v2380, %v2372
    %v2501 = vpack.c.bf16 %v2381, %v2373
    %v2502 = vpack.c.bf16 %v2382, %v2374
    %v2503 = vpack.c.bf16 %v2383, %v2375
    %v2504 = vpack.c.bf16 %v2392, %v2384
    %v2505 = vpack.c.bf16 %v2393, %v2385
    %v2506 = vpack.c.bf16 %v2394, %v2386
    %v2507 = vpack.c.bf16 %v2395, %v2387
    %v2508 = vpack.c.bf16 %v2396, %v2388
    %v2509 = vpack.c.bf16 %v2397, %v2389
    %v2510 = vpack.c.bf16 %v2398, %v2390
    %v2511 = vpack.c.bf16 %v2399, %v2391
    %v2512 = vpack.c.bf16 %v2408, %v2400
    %v2513 = vpack.c.bf16 %v2409, %v2401
    %v2514 = vpack.c.bf16 %v2410, %v2402
    %v2515 = vpack.c.bf16 %v2411, %v2403
    %v2516 = vpack.c.bf16 %v2412, %v2404
    %v2517 = vpack.c.bf16 %v2413, %v2405
    %v2518 = vpack.c.bf16 %v2414, %v2406
    %v2519 = vpack.c.bf16 %v2415, %v2407
    %v2520 = vpack.c.bf16 %v2424, %v2416
    %v2521 = vpack.c.bf16 %v2425, %v2417
    %v2522 = vpack.c.bf16 %v2426, %v2418
    %v2523 = vpack.c.bf16 %v2427, %v2419
    %v2524 = vpack.c.bf16 %v2428, %v2420
    %v2525 = vpack.c.bf16 %v2429, %v2421
    %v2526 = vpack.c.bf16 %v2430, %v2422
    %v2527 = vpack.c.bf16 %v2431, %v2423
    %v2528 = vpack.c.bf16 %v2440, %v2432
    %v2529 = vpack.c.bf16 %v2441, %v2433
    %v2530 = vpack.c.bf16 %v2442, %v2434
    %v2531 = vpack.c.bf16 %v2443, %v2435
    %v2532 = vpack.c.bf16 %v2444, %v2436
    %v2533 = vpack.c.bf16 %v2445, %v2437
    %v2534 = vpack.c.bf16 %v2446, %v2438
    %v2535 = vpack.c.bf16 %v2447, %v2439
    %v2536 = vpack.c.bf16 %v2456, %v2448
    %v2537 = vpack.c.bf16 %v2457, %v2449
    %v2538 = vpack.c.bf16 %v2458, %v2450
    %v2539 = vpack.c.bf16 %v2459, %v2451
    %v2540 = vpack.c.bf16 %v2460, %v2452
    %v2541 = vpack.c.bf16 %v2461, %v2453
    %v2542 = vpack.c.bf16 %v2462, %v2454
    %v2543 = vpack.c.bf16 %v2463, %v2455
    %2544 = vset.pattern.permute.xlu0 1
    %2545 = vperm.xlu0 %2544, %v811
    %v2546 = vpop.permute.xlu0 %2545
    %2548 = vset.pattern.permute.xlu0 1
    %2549 = vperm.xlu0 %2548, %v812
    %v2550 = vpop.permute.xlu0 %2549
    %2552 = vset.pattern.permute.xlu0 1
    %2553 = vperm.xlu0 %2552, %v813
    %v2554 = vpop.permute.xlu0 %2553
    %2556 = vset.pattern.permute.xlu0 1
    %2557 = vperm.xlu0 %2556, %v814
    %v2558 = vpop.permute.xlu0 %2557
    %2560 = vset.pattern.permute.xlu0 1
    %2561 = vperm.xlu0 %2560, %v815
    %v2562 = vpop.permute.xlu0 %2561
    %2564 = vset.pattern.permute.xlu0 1
    %2565 = vperm.xlu0 %2564, %v816
    %v2566 = vpop.permute.xlu0 %2565
    %2568 = vset.pattern.permute.xlu0 1
    %2569 = vperm.xlu0 %2568, %v817
    %v2570 = vpop.permute.xlu0 %2569
    %2572 = vset.pattern.permute.xlu0 1
    %2573 = vperm.xlu0 %2572, %v818
    %v2574 = vpop.permute.xlu0 %2573
    %2576 = vset.pattern.permute.xlu0 1
    %2577 = vperm.xlu0 %2576, %v819
    %v2578 = vpop.permute.xlu0 %2577
    %2580 = vset.pattern.permute.xlu0 1
    %2581 = vperm.xlu0 %2580, %v820
    %v2582 = vpop.permute.xlu0 %2581
    %2584 = vset.pattern.permute.xlu0 1
    %2585 = vperm.xlu0 %2584, %v821
    %v2586 = vpop.permute.xlu0 %2585
    %2588 = vset.pattern.permute.xlu0 1
    %2589 = vperm.xlu0 %2588, %v822
    %v2590 = vpop.permute.xlu0 %2589
    %2592 = vset.pattern.permute.xlu0 1
    %2593 = vperm.xlu0 %2592, %v823
    %v2594 = vpop.permute.xlu0 %2593
    %2596 = vset.pattern.permute.xlu0 1
    %2597 = vperm.xlu0 %2596, %v824
    %v2598 = vpop.permute.xlu0 %2597
    %2600 = vset.pattern.permute.xlu0 1
    %2601 = vperm.xlu0 %2600, %v825
    %v2602 = vpop.permute.xlu0 %2601
    %2604 = vset.pattern.permute.xlu0 1
    %2605 = vperm.xlu0 %2604, %v826
    %v2606 = vpop.permute.xlu0 %2605
    %v2624 = vunpack.c.l.b16 %v2464
    %v2625 = vunpack.c.l.b16 %v2465
    %v2626 = vunpack.c.l.b16 %v2466
    %v2627 = vunpack.c.l.b16 %v2467
    %v2628 = vunpack.c.l.b16 %v2468
    %v2629 = vunpack.c.l.b16 %v2469
    %v2630 = vunpack.c.l.b16 %v2470
    %v2631 = vunpack.c.l.b16 %v2471
    %v2632 = vunpack.c.l.b16 %v2472
    %v2633 = vunpack.c.l.b16 %v2473
    %v2634 = vunpack.c.l.b16 %v2474
    %v2635 = vunpack.c.l.b16 %v2475
    %v2636 = vunpack.c.l.b16 %v2476
    %v2637 = vunpack.c.l.b16 %v2477
    %v2638 = vunpack.c.l.b16 %v2478
    %v2639 = vunpack.c.l.b16 %v2479
    %v2640 = vpack.c.b16 %v2625, %v2624
    %v2641 = vpack.c.b16 %v2627, %v2626
    %v2642 = vpack.c.b16 %v2629, %v2628
    %v2643 = vpack.c.b16 %v2631, %v2630
    %v2644 = vpack.c.b16 %v2633, %v2632
    %v2645 = vpack.c.b16 %v2635, %v2634
    %v2646 = vpack.c.b16 %v2637, %v2636
    %v2647 = vpack.c.b16 %v2639, %v2638
    %2656 = vmatprep.subr.bf16.mxu0 %v2481
    %2657 = vmatpush1.bf16.msra.mxu0 %v2480
    %2658 = vmatprep.subr.bf16.mxu0 %v2489
    %2659 = vmatpush1.bf16.msra.mxu0 %v2488
    %2660 = vmatprep.subr.bf16.mxu0 %v2497
    %2661 = vmatpush1.bf16.msra.mxu0 %v2496
    %2662 = vmatprep.subr.bf16.mxu0 %v2505
    %2663 = vmatpush1.bf16.msra.mxu0 %v2504
    %2664 = vmatprep.subr.bf16.mxu0 %v2513
    %2665 = vmatpush1.bf16.msra.mxu0 %v2512
    %2666 = vmatprep.subr.bf16.mxu0 %v2521
    %2667 = vmatpush1.bf16.msra.mxu0 %v2520
    %2668 = vmatprep.subr.bf16.mxu0 %v2529
    %2669 = vmatpush1.bf16.msra.mxu0 %v2528
    %2670 = vmatprep.subr.bf16.mxu0 %v2537
    %2671 = vmatpush1.bf16.msra.mxu0 %v2536
    %2672 = vmatprep.subr.bf16.mxu0 0
    %2673 = vmatpush1.bf16.msra.mxu0 0
    %2674 = vmatprep.subr.bf16.mxu0 0
    %2675 = vmatpush1.bf16.msra.mxu0 0
    %2676 = vmatprep.subr.bf16.mxu0 0
    %2677 = vmatpush1.bf16.msra.mxu0 0
    %2678 = vmatprep.subr.bf16.mxu0 0
    %2679 = vmatpush1.bf16.msra.mxu0 0
    %2680 = vmatprep.subr.bf16.mxu0 0
    %2681 = vmatpush1.bf16.msra.mxu0 0
    %2682 = vmatprep.subr.bf16.mxu0 0
    %2683 = vmatpush1.bf16.msra.mxu0 0
    %2684 = vmatprep.subr.bf16.mxu0 0
    %2685 = vmatpush1.bf16.msra.mxu0 0
    %2686 = vmatprep.subr.bf16.mxu0 0
    %2687 = vmatpush1.bf16.msra.mxu0 0
    %2688 = vmatprep.mubr.bf16.mxu0 0
    %2689 = vmatmul.mubr.bf16.gmra.mrb[0].mxu0 %v2640
    %v2690 = vpop.f32.mrb[0].mxu0
    %v2691 = vadd.f32 %v2546, %v2690
    %v2692 = vpop.f32.mrb[0].mxu0
    %v2693 = vadd.f32 %v2546, %v2692
    %v2694 = vpop.f32.mrb[0].mxu0
    %v2695 = vadd.f32 %v2550, %v2694
    %v2696 = vpop.f32.mrb[0].mxu0
    %v2697 = vadd.f32 %v2550, %v2696
    %2698 = vmatprep.mubr.bf16.mxu0 0
    %2699 = vmatmul.mubr.bf16.gmra.mrb[0].mxu0 %v2641
    %v2700 = vpop.f32.mrb[0].mxu0
    %v2701 = vadd.f32 %v2554, %v2700
    %v2702 = vpop.f32.mrb[0].mxu0
    %v2703 = vadd.f32 %v2554, %v2702
    %v2704 = vpop.f32.mrb[0].mxu0
    %v2705 = vadd.f32 %v2558, %v2704
    %v2706 = vpop.f32.mrb[0].mxu0
    %v2707 = vadd.f32 %v2558, %v2706
    %2708 = vmatprep.mubr.bf16.mxu0 0
    %2709 = vmatmul.mubr.bf16.gmra.mrb[0].mxu0 %v2642
    %v2710 = vpop.f32.mrb[0].mxu0
    %v2711 = vadd.f32 %v2562, %v2710
    %v2712 = vpop.f32.mrb[0].mxu0
    %v2713 = vadd.f32 %v2562, %v2712
    %v2714 = vpop.f32.mrb[0].mxu0
    %v2715 = vadd.f32 %v2566, %v2714
    %v2716 = vpop.f32.mrb[0].mxu0
    %v2717 = vadd.f32 %v2566, %v2716
    %2718 = vmatprep.mubr.bf16.mxu0 0
    %2719 = vmatmul.mubr.bf16.gmra.mrb[0].mxu0 %v2643
    %v2720 = vpop.f32.mrb[0].mxu0
    %v2721 = vadd.f32 %v2570, %v2720
    %v2722 = vpop.f32.mrb[0].mxu0
    %v2723 = vadd.f32 %v2570, %v2722
    %v2724 = vpop.f32.mrb[0].mxu0
    %v2725 = vadd.f32 %v2574, %v2724
    %v2726 = vpop.f32.mrb[0].mxu0
    %v2727 = vadd.f32 %v2574, %v2726
    %2728 = vmatprep.mubr.bf16.mxu0 0
    %2729 = vmatmul.mubr.bf16.gmra.mrb[0].mxu0 %v2644
    %v2730 = vpop.f32.mrb[0].mxu0
    %v2731 = vadd.f32 %v2578, %v2730
    %v2732 = vpop.f32.mrb[0].mxu0
    %v2733 = vadd.f32 %v2578, %v2732
    %v2734 = vpop.f32.mrb[0].mxu0
    %v2735 = vadd.f32 %v2582, %v2734
    %v2736 = vpop.f32.mrb[0].mxu0
    %v2737 = vadd.f32 %v2582, %v2736
    %2738 = vmatprep.mubr.bf16.mxu0 0
    %2739 = vmatmul.mubr.bf16.gmra.mrb[0].mxu0 %v2645
    %v2740 = vpop.f32.mrb[0].mxu0
    %v2741 = vadd.f32 %v2586, %v2740
    %v2742 = vpop.f32.mrb[0].mxu0
    %v2743 = vadd.f32 %v2586, %v2742
    %v2744 = vpop.f32.mrb[0].mxu0
    %v2745 = vadd.f32 %v2590, %v2744
    %v2746 = vpop.f32.mrb[0].mxu0
    %v2747 = vadd.f32 %v2590, %v2746
    %2748 = vmatprep.mubr.bf16.mxu0 0
    %2749 = vmatmul.mubr.bf16.gmra.mrb[0].mxu0 %v2646
    %v2750 = vpop.f32.mrb[0].mxu0
    %v2751 = vadd.f32 %v2594, %v2750
    %v2752 = vpop.f32.mrb[0].mxu0
    %v2753 = vadd.f32 %v2594, %v2752
    %v2754 = vpop.f32.mrb[0].mxu0
    %v2755 = vadd.f32 %v2598, %v2754
    %v2756 = vpop.f32.mrb[0].mxu0
    %v2757 = vadd.f32 %v2598, %v2756
    %2758 = vmatprep.mubr.bf16.mxu0 0
    %2759 = vmatmul.mubr.bf16.gmra.mrb[0].mxu0 %v2647
    %v2760 = vpop.f32.mrb[0].mxu0
    %v2761 = vadd.f32 %v2602, %v2760
    %v2762 = vpop.f32.mrb[0].mxu0
    %v2763 = vadd.f32 %v2602, %v2762
    %v2764 = vpop.f32.mrb[0].mxu0
    %v2765 = vadd.f32 %v2606, %v2764
    %v2766 = vpop.f32.mrb[0].mxu0
    %v2767 = vadd.f32 %v2606, %v2766
    %2768 = vdwg.mxu0
    %2769 = vmatprep.subr.bf16.mxu0 %v2483
    %2770 = vmatpush1.bf16.msra.mxu0 %v2482
    %2771 = vmatprep.subr.bf16.mxu0 %v2491
    %2772 = vmatpush1.bf16.msra.mxu0 %v2490
    %2773 = vmatprep.subr.bf16.mxu0 %v2499
    %2774 = vmatpush1.bf16.msra.mxu0 %v2498
    %2775 = vmatprep.subr.bf16.mxu0 %v2507
    %2776 = vmatpush1.bf16.msra.mxu0 %v2506
    %2777 = vmatprep.subr.bf16.mxu0 %v2515
    %2778 = vmatpush1.bf16.msra.mxu0 %v2514
    %2779 = vmatprep.subr.bf16.mxu0 %v2523
    %2780 = vmatpush1.bf16.msra.mxu0 %v2522
    %2781 = vmatprep.subr.bf16.mxu0 %v2531
    %2782 = vmatpush1.bf16.msra.mxu0 %v2530
    %2783 = vmatprep.subr.bf16.mxu0 %v2539
    %2784 = vmatpush1.bf16.msra.mxu0 %v2538
    %2785 = vmatprep.subr.bf16.mxu0 0
    %2786 = vmatpush1.bf16.msra.mxu0 0
    %2787 = vmatprep.subr.bf16.mxu0 0
    %2788 = vmatpush1.bf16.msra.mxu0 0
    %2789 = vmatprep.subr.bf16.mxu0 0
    %2790 = vmatpush1.bf16.msra.mxu0 0
    %2791 = vmatprep.subr.bf16.mxu0 0
    %2792 = vmatpush1.bf16.msra.mxu0 0
    %2793 = vmatprep.subr.bf16.mxu0 0
    %2794 = vmatpush1.bf16.msra.mxu0 0
    %2795 = vmatprep.subr.bf16.mxu0 0
    %2796 = vmatpush1.bf16.msra.mxu0 0
    %2797 = vmatprep.subr.bf16.mxu0 0
    %2798 = vmatpush1.bf16.msra.mxu0 0
    %2799 = vmatprep.subr.bf16.mxu0 0
    %2800 = vmatpush1.bf16.msra.mxu0 0
    %2801 = vmatprep.mubr.bf16.mxu0 0
    %2802 = vmatmul.mubr.bf16.gmra.mrb[0].mxu0 %v2640
    %v2803 = vpop.f32.mrb[0].mxu0
    %v2804 = vadd.f32 %v2546, %v2803
    %v2805 = vpop.f32.mrb[0].mxu0
    %v2806 = vadd.f32 %v2546, %v2805
    %v2807 = vpop.f32.mrb[0].mxu0
    %v2808 = vadd.f32 %v2550, %v2807
    %v2809 = vpop.f32.mrb[0].mxu0
    %v2810 = vadd.f32 %v2550, %v2809
    %2811 = vmatprep.mubr.bf16.mxu0 0
    %2812 = vmatmul.mubr.bf16.gmra.mrb[0].mxu0 %v2641
    %v2813 = vpop.f32.mrb[0].mxu0
    %v2814 = vadd.f32 %v2554, %v2813
    %v2815 = vpop.f32.mrb[0].mxu0
    %v2816 = vadd.f32 %v2554, %v2815
    %v2817 = vpop.f32.mrb[0].mxu0
    %v2818 = vadd.f32 %v2558, %v2817
    %v2819 = vpop.f32.mrb[0].mxu0
    %v2820 = vadd.f32 %v2558, %v2819
    %2821 = vmatprep.mubr.bf16.mxu0 0
    %2822 = vmatmul.mubr.bf16.gmra.mrb[0].mxu0 %v2642
    %v2823 = vpop.f32.mrb[0].mxu0
    %v2824 = vadd.f32 %v2562, %v2823
    %v2825 = vpop.f32.mrb[0].mxu0
    %v2826 = vadd.f32 %v2562, %v2825
    %v2827 = vpop.f32.mrb[0].mxu0
    %v2828 = vadd.f32 %v2566, %v2827
    %v2829 = vpop.f32.mrb[0].mxu0
    %v2830 = vadd.f32 %v2566, %v2829
    %2831 = vmatprep.mubr.bf16.mxu0 0
    %2832 = vmatmul.mubr.bf16.gmra.mrb[0].mxu0 %v2643
    %v2833 = vpop.f32.mrb[0].mxu0
    %v2834 = vadd.f32 %v2570, %v2833
    %v2835 = vpop.f32.mrb[0].mxu0
    %v2836 = vadd.f32 %v2570, %v2835
    %v2837 = vpop.f32.mrb[0].mxu0
    %v2838 = vadd.f32 %v2574, %v2837
    %v2839 = vpop.f32.mrb[0].mxu0
    %v2840 = vadd.f32 %v2574, %v2839
    %2841 = vmatprep.mubr.bf16.mxu0 0
    %2842 = vmatmul.mubr.bf16.gmra.mrb[0].mxu0 %v2644
    %v2843 = vpop.f32.mrb[0].mxu0
    %v2844 = vadd.f32 %v2578, %v2843
    %v2845 = vpop.f32.mrb[0].mxu0
    %v2846 = vadd.f32 %v2578, %v2845
    %v2847 = vpop.f32.mrb[0].mxu0
    %v2848 = vadd.f32 %v2582, %v2847
    %v2849 = vpop.f32.mrb[0].mxu0
    %v2850 = vadd.f32 %v2582, %v2849
    %2851 = vmatprep.mubr.bf16.mxu0 0
    %2852 = vmatmul.mubr.bf16.gmra.mrb[0].mxu0 %v2645
    %v2853 = vpop.f32.mrb[0].mxu0
    %v2854 = vadd.f32 %v2586, %v2853
    %v2855 = vpop.f32.mrb[0].mxu0
    %v2856 = vadd.f32 %v2586, %v2855
    %v2857 = vpop.f32.mrb[0].mxu0
    %v2858 = vadd.f32 %v2590, %v2857
    %v2859 = vpop.f32.mrb[0].mxu0
    %v2860 = vadd.f32 %v2590, %v2859
    %2861 = vmatprep.mubr.bf16.mxu0 0
    %2862 = vmatmul.mubr.bf16.gmra.mrb[0].mxu0 %v2646
    %v2863 = vpop.f32.mrb[0].mxu0
    %v2864 = vadd.f32 %v2594, %v2863
    %v2865 = vpop.f32.mrb[0].mxu0
    %v2866 = vadd.f32 %v2594, %v2865
    %v2867 = vpop.f32.mrb[0].mxu0
    %v2868 = vadd.f32 %v2598, %v2867
    %v2869 = vpop.f32.mrb[0].mxu0
    %v2870 = vadd.f32 %v2598, %v2869
    %2871 = vmatprep.mubr.bf16.mxu0 0
    %2872 = vmatmul.mubr.bf16.gmra.mrb[0].mxu0 %v2647
    %v2873 = vpop.f32.mrb[0].mxu0
    %v2874 = vadd.f32 %v2602, %v2873
    %v2875 = vpop.f32.mrb[0].mxu0
    %v2876 = vadd.f32 %v2602, %v2875
    %v2877 = vpop.f32.mrb[0].mxu0
    %v2878 = vadd.f32 %v2606, %v2877
    %v2879 = vpop.f32.mrb[0].mxu0
    %v2880 = vadd.f32 %v2606, %v2879
    %2881 = vdwg.mxu0
    %2882 = vmatprep.subr.bf16.mxu0 %v2485
    %2883 = vmatpush1.bf16.msra.mxu0 %v2484
    %2884 = vmatprep.subr.bf16.mxu0 %v2493
    %2885 = vmatpush1.bf16.msra.mxu0 %v2492
    %2886 = vmatprep.subr.bf16.mxu0 %v2501
    %2887 = vmatpush1.bf16.msra.mxu0 %v2500
    %2888 = vmatprep.subr.bf16.mxu0 %v2509
    %2889 = vmatpush1.bf16.msra.mxu0 %v2508
    %2890 = vmatprep.subr.bf16.mxu0 %v2517
    %2891 = vmatpush1.bf16.msra.mxu0 %v2516
    %2892 = vmatprep.subr.bf16.mxu0 %v2525
    %2893 = vmatpush1.bf16.msra.mxu0 %v2524
    %2894 = vmatprep.subr.bf16.mxu0 %v2533
    %2895 = vmatpush1.bf16.msra.mxu0 %v2532
    %2896 = vmatprep.subr.bf16.mxu0 %v2541
    %2897 = vmatpush1.bf16.msra.mxu0 %v2540
    %2898 = vmatprep.subr.bf16.mxu0 0
    %2899 = vmatpush1.bf16.msra.mxu0 0
    %2900 = vmatprep.subr.bf16.mxu0 0
    %2901 = vmatpush1.bf16.msra.mxu0 0
    %2902 = vmatprep.subr.bf16.mxu0 0
    %2903 = vmatpush1.bf16.msra.mxu0 0
    %2904 = vmatprep.subr.bf16.mxu0 0
    %2905 = vmatpush1.bf16.msra.mxu0 0
    %2906 = vmatprep.subr.bf16.mxu0 0
    %2907 = vmatpush1.bf16.msra.mxu0 0
    %2908 = vmatprep.subr.bf16.mxu0 0
    %2909 = vmatpush1.bf16.msra.mxu0 0
    %2910 = vmatprep.subr.bf16.mxu0 0
    %2911 = vmatpush1.bf16.msra.mxu0 0
    %2912 = vmatprep.subr.bf16.mxu0 0
    %2913 = vmatpush1.bf16.msra.mxu0 0
    %2914 = vmatprep.mubr.bf16.mxu0 0
    %2915 = vmatmul.mubr.bf16.gmra.mrb[0].mxu0 %v2640
    %v2916 = vpop.f32.mrb[0].mxu0
    %v2917 = vadd.f32 %v2546, %v2916
    %v2918 = vpop.f32.mrb[0].mxu0
    %v2919 = vadd.f32 %v2546, %v2918
    %v2920 = vpop.f32.mrb[0].mxu0
    %v2921 = vadd.f32 %v2550, %v2920
    %v2922 = vpop.f32.mrb[0].mxu0
    %v2923 = vadd.f32 %v2550, %v2922
    %2924 = vmatprep.mubr.bf16.mxu0 0
    %2925 = vmatmul.mubr.bf16.gmra.mrb[0].mxu0 %v2641
    %v2926 = vpop.f32.mrb[0].mxu0
    %v2927 = vadd.f32 %v2554, %v2926
    %v2928 = vpop.f32.mrb[0].mxu0
    %v2929 = vadd.f32 %v2554, %v2928
    %v2930 = vpop.f32.mrb[0].mxu0
    %v2931 = vadd.f32 %v2558, %v2930
    %v2932 = vpop.f32.mrb[0].mxu0
    %v2933 = vadd.f32 %v2558, %v2932
    %2934 = vmatprep.mubr.bf16.mxu0 0
    %2935 = vmatmul.mubr.bf16.gmra.mrb[0].mxu0 %v2642
    %v2936 = vpop.f32.mrb[0].mxu0
    %v2937 = vadd.f32 %v2562, %v2936
    %v2938 = vpop.f32.mrb[0].mxu0
    %v2939 = vadd.f32 %v2562, %v2938
    %v2940 = vpop.f32.mrb[0].mxu0
    %v2941 = vadd.f32 %v2566, %v2940
    %v2942 = vpop.f32.mrb[0].mxu0
    %v2943 = vadd.f32 %v2566, %v2942
    %2944 = vmatprep.mubr.bf16.mxu0 0
    %2945 = vmatmul.mubr.bf16.gmra.mrb[0].mxu0 %v2643
    %v2946 = vpop.f32.mrb[0].mxu0
    %v2947 = vadd.f32 %v2570, %v2946
    %v2948 = vpop.f32.mrb[0].mxu0
    %v2949 = vadd.f32 %v2570, %v2948
    %v2950 = vpop.f32.mrb[0].mxu0
    %v2951 = vadd.f32 %v2574, %v2950
    %v2952 = vpop.f32.mrb[0].mxu0
    %v2953 = vadd.f32 %v2574, %v2952
    %2954 = vmatprep.mubr.bf16.mxu0 0
    %2955 = vmatmul.mubr.bf16.gmra.mrb[0].mxu0 %v2644
    %v2956 = vpop.f32.mrb[0].mxu0
    %v2957 = vadd.f32 %v2578, %v2956
    %v2958 = vpop.f32.mrb[0].mxu0
    %v2959 = vadd.f32 %v2578, %v2958
    %v2960 = vpop.f32.mrb[0].mxu0
    %v2961 = vadd.f32 %v2582, %v2960
    %v2962 = vpop.f32.mrb[0].mxu0
    %v2963 = vadd.f32 %v2582, %v2962
    %2964 = vmatprep.mubr.bf16.mxu0 0
    %2965 = vmatmul.mubr.bf16.gmra.mrb[0].mxu0 %v2645
    %v2966 = vpop.f32.mrb[0].mxu0
    %v2967 = vadd.f32 %v2586, %v2966
    %v2968 = vpop.f32.mrb[0].mxu0
    %v2969 = vadd.f32 %v2586, %v2968
    %v2970 = vpop.f32.mrb[0].mxu0
    %v2971 = vadd.f32 %v2590, %v2970
    %v2972 = vpop.f32.mrb[0].mxu0
    %v2973 = vadd.f32 %v2590, %v2972
    %2974 = vmatprep.mubr.bf16.mxu0 0
    %2975 = vmatmul.mubr.bf16.gmra.mrb[0].mxu0 %v2646
    %v2976 = vpop.f32.mrb[0].mxu0
    %v2977 = vadd.f32 %v2594, %v2976
    %v2978 = vpop.f32.mrb[0].mxu0
    %v2979 = vadd.f32 %v2594, %v2978
    %v2980 = vpop.f32.mrb[0].mxu0
    %v2981 = vadd.f32 %v2598, %v2980
    %v2982 = vpop.f32.mrb[0].mxu0
    %v2983 = vadd.f32 %v2598, %v2982
    %2984 = vmatprep.mubr.bf16.mxu0 0
    %2985 = vmatmul.mubr.bf16.gmra.mrb[0].mxu0 %v2647
    %v2986 = vpop.f32.mrb[0].mxu0
    %v2987 = vadd.f32 %v2602, %v2986
    %v2988 = vpop.f32.mrb[0].mxu0
    %v2989 = vadd.f32 %v2602, %v2988
    %v2990 = vpop.f32.mrb[0].mxu0
    %v2991 = vadd.f32 %v2606, %v2990
    %v2992 = vpop.f32.mrb[0].mxu0
    %v2993 = vadd.f32 %v2606, %v2992
    %2994 = vdwg.mxu0
    %2995 = vmatprep.subr.bf16.mxu0 %v2487
    %2996 = vmatpush1.bf16.msra.mxu0 %v2486
    %2997 = vmatprep.subr.bf16.mxu0 %v2495
    %2998 = vmatpush1.bf16.msra.mxu0 %v2494
    %2999 = vmatprep.subr.bf16.mxu0 %v2503
    %3000 = vmatpush1.bf16.msra.mxu0 %v2502
    %3001 = vmatprep.subr.bf16.mxu0 %v2511
    %3002 = vmatpush1.bf16.msra.mxu0 %v2510
    %3003 = vmatprep.subr.bf16.mxu0 %v2519
    %3004 = vmatpush1.bf16.msra.mxu0 %v2518
    %3005 = vmatprep.subr.bf16.mxu0 %v2527
    %3006 = vmatpush1.bf16.msra.mxu0 %v2526
    %3007 = vmatprep.subr.bf16.mxu0 %v2535
    %3008 = vmatpush1.bf16.msra.mxu0 %v2534
    %3009 = vmatprep.subr.bf16.mxu0 %v2543
    %3010 = vmatpush1.bf16.msra.mxu0 %v2542
    %3011 = vmatprep.subr.bf16.mxu0 0
    %3012 = vmatpush1.bf16.msra.mxu0 0
    %3013 = vmatprep.subr.bf16.mxu0 0
    %3014 = vmatpush1.bf16.msra.mxu0 0
    %3015 = vmatprep.subr.bf16.mxu0 0
    %3016 = vmatpush1.bf16.msra.mxu0 0
    %3017 = vmatprep.subr.bf16.mxu0 0
    %3018 = vmatpush1.bf16.msra.mxu0 0
    %3019 = vmatprep.subr.bf16.mxu0 0
    %3020 = vmatpush1.bf16.msra.mxu0 0
    %3021 = vmatprep.subr.bf16.mxu0 0
    %3022 = vmatpush1.bf16.msra.mxu0 0
    %3023 = vmatprep.subr.bf16.mxu0 0
    %3024 = vmatpush1.bf16.msra.mxu0 0
    %3025 = vmatprep.subr.bf16.mxu0 0
    %3026 = vmatpush1.bf16.msra.mxu0 0
    %3027 = vmatprep.mubr.bf16.mxu0 0
    %3028 = vmatmul.mubr.bf16.gmra.mrb[0].mxu0 %v2640
    %v3029 = vpop.f32.mrb[0].mxu0
    %v3030 = vadd.f32 %v2546, %v3029
    %v3031 = vpop.f32.mrb[0].mxu0
    %v3032 = vadd.f32 %v2546, %v3031
    %v3033 = vpop.f32.mrb[0].mxu0
    %v3034 = vadd.f32 %v2550, %v3033
    %v3035 = vpop.f32.mrb[0].mxu0
    %v3036 = vadd.f32 %v2550, %v3035
    %3037 = vmatprep.mubr.bf16.mxu0 0
    %3038 = vmatmul.mubr.bf16.gmra.mrb[0].mxu0 %v2641
    %v3039 = vpop.f32.mrb[0].mxu0
    %v3040 = vadd.f32 %v2554, %v3039
    %v3041 = vpop.f32.mrb[0].mxu0
    %v3042 = vadd.f32 %v2554, %v3041
    %v3043 = vpop.f32.mrb[0].mxu0
    %v3044 = vadd.f32 %v2558, %v3043
    %v3045 = vpop.f32.mrb[0].mxu0
    %v3046 = vadd.f32 %v2558, %v3045
    %3047 = vmatprep.mubr.bf16.mxu0 0
    %3048 = vmatmul.mubr.bf16.gmra.mrb[0].mxu0 %v2642
    %v3049 = vpop.f32.mrb[0].mxu0
    %v3050 = vadd.f32 %v2562, %v3049
    %v3051 = vpop.f32.mrb[0].mxu0
    %v3052 = vadd.f32 %v2562, %v3051
    %v3053 = vpop.f32.mrb[0].mxu0
    %v3054 = vadd.f32 %v2566, %v3053
    %v3055 = vpop.f32.mrb[0].mxu0
    %v3056 = vadd.f32 %v2566, %v3055
    %3057 = vmatprep.mubr.bf16.mxu0 0
    %3058 = vmatmul.mubr.bf16.gmra.mrb[0].mxu0 %v2643
    %v3059 = vpop.f32.mrb[0].mxu0
    %v3060 = vadd.f32 %v2570, %v3059
    %v3061 = vpop.f32.mrb[0].mxu0
    %v3062 = vadd.f32 %v2570, %v3061
    %v3063 = vpop.f32.mrb[0].mxu0
    %v3064 = vadd.f32 %v2574, %v3063
    %v3065 = vpop.f32.mrb[0].mxu0
    %v3066 = vadd.f32 %v2574, %v3065
    %3067 = vmatprep.mubr.bf16.mxu0 0
    %3068 = vmatmul.mubr.bf16.gmra.mrb[0].mxu0 %v2644
    %v3069 = vpop.f32.mrb[0].mxu0
    %v3070 = vadd.f32 %v2578, %v3069
    %v3071 = vpop.f32.mrb[0].mxu0
    %v3072 = vadd.f32 %v2578, %v3071
    %v3073 = vpop.f32.mrb[0].mxu0
    %v3074 = vadd.f32 %v2582, %v3073
    %v3075 = vpop.f32.mrb[0].mxu0
    %v3076 = vadd.f32 %v2582, %v3075
    %3077 = vmatprep.mubr.bf16.mxu0 0
    %3078 = vmatmul.mubr.bf16.gmra.mrb[0].mxu0 %v2645
    %v3079 = vpop.f32.mrb[0].mxu0
    %v3080 = vadd.f32 %v2586, %v3079
    %v3081 = vpop.f32.mrb[0].mxu0
    %v3082 = vadd.f32 %v2586, %v3081
    %v3083 = vpop.f32.mrb[0].mxu0
    %v3084 = vadd.f32 %v2590, %v3083
    %v3085 = vpop.f32.mrb[0].mxu0
    %v3086 = vadd.f32 %v2590, %v3085
    %3087 = vmatprep.mubr.bf16.mxu0 0
    %3088 = vmatmul.mubr.bf16.gmra.mrb[0].mxu0 %v2646
    %v3089 = vpop.f32.mrb[0].mxu0
    %v3090 = vadd.f32 %v2594, %v3089
    %v3091 = vpop.f32.mrb[0].mxu0
    %v3092 = vadd.f32 %v2594, %v3091
    %v3093 = vpop.f32.mrb[0].mxu0
    %v3094 = vadd.f32 %v2598, %v3093
    %v3095 = vpop.f32.mrb[0].mxu0
    %v3096 = vadd.f32 %v2598, %v3095
    %3097 = vmatprep.mubr.bf16.mxu0 0
    %3098 = vmatmul.mubr.bf16.gmra.mrb[0].mxu0 %v2647
    %v3099 = vpop.f32.mrb[0].mxu0
    %v3100 = vadd.f32 %v2602, %v3099
    %v3101 = vpop.f32.mrb[0].mxu0
    %v3102 = vadd.f32 %v2602, %v3101
    %v3103 = vpop.f32.mrb[0].mxu0
    %v3104 = vadd.f32 %v2606, %v3103
    %v3105 = vpop.f32.mrb[0].mxu0
    %v3106 = vadd.f32 %v2606, %v3105
    %3107 = vdwg.mxu0
    %v3108 = vmax.f32 %v2691, 0.0
    %v3109 = vmax.f32 %v2693, 0.0
    %v3110 = vmax.f32 %v2804, 0.0
    %v3111 = vmax.f32 %v2806, 0.0
    %v3112 = vmax.f32 %v2917, 0.0
    %v3113 = vmax.f32 %v2919, 0.0
    %v3114 = vmax.f32 %v3030, 0.0
    %v3115 = vmax.f32 %v3032, 0.0
    %v3116 = vmax.f32 %v2695, 0.0
    %v3117 = vmax.f32 %v2697, 0.0
    %v3118 = vmax.f32 %v2808, 0.0
    %v3119 = vmax.f32 %v2810, 0.0
    %v3120 = vmax.f32 %v2921, 0.0
    %v3121 = vmax.f32 %v2923, 0.0
    %v3122 = vmax.f32 %v3034, 0.0
    %v3123 = vmax.f32 %v3036, 0.0
    %v3124 = vmax.f32 %v2701, 0.0
    %v3125 = vmax.f32 %v2703, 0.0
    %v3126 = vmax.f32 %v2814, 0.0
    %v3127 = vmax.f32 %v2816, 0.0
    %v3128 = vmax.f32 %v2927, 0.0
    %v3129 = vmax.f32 %v2929, 0.0
    %v3130 = vmax.f32 %v3040, 0.0
    %v3131 = vmax.f32 %v3042, 0.0
    %v3132 = vmax.f32 %v2705, 0.0
    %v3133 = vmax.f32 %v2707, 0.0
    %v3134 = vmax.f32 %v2818, 0.0
    %v3135 = vmax.f32 %v2820, 0.0
    %v3136 = vmax.f32 %v2931, 0.0
    %v3137 = vmax.f32 %v2933, 0.0
    %v3138 = vmax.f32 %v3044, 0.0
    %v3139 = vmax.f32 %v3046, 0.0
    %v3140 = vmax.f32 %v2711, 0.0
    %v3141 = vmax.f32 %v2713, 0.0
    %v3142 = vmax.f32 %v2824, 0.0
    %v3143 = vmax.f32 %v2826, 0.0
    %v3144 = vmax.f32 %v2937, 0.0
    %v3145 = vmax.f32 %v2939, 0.0
    %v3146 = vmax.f32 %v3050, 0.0
    %v3147 = vmax.f32 %v3052, 0.0
    %v3148 = vmax.f32 %v2715, 0.0
    %v3149 = vmax.f32 %v2717, 0.0
    %v3150 = vmax.f32 %v2828, 0.0
    %v3151 = vmax.f32 %v2830, 0.0
    %v3152 = vmax.f32 %v2941, 0.0
    %v3153 = vmax.f32 %v2943, 0.0
    %v3154 = vmax.f32 %v3054, 0.0
    %v3155 = vmax.f32 %v3056, 0.0
    %v3156 = vmax.f32 %v2721, 0.0
    %v3157 = vmax.f32 %v2723, 0.0
    %v3158 = vmax.f32 %v2834, 0.0
    %v3159 = vmax.f32 %v2836, 0.0
    %v3160 = vmax.f32 %v2947, 0.0
    %v3161 = vmax.f32 %v2949, 0.0
    %v3162 = vmax.f32 %v3060, 0.0
    %v3163 = vmax.f32 %v3062, 0.0
    %v3164 = vmax.f32 %v2725, 0.0
    %v3165 = vmax.f32 %v2727, 0.0
    %v3166 = vmax.f32 %v2838, 0.0
    %v3167 = vmax.f32 %v2840, 0.0
    %v3168 = vmax.f32 %v2951, 0.0
    %v3169 = vmax.f32 %v2953, 0.0
    %v3170 = vmax.f32 %v3064, 0.0
    %v3171 = vmax.f32 %v3066, 0.0
    %v3172 = vmax.f32 %v2731, 0.0
    %v3173 = vmax.f32 %v2733, 0.0
    %v3174 = vmax.f32 %v2844, 0.0
    %v3175 = vmax.f32 %v2846, 0.0
    %v3176 = vmax.f32 %v2957, 0.0
    %v3177 = vmax.f32 %v2959, 0.0
    %v3178 = vmax.f32 %v3070, 0.0
    %v3179 = vmax.f32 %v3072, 0.0
    %v3180 = vmax.f32 %v2735, 0.0
    %v3181 = vmax.f32 %v2737, 0.0
    %v3182 = vmax.f32 %v2848, 0.0
    %v3183 = vmax.f32 %v2850, 0.0
    %v3184 = vmax.f32 %v2961, 0.0
    %v3185 = vmax.f32 %v2963, 0.0
    %v3186 = vmax.f32 %v3074, 0.0
    %v3187 = vmax.f32 %v3076, 0.0
    %v3188 = vmax.f32 %v2741, 0.0
    %v3189 = vmax.f32 %v2743, 0.0
    %v3190 = vmax.f32 %v2854, 0.0
    %v3191 = vmax.f32 %v2856, 0.0
    %v3192 = vmax.f32 %v2967, 0.0
    %v3193 = vmax.f32 %v2969, 0.0
    %v3194 = vmax.f32 %v3080, 0.0
    %v3195 = vmax.f32 %v3082, 0.0
    %v3196 = vmax.f32 %v2745, 0.0
    %v3197 = vmax.f32 %v2747, 0.0
    %v3198 = vmax.f32 %v2858, 0.0
    %v3199 = vmax.f32 %v2860, 0.0
    %v3200 = vmax.f32 %v2971, 0.0
    %v3201 = vmax.f32 %v2973, 0.0
    %v3202 = vmax.f32 %v3084, 0.0
    %v3203 = vmax.f32 %v3086, 0.0
    %v3204 = vmax.f32 %v2751, 0.0
    %v3205 = vmax.f32 %v2753, 0.0
    %v3206 = vmax.f32 %v2864, 0.0
    %v3207 = vmax.f32 %v2866, 0.0
    %v3208 = vmax.f32 %v2977, 0.0
    %v3209 = vmax.f32 %v2979, 0.0
    %v3210 = vmax.f32 %v3090, 0.0
    %v3211 = vmax.f32 %v3092, 0.0
    %v3212 = vmax.f32 %v2755, 0.0
    %v3213 = vmax.f32 %v2757, 0.0
    %v3214 = vmax.f32 %v2868, 0.0
    %v3215 = vmax.f32 %v2870, 0.0
    %v3216 = vmax.f32 %v2981, 0.0
    %v3217 = vmax.f32 %v2983, 0.0
    %v3218 = vmax.f32 %v3094, 0.0
    %v3219 = vmax.f32 %v3096, 0.0
    %v3220 = vmax.f32 %v2761, 0.0
    %v3221 = vmax.f32 %v2763, 0.0
    %v3222 = vmax.f32 %v2874, 0.0
    %v3223 = vmax.f32 %v2876, 0.0
    %v3224 = vmax.f32 %v2987, 0.0
    %v3225 = vmax.f32 %v2989, 0.0
    %v3226 = vmax.f32 %v3100, 0.0
    %v3227 = vmax.f32 %v3102, 0.0
    %v3228 = vmax.f32 %v2765, 0.0
    %v3229 = vmax.f32 %v2767, 0.0
    %v3230 = vmax.f32 %v2878, 0.0
    %v3231 = vmax.f32 %v2880, 0.0
    %v3232 = vmax.f32 %v2991, 0.0
    %v3233 = vmax.f32 %v2993, 0.0
    %v3234 = vmax.f32 %v3104, 0.0
    %v3235 = vmax.f32 %v3106, 0.0
    %v3236 = vld [vmem:[%s5] sm:$0xf]
    %v3237 = vpack.c.bf16 %v3116, %v3108
    %v3238 = vpack.c.bf16 %v3117, %v3109
    %v3239 = vpack.c.bf16 %v3118, %v3110
    %v3240 = vpack.c.bf16 %v3119, %v3111
    %v3241 = vpack.c.bf16 %v3120, %v3112
    %v3242 = vpack.c.bf16 %v3121, %v3113
    %v3243 = vpack.c.bf16 %v3122, %v3114
    %v3244 = vpack.c.bf16 %v3123, %v3115
    %v3245 = vpack.c.bf16 %v3132, %v3124
    %v3246 = vpack.c.bf16 %v3133, %v3125
    %v3247 = vpack.c.bf16 %v3134, %v3126
    %v3248 = vpack.c.bf16 %v3135, %v3127
    %v3249 = vpack.c.bf16 %v3136, %v3128
    %v3250 = vpack.c.bf16 %v3137, %v3129
    %v3251 = vpack.c.bf16 %v3138, %v3130
    %v3252 = vpack.c.bf16 %v3139, %v3131
    %v3253 = vpack.c.bf16 %v3148, %v3140
    %v3254 = vpack.c.bf16 %v3149, %v3141
    %v3255 = vpack.c.bf16 %v3150, %v3142
    %v3256 = vpack.c.bf16 %v3151, %v3143
    %v3257 = vpack.c.bf16 %v3152, %v3144
    %v3258 = vpack.c.bf16 %v3153, %v3145
    %v3259 = vpack.c.bf16 %v3154, %v3146
    %v3260 = vpack.c.bf16 %v3155, %v3147
    %v3261 = vpack.c.bf16 %v3164, %v3156
    %v3262 = vpack.c.bf16 %v3165, %v3157
    %v3263 = vpack.c.bf16 %v3166, %v3158
    %v3264 = vpack.c.bf16 %v3167, %v3159
    %v3265 = vpack.c.bf16 %v3168, %v3160
    %v3266 = vpack.c.bf16 %v3169, %v3161
    %v3267 = vpack.c.bf16 %v3170, %v3162
    %v3268 = vpack.c.bf16 %v3171, %v3163
    %v3269 = vpack.c.bf16 %v3180, %v3172
    %v3270 = vpack.c.bf16 %v3181, %v3173
    %v3271 = vpack.c.bf16 %v3182, %v3174
    %v3272 = vpack.c.bf16 %v3183, %v3175
    %v3273 = vpack.c.bf16 %v3184, %v3176
    %v3274 = vpack.c.bf16 %v3185, %v3177
    %v3275 = vpack.c.bf16 %v3186, %v3178
    %v3276 = vpack.c.bf16 %v3187, %v3179
    %v3277 = vpack.c.bf16 %v3196, %v3188
    %v3278 = vpack.c.bf16 %v3197, %v3189
    %v3279 = vpack.c.bf16 %v3198, %v3190
    %v3280 = vpack.c.bf16 %v3199, %v3191
    %v3281 = vpack.c.bf16 %v3200, %v3192
    %v3282 = vpack.c.bf16 %v3201, %v3193
    %v3283 = vpack.c.bf16 %v3202, %v3194
    %v3284 = vpack.c.bf16 %v3203, %v3195
    %v3285 = vpack.c.bf16 %v3212, %v3204
    %v3286 = vpack.c.bf16 %v3213, %v3205
    %v3287 = vpack.c.bf16 %v3214, %v3206
    %v3288 = vpack.c.bf16 %v3215, %v3207
    %v3289 = vpack.c.bf16 %v3216, %v3208
    %v3290 = vpack.c.bf16 %v3217, %v3209
    %v3291 = vpack.c.bf16 %v3218, %v3210
    %v3292 = vpack.c.bf16 %v3219, %v3211
    %v3293 = vpack.c.bf16 %v3228, %v3220
    %v3294 = vpack.c.bf16 %v3229, %v3221
    %v3295 = vpack.c.bf16 %v3230, %v3222
    %v3296 = vpack.c.bf16 %v3231, %v3223
    %v3297 = vpack.c.bf16 %v3232, %v3224
    %v3298 = vpack.c.bf16 %v3233, %v3225
    %v3299 = vpack.c.bf16 %v3234, %v3226
    %v3300 = vpack.c.bf16 %v3235, %v3227
    %3302 = vset.pattern.permute.xlu0 2
    %3303 = vperm.xlu0 %3302, %v44
    %v3304 = vpop.permute.xlu0 %3303
    %3306 = vmatprep.subr.bf16.mxu0 %v3238
    %3307 = vmatpush1.bf16.msra.mxu0 %v3237
    %3308 = vmatprep.subr.bf16.mxu0 %v3246
    %3309 = vmatpush1.bf16.msra.mxu0 %v3245
    %3310 = vmatprep.subr.bf16.mxu0 %v3254
    %3311 = vmatpush1.bf16.msra.mxu0 %v3253
    %3312 = vmatprep.subr.bf16.mxu0 %v3262
    %3313 = vmatpush1.bf16.msra.mxu0 %v3261
    %3314 = vmatprep.subr.bf16.mxu0 %v3270
    %3315 = vmatpush1.bf16.msra.mxu0 %v3269
    %3316 = vmatprep.subr.bf16.mxu0 %v3278
    %3317 = vmatpush1.bf16.msra.mxu0 %v3277
    %3318 = vmatprep.subr.bf16.mxu0 %v3286
    %3319 = vmatpush1.bf16.msra.mxu0 %v3285
    %3320 = vmatprep.subr.bf16.mxu0 %v3294
    %3321 = vmatpush1.bf16.msra.mxu0 %v3293
    %3322 = vmatprep.subr.bf16.mxu0 0
    %3323 = vmatpush1.bf16.msra.mxu0 0
    %3324 = vmatprep.subr.bf16.mxu0 0
    %3325 = vmatpush1.bf16.msra.mxu0 0
    %3326 = vmatprep.subr.bf16.mxu0 0
    %3327 = vmatpush1.bf16.msra.mxu0 0
    %3328 = vmatprep.subr.bf16.mxu0 0
    %3329 = vmatpush1.bf16.msra.mxu0 0
    %3330 = vmatprep.subr.bf16.mxu0 0
    %3331 = vmatpush1.bf16.msra.mxu0 0
    %3332 = vmatprep.subr.bf16.mxu0 0
    %3333 = vmatpush1.bf16.msra.mxu0 0
    %3334 = vmatprep.subr.bf16.mxu0 0
    %3335 = vmatpush1.bf16.msra.mxu0 0
    %3336 = vmatprep.subr.bf16.mxu0 0
    %3337 = vmatpush1.bf16.msra.mxu0 0
    %3338 = vmatprep.mubr.bf16.mxu0 0
    %3339 = vmatmul.mubr.bf16.gmra.mrb[0].mxu0 %v3236
    %v3340 = vpop.f32.mrb[0].mxu0
    %v3341 = vadd.f32 %v3304, %v3340
    %v3342 = vpop.f32.mrb[0].mxu0
    %v3343 = vadd.f32 %v3304, %v3342
    %v3344 = vpop.f32.mrb[0].mxu0
    %v3345 = vpop.f32.mrb[0].mxu0
    %3346 = vdwg.mxu0
    %3347 = vmatprep.subr.bf16.mxu0 %v3240
    %3348 = vmatpush1.bf16.msra.mxu0 %v3239
    %3349 = vmatprep.subr.bf16.mxu0 %v3248
    %3350 = vmatpush1.bf16.msra.mxu0 %v3247
    %3351 = vmatprep.subr.bf16.mxu0 %v3256
    %3352 = vmatpush1.bf16.msra.mxu0 %v3255
    %3353 = vmatprep.subr.bf16.mxu0 %v3264
    %3354 = vmatpush1.bf16.msra.mxu0 %v3263
    %3355 = vmatprep.subr.bf16.mxu0 %v3272
    %3356 = vmatpush1.bf16.msra.mxu0 %v3271
    %3357 = vmatprep.subr.bf16.mxu0 %v3280
    %3358 = vmatpush1.bf16.msra.mxu0 %v3279
    %3359 = vmatprep.subr.bf16.mxu0 %v3288
    %3360 = vmatpush1.bf16.msra.mxu0 %v3287
    %3361 = vmatprep.subr.bf16.mxu0 %v3296
    %3362 = vmatpush1.bf16.msra.mxu0 %v3295
    %3363 = vmatprep.subr.bf16.mxu0 0
    %3364 = vmatpush1.bf16.msra.mxu0 0
    %3365 = vmatprep.subr.bf16.mxu0 0
    %3366 = vmatpush1.bf16.msra.mxu0 0
    %3367 = vmatprep.subr.bf16.mxu0 0
    %3368 = vmatpush1.bf16.msra.mxu0 0
    %3369 = vmatprep.subr.bf16.mxu0 0
    %3370 = vmatpush1.bf16.msra.mxu0 0
    %3371 = vmatprep.subr.bf16.mxu0 0
    %3372 = vmatpush1.bf16.msra.mxu0 0
    %3373 = vmatprep.subr.bf16.mxu0 0
    %3374 = vmatpush1.bf16.msra.mxu0 0
    %3375 = vmatprep.subr.bf16.mxu0 0
    %3376 = vmatpush1.bf16.msra.mxu0 0
    %3377 = vmatprep.subr.bf16.mxu0 0
    %3378 = vmatpush1.bf16.msra.mxu0 0
    %3379 = vmatprep.mubr.bf16.mxu0 0
    %3380 = vmatmul.mubr.bf16.gmra.mrb[0].mxu0 %v3236
    %v3381 = vpop.f32.mrb[0].mxu0
    %v3382 = vadd.f32 %v3304, %v3381
    %v3383 = vpop.f32.mrb[0].mxu0
    %v3384 = vadd.f32 %v3304, %v3383
    %v3385 = vpop.f32.mrb[0].mxu0
    %v3386 = vpop.f32.mrb[0].mxu0
    %3387 = vdwg.mxu0
    %3388 = vmatprep.subr.bf16.mxu0 %v3242
    %3389 = vmatpush1.bf16.msra.mxu0 %v3241
    %3390 = vmatprep.subr.bf16.mxu0 %v3250
    %3391 = vmatpush1.bf16.msra.mxu0 %v3249
    %3392 = vmatprep.subr.bf16.mxu0 %v3258
    %3393 = vmatpush1.bf16.msra.mxu0 %v3257
    %3394 = vmatprep.subr.bf16.mxu0 %v3266
    %3395 = vmatpush1.bf16.msra.mxu0 %v3265
    %3396 = vmatprep.subr.bf16.mxu0 %v3274
    %3397 = vmatpush1.bf16.msra.mxu0 %v3273
    %3398 = vmatprep.subr.bf16.mxu0 %v3282
    %3399 = vmatpush1.bf16.msra.mxu0 %v3281
    %3400 = vmatprep.subr.bf16.mxu0 %v3290
    %3401 = vmatpush1.bf16.msra.mxu0 %v3289
    %3402 = vmatprep.subr.bf16.mxu0 %v3298
    %3403 = vmatpush1.bf16.msra.mxu0 %v3297
    %3404 = vmatprep.subr.bf16.mxu0 0
    %3405 = vmatpush1.bf16.msra.mxu0 0
    %3406 = vmatprep.subr.bf16.mxu0 0
    %3407 = vmatpush1.bf16.msra.mxu0 0
    %3408 = vmatprep.subr.bf16.mxu0 0
    %3409 = vmatpush1.bf16.msra.mxu0 0
    %3410 = vmatprep.subr.bf16.mxu0 0
    %3411 = vmatpush1.bf16.msra.mxu0 0
    %3412 = vmatprep.subr.bf16.mxu0 0
    %3413 = vmatpush1.bf16.msra.mxu0 0
    %3414 = vmatprep.subr.bf16.mxu0 0
    %3415 = vmatpush1.bf16.msra.mxu0 0
    %3416 = vmatprep.subr.bf16.mxu0 0
    %3417 = vmatpush1.bf16.msra.mxu0 0
    %3418 = vmatprep.subr.bf16.mxu0 0
    %3419 = vmatpush1.bf16.msra.mxu0 0
    %3420 = vmatprep.mubr.bf16.mxu0 0
    %3421 = vmatmul.mubr.bf16.gmra.mrb[0].mxu0 %v3236
    %v3422 = vpop.f32.mrb[0].mxu0
    %v3423 = vadd.f32 %v3304, %v3422
    %v3424 = vpop.f32.mrb[0].mxu0
    %v3425 = vadd.f32 %v3304, %v3424
    %v3426 = vpop.f32.mrb[0].mxu0
    %v3427 = vpop.f32.mrb[0].mxu0
    %3428 = vdwg.mxu0
    %3429 = vmatprep.subr.bf16.mxu0 %v3244
    %3430 = vmatpush1.bf16.msra.mxu0 %v3243
    %3431 = vmatprep.subr.bf16.mxu0 %v3252
    %3432 = vmatpush1.bf16.msra.mxu0 %v3251
    %3433 = vmatprep.subr.bf16.mxu0 %v3260
    %3434 = vmatpush1.bf16.msra.mxu0 %v3259
    %3435 = vmatprep.subr.bf16.mxu0 %v3268
    %3436 = vmatpush1.bf16.msra.mxu0 %v3267
    %3437 = vmatprep.subr.bf16.mxu0 %v3276
    %3438 = vmatpush1.bf16.msra.mxu0 %v3275
    %3439 = vmatprep.subr.bf16.mxu0 %v3284
    %3440 = vmatpush1.bf16.msra.mxu0 %v3283
    %3441 = vmatprep.subr.bf16.mxu0 %v3292
    %3442 = vmatpush1.bf16.msra.mxu0 %v3291
    %3443 = vmatprep.subr.bf16.mxu0 %v3300
    %3444 = vmatpush1.bf16.msra.mxu0 %v3299
    %3445 = vmatprep.subr.bf16.mxu0 0
    %3446 = vmatpush1.bf16.msra.mxu0 0
    %3447 = vmatprep.subr.bf16.mxu0 0
    %3448 = vmatpush1.bf16.msra.mxu0 0
    %3449 = vmatprep.subr.bf16.mxu0 0
    %3450 = vmatpush1.bf16.msra.mxu0 0
    %3451 = vmatprep.subr.bf16.mxu0 0
    %3452 = vmatpush1.bf16.msra.mxu0 0
    %3453 = vmatprep.subr.bf16.mxu0 0
    %3454 = vmatpush1.bf16.msra.mxu0 0
    %3455 = vmatprep.subr.bf16.mxu0 0
    %3456 = vmatpush1.bf16.msra.mxu0 0
    %3457 = vmatprep.subr.bf16.mxu0 0
    %3458 = vmatpush1.bf16.msra.mxu0 0
    %3459 = vmatprep.subr.bf16.mxu0 0
    %3460 = vmatpush1.bf16.msra.mxu0 0
    %3461 = vmatprep.mubr.bf16.mxu0 0
    %3462 = vmatmul.mubr.bf16.gmra.mrb[0].mxu0 %v3236
    %v3463 = vpop.f32.mrb[0].mxu0
    %v3464 = vadd.f32 %v3304, %v3463
    %v3465 = vpop.f32.mrb[0].mxu0
    %v3466 = vadd.f32 %v3304, %v3465
    %v3467 = vpop.f32.mrb[0].mxu0
    %v3468 = vpop.f32.mrb[0].mxu0
    %3469 = vdwg.mxu0
    %3470 = vst [vmem:[#allocation2] sm:$0xff] %v3341
    %3471 = vst [vmem:[#allocation2 + $0x8] sm:$0xff] %v3343
    %3472 = vst [vmem:[#allocation2 + $0x10] sm:$0xff] %v3382
    %3473 = vst [vmem:[#allocation2 + $0x18] sm:$0xff] %v3384
    %3474 = vst [vmem:[#allocation2 + $0x20] sm:$0xff] %v3423
    %3475 = vst [vmem:[#allocation2 + $0x28] sm:$0xff] %v3425
    %3476 = vst [vmem:[#allocation2 + $0x30] sm:$0xff] %v3464
    %3477 = vst [vmem:[#allocation2 + $0x38] sm:$0xff] %v3466
    // Predicated region
    $region30: #{tpu_custom_call.1} parent=1 // pred_check
      _
    $region31: #{tpu_custom_call.1} parent=1 // pred_check_branch
      %3479 = sbr.rel (0) target = $region33
    $region32: #{tpu_custom_call.1} parent=1 // pred_region
      %s3481 = ssub.s32 1024, 1024
      %3482 = vsyncadd [#allocation3], %s3481
      %s3484 = sshll.u32 [#allocation2], 4
      %s3485 = int_to_ptr.vmem [resolvable:$true] %s3484
      %3487 = dma.vmem_to_hbm [thread:$0]  %s3485, 1024, %s7, [#allocation3]
    $region33: #{tpu_custom_call.1} parent=1 // pred_fallthru
      _
    // Predicated region
    $region34: #{tpu_custom_call.1} parent=1 // pred_check
      _
    $region35: #{tpu_custom_call.1} parent=1 // pred_check_branch
      %3489 = sbr.rel (0) target = $region37
    $region36: #{tpu_custom_call.1} parent=1 // pred_region
      %3490 = dma.done [#allocation3], 1024
    $region37: #{tpu_custom_call.1} parent=1 // pred_fallthru
      _
    %3491 = vsyncpa [#allocation3], 1

</llo_original>
